<compile_context>
chip_gen: v7x
topology: tpu7x:2x2x1
jax: 0.10.0
libtpu: 0.0.40
codegen_flags: <defaults>
</compile_context>

<pallas_src>
import jax
import jax.numpy as jnp
import numpy as np
from jax.experimental import pallas as pl
from jax.experimental.pallas import tpu as pltpu


# Architecture constants fixed by the ConvNet module (3x32x32 input).
H = W = 32
C1, O1, K = 3, 6, 5
OH1 = OW1 = H - K + 1            # 28
PH1 = PW1 = OH1 // 2             # 14
C2, O2 = O1, 16
OH2 = OW2 = PH1 - K + 1          # 10
PH2 = PW2 = OH2 // 2             # 5
FC1_IN, FC1_OUT = O2 * PH2 * PW2, 120
FC2_OUT, FC3_OUT = 84, 10


# ----------------------- fused Pallas kernel -----------------------

def _convnet_kernel(x_ref, wc1_ref, b1_ref, s1r_ref, s1c_ref,
                    w2_ref, b2_ref, s2r_ref, s2c_ref,
                    fc1w_ref, fc1b_ref, fc2w_ref, fc2b_ref,
                    fc3w_ref, fc3b_ref,
                    o_ref, p1_ref, p2_ref):
    f32 = jnp.float32

    def mm(a, b):
        return jnp.dot(a, b, preferred_element_type=f32)

    # ---- conv1 + ReLU: banded matmuls straight off the NCHW input.
    # Output layout (OH1, OW1*O1) = (28, 168), column index = ow*O1 + o.
    acc1 = jnp.zeros((OH1, OW1 * O1), f32)
    for t in range(C1 * K):                       # t = c*K + i (row offset i)
        c, i = divmod(t, K)
        acc1 = acc1 + mm(x_ref[0, c, i:i + OH1, :], wc1_ref[t])
    c1 = jnp.maximum(acc1 + b1_ref[...], 0.0)

    # ---- maxpool 2x2 (stride 2) via 0/1 selection matmuls + elementwise max.
    # Result layout (PH1, PW1*C2) = (14, 84), column index = w*C2 + c.
    r0 = mm(s1r_ref[0], c1)                       # even conv rows
    r1 = mm(s1r_ref[1], c1)                       # odd conv rows
    p1_ref[...] = jnp.maximum(
        jnp.maximum(mm(r0, s1c_ref[0]), mm(r0, s1c_ref[1])),
        jnp.maximum(mm(r1, s1c_ref[0]), mm(r1, s1c_ref[1])))

    # ---- conv2 + ReLU: (10, 160), column index = ow*O2 + o.
    acc2 = jnp.zeros((OH2, OW2 * O2), f32)
    for i in range(K):
        acc2 = acc2 + mm(p1_ref[i:i + OH2, :], w2_ref[i])
    c2 = jnp.maximum(acc2 + b2_ref[...], 0.0)

    # ---- maxpool 2x2 -> (5, 80), column index = w*O2 + o.
    q0 = mm(s2r_ref[0], c2)
    q1 = mm(s2r_ref[1], c2)
    p2_ref[...] = jnp.maximum(
        jnp.maximum(mm(q0, s2c_ref[0]), mm(q0, s2c_ref[1])),
        jnp.maximum(mm(q1, s2c_ref[0]), mm(q1, s2c_ref[1])))

    # ---- fc1 + ReLU: contract directly over the pooled 2D layout.  fc1
    # weights were pre-permuted at init, so no NHWC->NCHW transpose/flatten.
    h = fc1b_ref[...]
    for i in range(PH2):
        h = h + mm(p2_ref[i:i + 1, :], fc1w_ref[i])
    h = jnp.maximum(h, 0.0)

    # ---- fc2 + ReLU, fc3 + ReLU (ReLU after fc3 matches the module).
    h = jnp.maximum(mm(h, fc2w_ref[...]) + fc2b_ref[...], 0.0)
    h = jnp.maximum(mm(h, fc3w_ref[...]) + fc3b_ref[...], 0.0)
    o_ref[0] = h


def _const_index_map(ndim):
    zeros = (0,) * ndim

    def imap(n):
        return zeros

    return imap


def _const_spec(shape):
    return pl.BlockSpec(shape, _const_index_map(len(shape)))


def convnet_forward(x_nchw, kp):
    """Fused ConvNet forward. x_nchw: (N, 3, 32, 32) f32 -> (N, 10) f32."""
    N = x_nchw.shape[0]
    out = pl.pallas_call(
        _convnet_kernel,
        out_shape=jax.ShapeDtypeStruct((N, 1, FC3_OUT), jnp.float32),
        grid=(N,),
        in_specs=[
            pl.BlockSpec((1, C1, H, W), lambda n: (n, 0, 0, 0)),   # x
            _const_spec((C1 * K, W, OW1 * O1)),                    # conv1 banded weights
            _const_spec((1, OW1 * O1)),                            # conv1 bias (row layout)
            _const_spec((2, PH1, OH1)),                            # pool1 row selectors
            _const_spec((2, OW1 * O1, PW1 * C2)),                  # pool1 col selectors
            _const_spec((K, PW1 * C2, OW2 * O2)),                  # conv2 banded weights
            _const_spec((1, OW2 * O2)),                            # conv2 bias
            _const_spec((2, PH2, OH2)),                            # pool2 row selectors
            _const_spec((2, OW2 * O2, PW2 * O2)),                  # pool2 col selectors
            _const_spec((PH2, PW2 * O2, FC1_OUT)),                 # fc1 (pre-permuted, 3D)
            _const_spec((1, FC1_OUT)),
            _const_spec((FC1_OUT, FC2_OUT)),
            _const_spec((1, FC2_OUT)),
            _const_spec((FC2_OUT, FC3_OUT)),
            _const_spec((1, FC3_OUT)),
        ],
        out_specs=pl.BlockSpec((1, 1, FC3_OUT), lambda n: (n, 0, 0)),
        scratch_shapes=[pltpu.VMEM((PH1, PW1 * C2), jnp.float32),
                        pltpu.VMEM((PH2, PW2 * O2), jnp.float32)],
        compiler_params=pltpu.CompilerParams(
            dimension_semantics=("parallel",)),
    )(x_nchw, kp["wc1"], kp["b1"], kp["s1r"], kp["s1c"],
      kp["w2"], kp["b2"], kp["s2r"], kp["s2c"],
      kp["fc1w"], kp["fc1b"], kp["fc2w"], kp["fc2b"], kp["fc3w"], kp["fc3b"])
    return out.reshape(N, FC3_OUT)


# ----------------------- one-time parameter preparation -----------------------

def prepare_params(params):
    """Pack torch-layout params into the kernel's banded/selection layouts."""
    f32 = jnp.float32
    w1, b1 = params["conv1_w"], params["conv1_b"]   # (6,3,5,5), (6,)
    w2, b2 = params["conv2_w"], params["conv2_b"]   # (16,6,5,5), (16,)

    def band(width, out_w):
        # (width, out_w, K) indicator: w == ow + j
        wi = np.arange(width)[:, None, None]
        owi = np.arange(out_w)[None, :, None]
        ji = np.arange(K)[None, None, :]
        return jnp.asarray((wi == owi + ji).astype(np.float32))

    P1 = band(W, OW1)            # (32, 28, 5)
    P2 = band(PW1, OW2)          # (14, 10, 5)

    # conv1: per (c, i) banded weight (W, OW1*O1); conv2: per i, channel-packed.
    wc1 = jnp.einsum("wvj,ocij->ciwvo", P1, w1).reshape(C1 * K, W, OW1 * O1)
    wr2 = jnp.einsum("wvj,ocij->iwcvo", P2, w2).reshape(K, PW1 * C2, OW2 * O2)

    def row_sel(oh):
        ph = np.arange(oh // 2)[:, None]
        ohs = np.arange(oh)[None, :]
        return jnp.asarray(
            np.stack([ohs == 2 * ph, ohs == 2 * ph + 1]).astype(np.float32))

    def col_sel(ow, o):
        ows = np.arange(ow)[:, None]
        pws = np.arange(ow // 2)[None, :]
        eye = np.eye(o, dtype=np.float32)
        s0 = np.kron((ows == 2 * pws).astype(np.float32), eye)
        s1 = np.kron((ows == 2 * pws + 1).astype(np.float32), eye)
        return jnp.asarray(np.stack([s0, s1]))

    # fc1 rows permuted from torch's (c*25 + h*5 + w) order to the pooled
    # (h, w*O2 + c) layout -> no transpose needed in the forward pass.
    fc1w = params["fc1_w"].reshape(O2, PH2, PW2, FC1_OUT)
    fc1w = jnp.transpose(fc1w, (1, 2, 0, 3)).reshape(PH2, PW2 * O2, FC1_OUT)

    return {
        "wc1": wc1.astype(f32),
        "b1": jnp.tile(b1, OW1).reshape(1, OW1 * O1).astype(f32),
        "s1r": row_sel(OH1), "s1c": col_sel(OW1, O1),
        "w2": wr2.astype(f32),
        "b2": jnp.tile(b2, OW2).reshape(1, OW2 * O2).astype(f32),
        "s2r": row_sel(OH2), "s2c": col_sel(OW2, O2),
        "fc1w": fc1w.astype(f32),
        "fc1b": params["fc1_b"].reshape(1, FC1_OUT).astype(f32),
        "fc2w": params["fc2_w"].astype(f32),
        "fc2b": params["fc2_b"].reshape(1, FC2_OUT).astype(f32),
        "fc3w": params["fc3_w"].astype(f32),
        "fc3b": params["fc3_b"].reshape(1, FC3_OUT).astype(f32),
    }


# ----------------------- deterministic param init -----------------------

def init_params(key):
    keys = jax.random.split(key, 10)

    def u(k, shape, fan_in):
        bound = 1.0 / (fan_in ** 0.5)
        return jax.random.uniform(k, shape, jnp.float32, -bound, bound)

    return {
        "conv1_w": u(keys[0], (O1, C1, K, K), C1 * K * K),
        "conv1_b": u(keys[1], (O1,), C1 * K * K),
        "conv2_w": u(keys[2], (O2, C2, K, K), C2 * K * K),
        "conv2_b": u(keys[3], (O2,), C2 * K * K),
        # fc weights stored as (in, out) = torch weight transposed
        "fc1_w": u(keys[4], (FC1_IN, FC1_OUT), FC1_IN),
        "fc1_b": u(keys[5], (FC1_OUT,), FC1_IN),
        "fc2_w": u(keys[6], (FC1_OUT, FC2_OUT), FC1_OUT),
        "fc2_b": u(keys[7], (FC2_OUT,), FC1_OUT),
        "fc3_w": u(keys[8], (FC2_OUT, FC3_OUT), FC2_OUT),
        "fc3_b": u(keys[9], (FC3_OUT,), FC2_OUT),
    }


# ----------------------- pure-JAX reference (correctness guard) -----------------------

def reference_forward(x_nchw, params):
    def conv(x, w, b):
        y = jax.lax.conv_general_dilated(
            x, w, window_strides=(1, 1), padding="VALID",
            dimension_numbers=("NCHW", "OIHW", "NCHW"))
        return jax.nn.relu(y + b[None, :, None, None])

    def pool(x):
        return jax.lax.reduce_window(x, -jnp.inf, jax.lax.max,
                                     (1, 1, 2, 2), (1, 1, 2, 2), "VALID")

    x = pool(conv(x_nchw, params["conv1_w"], params["conv1_b"]))
    x = pool(conv(x, params["conv2_w"], params["conv2_b"]))
    x = x.reshape(x.shape[0], -1)
    x = jax.nn.relu(x @ params["fc1_w"] + params["fc1_b"])
    x = jax.nn.relu(x @ params["fc2_w"] + params["fc2_b"])
    x = jax.nn.relu(x @ params["fc3_w"] + params["fc3_b"])
    return x


if __name__ == "__main__":
    key = jax.random.PRNGKey(0)
    pkey, xkey = jax.random.split(key)
    params = init_params(pkey)
    kparams = prepare_params(params)
    # Spatial size 32 is required by the module: 32 -conv5-> 28 -pool-> 14
    # -conv5-> 10 -pool-> 5, then 16*5*5 = 400 features for fc1.
    x = jax.random.normal(xkey, (2, C1, H, W), dtype=jnp.float32)

    out = jax.jit(convnet_forward)(x, kparams)
    jax.block_until_ready(out)
    assert out.shape == (2, FC3_OUT) and out.dtype == jnp.float32

    ref = reference_forward(x, params)
    assert bool(jnp.allclose(out, ref, rtol=2e-3, atol=2e-3)), "mismatch vs reference"
    print("KERNEL_OK")
</pallas_src>

<mosaic_0001>
module attributes {stable_mosaic.version = 11 : i64} {
  func.func @_convnet_kernel(%arg0: i32, %arg1: memref<1x3x32x32xf32, #tpu.memory_space<vmem>>, %arg2: memref<15x32x168xf32, #tpu.memory_space<vmem>>, %arg3: memref<1x168xf32, #tpu.memory_space<vmem>>, %arg4: memref<2x14x28xf32, #tpu.memory_space<vmem>>, %arg5: memref<2x168x84xf32, #tpu.memory_space<vmem>>, %arg6: memref<5x84x160xf32, #tpu.memory_space<vmem>>, %arg7: memref<1x160xf32, #tpu.memory_space<vmem>>, %arg8: memref<2x5x10xf32, #tpu.memory_space<vmem>>, %arg9: memref<2x160x80xf32, #tpu.memory_space<vmem>>, %arg10: memref<5x80x120xf32, #tpu.memory_space<vmem>>, %arg11: memref<1x120xf32, #tpu.memory_space<vmem>>, %arg12: memref<120x84xf32, #tpu.memory_space<vmem>>, %arg13: memref<1x84xf32, #tpu.memory_space<vmem>>, %arg14: memref<84x10xf32, #tpu.memory_space<vmem>>, %arg15: memref<1x10xf32, #tpu.memory_space<vmem>>, %arg16: memref<1x1x10xf32, #tpu.memory_space<vmem>>, %arg17: memref<14x84xf32, #tpu.memory_space<vmem>>, %arg18: memref<5x80xf32, #tpu.memory_space<vmem>>) attributes {dimension_semantics = [#tpu.dimension_semantics<parallel>], iteration_bounds = array<i64: 2>, scalar_prefetch = 0 : i64, scratch_operands = 2 : i64, tpu.core_type = #tpu.core_type<tc>, window_params = [{transform_indices = @transform_0, window_bounds = array<i64: 1, 3, 32, 32>}, {pipeline_mode = #tpu.pipeline_mode<synchronous>, transform_indices = @transform_1, window_bounds = array<i64: 15, 32, 168>}, {pipeline_mode = #tpu.pipeline_mode<synchronous>, transform_indices = @transform_2, window_bounds = array<i64: 1, 168>}, {pipeline_mode = #tpu.pipeline_mode<synchronous>, transform_indices = @transform_3, window_bounds = array<i64: 2, 14, 28>}, {pipeline_mode = #tpu.pipeline_mode<synchronous>, transform_indices = @transform_4, window_bounds = array<i64: 2, 168, 84>}, {pipeline_mode = #tpu.pipeline_mode<synchronous>, transform_indices = @transform_5, window_bounds = array<i64: 5, 84, 160>}, {pipeline_mode = #tpu.pipeline_mode<synchronous>, transform_indices = @transform_6, window_bounds = array<i64: 1, 160>}, {pipeline_mode = #tpu.pipeline_mode<synchronous>, transform_indices = @transform_7, window_bounds = array<i64: 2, 5, 10>}, {pipeline_mode = #tpu.pipeline_mode<synchronous>, transform_indices = @transform_8, window_bounds = array<i64: 2, 160, 80>}, {pipeline_mode = #tpu.pipeline_mode<synchronous>, transform_indices = @transform_9, window_bounds = array<i64: 5, 80, 120>}, {pipeline_mode = #tpu.pipeline_mode<synchronous>, transform_indices = @transform_10, window_bounds = array<i64: 1, 120>}, {pipeline_mode = #tpu.pipeline_mode<synchronous>, transform_indices = @transform_11, window_bounds = array<i64: 120, 84>}, {pipeline_mode = #tpu.pipeline_mode<synchronous>, transform_indices = @transform_12, window_bounds = array<i64: 1, 84>}, {pipeline_mode = #tpu.pipeline_mode<synchronous>, transform_indices = @transform_13, window_bounds = array<i64: 84, 10>}, {pipeline_mode = #tpu.pipeline_mode<synchronous>, transform_indices = @transform_14, window_bounds = array<i64: 1, 10>}, {transform_indices = @transform_15, window_bounds = array<i64: 1, 1, 10>}]} {
    %cst = arith.constant 0.000000e+00 : f32
    %0 = vector.broadcast %cst : f32 to vector<28x168xf32>
    %c0 = arith.constant 0 : index
    %c0_0 = arith.constant 0 : index
    %c0_1 = arith.constant 0 : index
    %c0_2 = arith.constant 0 : index
    %1 = vector.load %arg1[%c0, %c0_0, %c0_1, %c0_2] : memref<1x3x32x32xf32, #tpu.memory_space<vmem>>, vector<1x1x28x32xf32>
    %2 = vector.shape_cast %1 : vector<1x1x28x32xf32> to vector<28x32xf32>
    %c0_3 = arith.constant 0 : index
    %c0_4 = arith.constant 0 : index
    %c0_5 = arith.constant 0 : index
    %3 = vector.load %arg2[%c0_3, %c0_4, %c0_5] : memref<15x32x168xf32, #tpu.memory_space<vmem>>, vector<1x32x168xf32>
    %4 = vector.shape_cast %3 : vector<1x32x168xf32> to vector<32x168xf32>
    %cst_6 = arith.constant dense<0.000000e+00> : vector<28x168xf32>
    %5 = tpu.matmul %2, %4, %cst_6 {dimension_numbers = #tpu.dot_dimension_numbers<[1], [0], [0], [1], [0, 0, 1, 1], [], []>} : vector<28x32xf32>, vector<32x168xf32>, vector<28x168xf32> -> vector<28x168xf32>
    %6 = arith.addf %0, %5 : vector<28x168xf32>
    %c0_7 = arith.constant 0 : index
    %c0_8 = arith.constant 0 : index
    %c1 = arith.constant 1 : index
    %c0_9 = arith.constant 0 : index
    %7 = vector.load %arg1[%c0_7, %c0_8, %c1, %c0_9] : memref<1x3x32x32xf32, #tpu.memory_space<vmem>>, vector<1x1x28x32xf32>
    %8 = vector.shape_cast %7 : vector<1x1x28x32xf32> to vector<28x32xf32>
    %c1_10 = arith.constant 1 : index
    %c0_11 = arith.constant 0 : index
    %c0_12 = arith.constant 0 : index
    %9 = vector.load %arg2[%c1_10, %c0_11, %c0_12] : memref<15x32x168xf32, #tpu.memory_space<vmem>>, vector<1x32x168xf32>
    %10 = vector.shape_cast %9 : vector<1x32x168xf32> to vector<32x168xf32>
    %cst_13 = arith.constant dense<0.000000e+00> : vector<28x168xf32>
    %11 = tpu.matmul %8, %10, %cst_13 {dimension_numbers = #tpu.dot_dimension_numbers<[1], [0], [0], [1], [0, 0, 1, 1], [], []>} : vector<28x32xf32>, vector<32x168xf32>, vector<28x168xf32> -> vector<28x168xf32>
    %12 = arith.addf %6, %11 : vector<28x168xf32>
    %c0_14 = arith.constant 0 : index
    %c0_15 = arith.constant 0 : index
    %c2 = arith.constant 2 : index
    %c0_16 = arith.constant 0 : index
    %13 = vector.load %arg1[%c0_14, %c0_15, %c2, %c0_16] : memref<1x3x32x32xf32, #tpu.memory_space<vmem>>, vector<1x1x28x32xf32>
    %14 = vector.shape_cast %13 : vector<1x1x28x32xf32> to vector<28x32xf32>
    %c2_17 = arith.constant 2 : index
    %c0_18 = arith.constant 0 : index
    %c0_19 = arith.constant 0 : index
    %15 = vector.load %arg2[%c2_17, %c0_18, %c0_19] : memref<15x32x168xf32, #tpu.memory_space<vmem>>, vector<1x32x168xf32>
    %16 = vector.shape_cast %15 : vector<1x32x168xf32> to vector<32x168xf32>
    %cst_20 = arith.constant dense<0.000000e+00> : vector<28x168xf32>
    %17 = tpu.matmul %14, %16, %cst_20 {dimension_numbers = #tpu.dot_dimension_numbers<[1], [0], [0], [1], [0, 0, 1, 1], [], []>} : vector<28x32xf32>, vector<32x168xf32>, vector<28x168xf32> -> vector<28x168xf32>
    %18 = arith.addf %12, %17 : vector<28x168xf32>
    %c0_21 = arith.constant 0 : index
    %c0_22 = arith.constant 0 : index
    %c3 = arith.constant 3 : index
    %c0_23 = arith.constant 0 : index
    %19 = vector.load %arg1[%c0_21, %c0_22, %c3, %c0_23] : memref<1x3x32x32xf32, #tpu.memory_space<vmem>>, vector<1x1x28x32xf32>
    %20 = vector.shape_cast %19 : vector<1x1x28x32xf32> to vector<28x32xf32>
    %c3_24 = arith.constant 3 : index
    %c0_25 = arith.constant 0 : index
    %c0_26 = arith.constant 0 : index
    %21 = vector.load %arg2[%c3_24, %c0_25, %c0_26] : memref<15x32x168xf32, #tpu.memory_space<vmem>>, vector<1x32x168xf32>
    %22 = vector.shape_cast %21 : vector<1x32x168xf32> to vector<32x168xf32>
    %cst_27 = arith.constant dense<0.000000e+00> : vector<28x168xf32>
    %23 = tpu.matmul %20, %22, %cst_27 {dimension_numbers = #tpu.dot_dimension_numbers<[1], [0], [0], [1], [0, 0, 1, 1], [], []>} : vector<28x32xf32>, vector<32x168xf32>, vector<28x168xf32> -> vector<28x168xf32>
    %24 = arith.addf %18, %23 : vector<28x168xf32>
    %c0_28 = arith.constant 0 : index
    %c0_29 = arith.constant 0 : index
    %c4 = arith.constant 4 : index
    %c0_30 = arith.constant 0 : index
    %25 = vector.load %arg1[%c0_28, %c0_29, %c4, %c0_30] : memref<1x3x32x32xf32, #tpu.memory_space<vmem>>, vector<1x1x28x32xf32>
    %26 = vector.shape_cast %25 : vector<1x1x28x32xf32> to vector<28x32xf32>
    %c4_31 = arith.constant 4 : index
    %c0_32 = arith.constant 0 : index
    %c0_33 = arith.constant 0 : index
    %27 = vector.load %arg2[%c4_31, %c0_32, %c0_33] : memref<15x32x168xf32, #tpu.memory_space<vmem>>, vector<1x32x168xf32>
    %28 = vector.shape_cast %27 : vector<1x32x168xf32> to vector<32x168xf32>
    %cst_34 = arith.constant dense<0.000000e+00> : vector<28x168xf32>
    %29 = tpu.matmul %26, %28, %cst_34 {dimension_numbers = #tpu.dot_dimension_numbers<[1], [0], [0], [1], [0, 0, 1, 1], [], []>} : vector<28x32xf32>, vector<32x168xf32>, vector<28x168xf32> -> vector<28x168xf32>
    %30 = arith.addf %24, %29 : vector<28x168xf32>
    %c0_35 = arith.constant 0 : index
    %c1_36 = arith.constant 1 : index
    %c0_37 = arith.constant 0 : index
    %c0_38 = arith.constant 0 : index
    %31 = vector.load %arg1[%c0_35, %c1_36, %c0_37, %c0_38] : memref<1x3x32x32xf32, #tpu.memory_space<vmem>>, vector<1x1x28x32xf32>
    %32 = vector.shape_cast %31 : vector<1x1x28x32xf32> to vector<28x32xf32>
    %c5 = arith.constant 5 : index
    %c0_39 = arith.constant 0 : index
    %c0_40 = arith.constant 0 : index
    %33 = vector.load %arg2[%c5, %c0_39, %c0_40] : memref<15x32x168xf32, #tpu.memory_space<vmem>>, vector<1x32x168xf32>
    %34 = vector.shape_cast %33 : vector<1x32x168xf32> to vector<32x168xf32>
    %cst_41 = arith.constant dense<0.000000e+00> : vector<28x168xf32>
    %35 = tpu.matmul %32, %34, %cst_41 {dimension_numbers = #tpu.dot_dimension_numbers<[1], [0], [0], [1], [0, 0, 1, 1], [], []>} : vector<28x32xf32>, vector<32x168xf32>, vector<28x168xf32> -> vector<28x168xf32>
    %36 = arith.addf %30, %35 : vector<28x168xf32>
    %c0_42 = arith.constant 0 : index
    %c1_43 = arith.constant 1 : index
    %c1_44 = arith.constant 1 : index
    %c0_45 = arith.constant 0 : index
    %37 = vector.load %arg1[%c0_42, %c1_43, %c1_44, %c0_45] : memref<1x3x32x32xf32, #tpu.memory_space<vmem>>, vector<1x1x28x32xf32>
    %38 = vector.shape_cast %37 : vector<1x1x28x32xf32> to vector<28x32xf32>
    %c6 = arith.constant 6 : index
    %c0_46 = arith.constant 0 : index
    %c0_47 = arith.constant 0 : index
    %39 = vector.load %arg2[%c6, %c0_46, %c0_47] : memref<15x32x168xf32, #tpu.memory_space<vmem>>, vector<1x32x168xf32>
    %40 = vector.shape_cast %39 : vector<1x32x168xf32> to vector<32x168xf32>
    %cst_48 = arith.constant dense<0.000000e+00> : vector<28x168xf32>
    %41 = tpu.matmul %38, %40, %cst_48 {dimension_numbers = #tpu.dot_dimension_numbers<[1], [0], [0], [1], [0, 0, 1, 1], [], []>} : vector<28x32xf32>, vector<32x168xf32>, vector<28x168xf32> -> vector<28x168xf32>
    %42 = arith.addf %36, %41 : vector<28x168xf32>
    %c0_49 = arith.constant 0 : index
    %c1_50 = arith.constant 1 : index
    %c2_51 = arith.constant 2 : index
    %c0_52 = arith.constant 0 : index
    %43 = vector.load %arg1[%c0_49, %c1_50, %c2_51, %c0_52] : memref<1x3x32x32xf32, #tpu.memory_space<vmem>>, vector<1x1x28x32xf32>
    %44 = vector.shape_cast %43 : vector<1x1x28x32xf32> to vector<28x32xf32>
    %c7 = arith.constant 7 : index
    %c0_53 = arith.constant 0 : index
    %c0_54 = arith.constant 0 : index
    %45 = vector.load %arg2[%c7, %c0_53, %c0_54] : memref<15x32x168xf32, #tpu.memory_space<vmem>>, vector<1x32x168xf32>
    %46 = vector.shape_cast %45 : vector<1x32x168xf32> to vector<32x168xf32>
    %cst_55 = arith.constant dense<0.000000e+00> : vector<28x168xf32>
    %47 = tpu.matmul %44, %46, %cst_55 {dimension_numbers = #tpu.dot_dimension_numbers<[1], [0], [0], [1], [0, 0, 1, 1], [], []>} : vector<28x32xf32>, vector<32x168xf32>, vector<28x168xf32> -> vector<28x168xf32>
    %48 = arith.addf %42, %47 : vector<28x168xf32>
    %c0_56 = arith.constant 0 : index
    %c1_57 = arith.constant 1 : index
    %c3_58 = arith.constant 3 : index
    %c0_59 = arith.constant 0 : index
    %49 = vector.load %arg1[%c0_56, %c1_57, %c3_58, %c0_59] : memref<1x3x32x32xf32, #tpu.memory_space<vmem>>, vector<1x1x28x32xf32>
    %50 = vector.shape_cast %49 : vector<1x1x28x32xf32> to vector<28x32xf32>
    %c8 = arith.constant 8 : index
    %c0_60 = arith.constant 0 : index
    %c0_61 = arith.constant 0 : index
    %51 = vector.load %arg2[%c8, %c0_60, %c0_61] : memref<15x32x168xf32, #tpu.memory_space<vmem>>, vector<1x32x168xf32>
    %52 = vector.shape_cast %51 : vector<1x32x168xf32> to vector<32x168xf32>
    %cst_62 = arith.constant dense<0.000000e+00> : vector<28x168xf32>
    %53 = tpu.matmul %50, %52, %cst_62 {dimension_numbers = #tpu.dot_dimension_numbers<[1], [0], [0], [1], [0, 0, 1, 1], [], []>} : vector<28x32xf32>, vector<32x168xf32>, vector<28x168xf32> -> vector<28x168xf32>
    %54 = arith.addf %48, %53 : vector<28x168xf32>
    %c0_63 = arith.constant 0 : index
    %c1_64 = arith.constant 1 : index
    %c4_65 = arith.constant 4 : index
    %c0_66 = arith.constant 0 : index
    %55 = vector.load %arg1[%c0_63, %c1_64, %c4_65, %c0_66] : memref<1x3x32x32xf32, #tpu.memory_space<vmem>>, vector<1x1x28x32xf32>
    %56 = vector.shape_cast %55 : vector<1x1x28x32xf32> to vector<28x32xf32>
    %c9 = arith.constant 9 : index
    %c0_67 = arith.constant 0 : index
    %c0_68 = arith.constant 0 : index
    %57 = vector.load %arg2[%c9, %c0_67, %c0_68] : memref<15x32x168xf32, #tpu.memory_space<vmem>>, vector<1x32x168xf32>
    %58 = vector.shape_cast %57 : vector<1x32x168xf32> to vector<32x168xf32>
    %cst_69 = arith.constant dense<0.000000e+00> : vector<28x168xf32>
    %59 = tpu.matmul %56, %58, %cst_69 {dimension_numbers = #tpu.dot_dimension_numbers<[1], [0], [0], [1], [0, 0, 1, 1], [], []>} : vector<28x32xf32>, vector<32x168xf32>, vector<28x168xf32> -> vector<28x168xf32>
    %60 = arith.addf %54, %59 : vector<28x168xf32>
    %c0_70 = arith.constant 0 : index
    %c2_71 = arith.constant 2 : index
    %c0_72 = arith.constant 0 : index
    %c0_73 = arith.constant 0 : index
    %61 = vector.load %arg1[%c0_70, %c2_71, %c0_72, %c0_73] : memref<1x3x32x32xf32, #tpu.memory_space<vmem>>, vector<1x1x28x32xf32>
    %62 = vector.shape_cast %61 : vector<1x1x28x32xf32> to vector<28x32xf32>
    %c10 = arith.constant 10 : index
    %c0_74 = arith.constant 0 : index
    %c0_75 = arith.constant 0 : index
    %63 = vector.load %arg2[%c10, %c0_74, %c0_75] : memref<15x32x168xf32, #tpu.memory_space<vmem>>, vector<1x32x168xf32>
    %64 = vector.shape_cast %63 : vector<1x32x168xf32> to vector<32x168xf32>
    %cst_76 = arith.constant dense<0.000000e+00> : vector<28x168xf32>
    %65 = tpu.matmul %62, %64, %cst_76 {dimension_numbers = #tpu.dot_dimension_numbers<[1], [0], [0], [1], [0, 0, 1, 1], [], []>} : vector<28x32xf32>, vector<32x168xf32>, vector<28x168xf32> -> vector<28x168xf32>
    %66 = arith.addf %60, %65 : vector<28x168xf32>
    %c0_77 = arith.constant 0 : index
    %c2_78 = arith.constant 2 : index
    %c1_79 = arith.constant 1 : index
    %c0_80 = arith.constant 0 : index
    %67 = vector.load %arg1[%c0_77, %c2_78, %c1_79, %c0_80] : memref<1x3x32x32xf32, #tpu.memory_space<vmem>>, vector<1x1x28x32xf32>
    %68 = vector.shape_cast %67 : vector<1x1x28x32xf32> to vector<28x32xf32>
    %c11 = arith.constant 11 : index
    %c0_81 = arith.constant 0 : index
    %c0_82 = arith.constant 0 : index
    %69 = vector.load %arg2[%c11, %c0_81, %c0_82] : memref<15x32x168xf32, #tpu.memory_space<vmem>>, vector<1x32x168xf32>
    %70 = vector.shape_cast %69 : vector<1x32x168xf32> to vector<32x168xf32>
    %cst_83 = arith.constant dense<0.000000e+00> : vector<28x168xf32>
    %71 = tpu.matmul %68, %70, %cst_83 {dimension_numbers = #tpu.dot_dimension_numbers<[1], [0], [0], [1], [0, 0, 1, 1], [], []>} : vector<28x32xf32>, vector<32x168xf32>, vector<28x168xf32> -> vector<28x168xf32>
    %72 = arith.addf %66, %71 : vector<28x168xf32>
    %c0_84 = arith.constant 0 : index
    %c2_85 = arith.constant 2 : index
    %c2_86 = arith.constant 2 : index
    %c0_87 = arith.constant 0 : index
    %73 = vector.load %arg1[%c0_84, %c2_85, %c2_86, %c0_87] : memref<1x3x32x32xf32, #tpu.memory_space<vmem>>, vector<1x1x28x32xf32>
    %74 = vector.shape_cast %73 : vector<1x1x28x32xf32> to vector<28x32xf32>
    %c12 = arith.constant 12 : index
    %c0_88 = arith.constant 0 : index
    %c0_89 = arith.constant 0 : index
    %75 = vector.load %arg2[%c12, %c0_88, %c0_89] : memref<15x32x168xf32, #tpu.memory_space<vmem>>, vector<1x32x168xf32>
    %76 = vector.shape_cast %75 : vector<1x32x168xf32> to vector<32x168xf32>
    %cst_90 = arith.constant dense<0.000000e+00> : vector<28x168xf32>
    %77 = tpu.matmul %74, %76, %cst_90 {dimension_numbers = #tpu.dot_dimension_numbers<[1], [0], [0], [1], [0, 0, 1, 1], [], []>} : vector<28x32xf32>, vector<32x168xf32>, vector<28x168xf32> -> vector<28x168xf32>
    %78 = arith.addf %72, %77 : vector<28x168xf32>
    %c0_91 = arith.constant 0 : index
    %c2_92 = arith.constant 2 : index
    %c3_93 = arith.constant 3 : index
    %c0_94 = arith.constant 0 : index
    %79 = vector.load %arg1[%c0_91, %c2_92, %c3_93, %c0_94] : memref<1x3x32x32xf32, #tpu.memory_space<vmem>>, vector<1x1x28x32xf32>
    %80 = vector.shape_cast %79 : vector<1x1x28x32xf32> to vector<28x32xf32>
    %c13 = arith.constant 13 : index
    %c0_95 = arith.constant 0 : index
    %c0_96 = arith.constant 0 : index
    %81 = vector.load %arg2[%c13, %c0_95, %c0_96] : memref<15x32x168xf32, #tpu.memory_space<vmem>>, vector<1x32x168xf32>
    %82 = vector.shape_cast %81 : vector<1x32x168xf32> to vector<32x168xf32>
    %cst_97 = arith.constant dense<0.000000e+00> : vector<28x168xf32>
    %83 = tpu.matmul %80, %82, %cst_97 {dimension_numbers = #tpu.dot_dimension_numbers<[1], [0], [0], [1], [0, 0, 1, 1], [], []>} : vector<28x32xf32>, vector<32x168xf32>, vector<28x168xf32> -> vector<28x168xf32>
    %84 = arith.addf %78, %83 : vector<28x168xf32>
    %c0_98 = arith.constant 0 : index
    %c2_99 = arith.constant 2 : index
    %c4_100 = arith.constant 4 : index
    %c0_101 = arith.constant 0 : index
    %85 = vector.load %arg1[%c0_98, %c2_99, %c4_100, %c0_101] : memref<1x3x32x32xf32, #tpu.memory_space<vmem>>, vector<1x1x28x32xf32>
    %86 = vector.shape_cast %85 : vector<1x1x28x32xf32> to vector<28x32xf32>
    %c14 = arith.constant 14 : index
    %c0_102 = arith.constant 0 : index
    %c0_103 = arith.constant 0 : index
    %87 = vector.load %arg2[%c14, %c0_102, %c0_103] : memref<15x32x168xf32, #tpu.memory_space<vmem>>, vector<1x32x168xf32>
    %88 = vector.shape_cast %87 : vector<1x32x168xf32> to vector<32x168xf32>
    %cst_104 = arith.constant dense<0.000000e+00> : vector<28x168xf32>
    %89 = tpu.matmul %86, %88, %cst_104 {dimension_numbers = #tpu.dot_dimension_numbers<[1], [0], [0], [1], [0, 0, 1, 1], [], []>} : vector<28x32xf32>, vector<32x168xf32>, vector<28x168xf32> -> vector<28x168xf32>
    %90 = arith.addf %84, %89 : vector<28x168xf32>
    %c0_105 = arith.constant 0 : index
    %c0_106 = arith.constant 0 : index
    %91 = vector.load %arg3[%c0_105, %c0_106] : memref<1x168xf32, #tpu.memory_space<vmem>>, vector<1x168xf32>
    %92 = vector.broadcast %91 : vector<1x168xf32> to vector<28x168xf32>
    %93 = arith.addf %90, %92 : vector<28x168xf32>
    %cst_107 = arith.constant 0.000000e+00 : f32
    %94 = vector.broadcast %cst_107 : f32 to vector<28x168xf32>
    %95 = arith.maximumf %93, %94 : vector<28x168xf32>
    %c0_108 = arith.constant 0 : index
    %c0_109 = arith.constant 0 : index
    %c0_110 = arith.constant 0 : index
    %96 = vector.load %arg4[%c0_108, %c0_109, %c0_110] : memref<2x14x28xf32, #tpu.memory_space<vmem>>, vector<1x14x28xf32>
    %97 = vector.shape_cast %96 : vector<1x14x28xf32> to vector<14x28xf32>
    %cst_111 = arith.constant dense<0.000000e+00> : vector<14x168xf32>
    %98 = tpu.matmul %97, %95, %cst_111 {dimension_numbers = #tpu.dot_dimension_numbers<[1], [0], [0], [1], [0, 0, 1, 1], [], []>} : vector<14x28xf32>, vector<28x168xf32>, vector<14x168xf32> -> vector<14x168xf32>
    %c1_112 = arith.constant 1 : index
    %c0_113 = arith.constant 0 : index
    %c0_114 = arith.constant 0 : index
    %99 = vector.load %arg4[%c1_112, %c0_113, %c0_114] : memref<2x14x28xf32, #tpu.memory_space<vmem>>, vector<1x14x28xf32>
    %100 = vector.shape_cast %99 : vector<1x14x28xf32> to vector<14x28xf32>
    %cst_115 = arith.constant dense<0.000000e+00> : vector<14x168xf32>
    %101 = tpu.matmul %100, %95, %cst_115 {dimension_numbers = #tpu.dot_dimension_numbers<[1], [0], [0], [1], [0, 0, 1, 1], [], []>} : vector<14x28xf32>, vector<28x168xf32>, vector<14x168xf32> -> vector<14x168xf32>
    %c0_116 = arith.constant 0 : index
    %c0_117 = arith.constant 0 : index
    %c0_118 = arith.constant 0 : index
    %102 = vector.load %arg5[%c0_116, %c0_117, %c0_118] : memref<2x168x84xf32, #tpu.memory_space<vmem>>, vector<1x168x84xf32>
    %103 = vector.shape_cast %102 : vector<1x168x84xf32> to vector<168x84xf32>
    %cst_119 = arith.constant dense<0.000000e+00> : vector<14x84xf32>
    %104 = tpu.matmul %98, %103, %cst_119 {dimension_numbers = #tpu.dot_dimension_numbers<[1], [0], [0], [1], [0, 0, 1, 1], [], []>} : vector<14x168xf32>, vector<168x84xf32>, vector<14x84xf32> -> vector<14x84xf32>
    %c1_120 = arith.constant 1 : index
    %c0_121 = arith.constant 0 : index
    %c0_122 = arith.constant 0 : index
    %105 = vector.load %arg5[%c1_120, %c0_121, %c0_122] : memref<2x168x84xf32, #tpu.memory_space<vmem>>, vector<1x168x84xf32>
    %106 = vector.shape_cast %105 : vector<1x168x84xf32> to vector<168x84xf32>
    %cst_123 = arith.constant dense<0.000000e+00> : vector<14x84xf32>
    %107 = tpu.matmul %98, %106, %cst_123 {dimension_numbers = #tpu.dot_dimension_numbers<[1], [0], [0], [1], [0, 0, 1, 1], [], []>} : vector<14x168xf32>, vector<168x84xf32>, vector<14x84xf32> -> vector<14x84xf32>
    %108 = arith.maximumf %104, %107 : vector<14x84xf32>
    %c0_124 = arith.constant 0 : index
    %c0_125 = arith.constant 0 : index
    %c0_126 = arith.constant 0 : index
    %109 = vector.load %arg5[%c0_124, %c0_125, %c0_126] : memref<2x168x84xf32, #tpu.memory_space<vmem>>, vector<1x168x84xf32>
    %110 = vector.shape_cast %109 : vector<1x168x84xf32> to vector<168x84xf32>
    %cst_127 = arith.constant dense<0.000000e+00> : vector<14x84xf32>
    %111 = tpu.matmul %101, %110, %cst_127 {dimension_numbers = #tpu.dot_dimension_numbers<[1], [0], [0], [1], [0, 0, 1, 1], [], []>} : vector<14x168xf32>, vector<168x84xf32>, vector<14x84xf32> -> vector<14x84xf32>
    %c1_128 = arith.constant 1 : index
    %c0_129 = arith.constant 0 : index
    %c0_130 = arith.constant 0 : index
    %112 = vector.load %arg5[%c1_128, %c0_129, %c0_130] : memref<2x168x84xf32, #tpu.memory_space<vmem>>, vector<1x168x84xf32>
    %113 = vector.shape_cast %112 : vector<1x168x84xf32> to vector<168x84xf32>
    %cst_131 = arith.constant dense<0.000000e+00> : vector<14x84xf32>
    %114 = tpu.matmul %101, %113, %cst_131 {dimension_numbers = #tpu.dot_dimension_numbers<[1], [0], [0], [1], [0, 0, 1, 1], [], []>} : vector<14x168xf32>, vector<168x84xf32>, vector<14x84xf32> -> vector<14x84xf32>
    %115 = arith.maximumf %111, %114 : vector<14x84xf32>
    %116 = arith.maximumf %108, %115 : vector<14x84xf32>
    %c0_132 = arith.constant 0 : index
    %c0_133 = arith.constant 0 : index
    %117 = vector.load %arg17[%c0_132, %c0_133] : memref<14x84xf32, #tpu.memory_space<vmem>>, vector<14x84xf32>
    tpu.vector_store %arg17[%c0_132, %c0_133], %116 {strides = array<i32>} : memref<14x84xf32, #tpu.memory_space<vmem>>, vector<14x84xf32>,
    %cst_134 = arith.constant 0.000000e+00 : f32
    %118 = vector.broadcast %cst_134 : f32 to vector<10x160xf32>
    %c0_135 = arith.constant 0 : index
    %c0_136 = arith.constant 0 : index
    %119 = vector.load %arg17[%c0_135, %c0_136] : memref<14x84xf32, #tpu.memory_space<vmem>>, vector<10x84xf32>
    %c0_137 = arith.constant 0 : index
    %c0_138 = arith.constant 0 : index
    %c0_139 = arith.constant 0 : index
    %120 = vector.load %arg6[%c0_137, %c0_138, %c0_139] : memref<5x84x160xf32, #tpu.memory_space<vmem>>, vector<1x84x160xf32>
    %121 = vector.shape_cast %120 : vector<1x84x160xf32> to vector<84x160xf32>
    %cst_140 = arith.constant dense<0.000000e+00> : vector<10x160xf32>
    %122 = tpu.matmul %119, %121, %cst_140 {dimension_numbers = #tpu.dot_dimension_numbers<[1], [0], [0], [1], [0, 0, 1, 1], [], []>} : vector<10x84xf32>, vector<84x160xf32>, vector<10x160xf32> -> vector<10x160xf32>
    %123 = arith.addf %118, %122 : vector<10x160xf32>
    %c1_141 = arith.constant 1 : index
    %c0_142 = arith.constant 0 : index
    %124 = vector.load %arg17[%c1_141, %c0_142] : memref<14x84xf32, #tpu.memory_space<vmem>>, vector<10x84xf32>
    %c1_143 = arith.constant 1 : index
    %c0_144 = arith.constant 0 : index
    %c0_145 = arith.constant 0 : index
    %125 = vector.load %arg6[%c1_143, %c0_144, %c0_145] : memref<5x84x160xf32, #tpu.memory_space<vmem>>, vector<1x84x160xf32>
    %126 = vector.shape_cast %125 : vector<1x84x160xf32> to vector<84x160xf32>
    %cst_146 = arith.constant dense<0.000000e+00> : vector<10x160xf32>
    %127 = tpu.matmul %124, %126, %cst_146 {dimension_numbers = #tpu.dot_dimension_numbers<[1], [0], [0], [1], [0, 0, 1, 1], [], []>} : vector<10x84xf32>, vector<84x160xf32>, vector<10x160xf32> -> vector<10x160xf32>
    %128 = arith.addf %123, %127 : vector<10x160xf32>
    %c2_147 = arith.constant 2 : index
    %c0_148 = arith.constant 0 : index
    %129 = vector.load %arg17[%c2_147, %c0_148] : memref<14x84xf32, #tpu.memory_space<vmem>>, vector<10x84xf32>
    %c2_149 = arith.constant 2 : index
    %c0_150 = arith.constant 0 : index
    %c0_151 = arith.constant 0 : index
    %130 = vector.load %arg6[%c2_149, %c0_150, %c0_151] : memref<5x84x160xf32, #tpu.memory_space<vmem>>, vector<1x84x160xf32>
    %131 = vector.shape_cast %130 : vector<1x84x160xf32> to vector<84x160xf32>
    %cst_152 = arith.constant dense<0.000000e+00> : vector<10x160xf32>
    %132 = tpu.matmul %129, %131, %cst_152 {dimension_numbers = #tpu.dot_dimension_numbers<[1], [0], [0], [1], [0, 0, 1, 1], [], []>} : vector<10x84xf32>, vector<84x160xf32>, vector<10x160xf32> -> vector<10x160xf32>
    %133 = arith.addf %128, %132 : vector<10x160xf32>
    %c3_153 = arith.constant 3 : index
    %c0_154 = arith.constant 0 : index
    %134 = vector.load %arg17[%c3_153, %c0_154] : memref<14x84xf32, #tpu.memory_space<vmem>>, vector<10x84xf32>
    %c3_155 = arith.constant 3 : index
    %c0_156 = arith.constant 0 : index
    %c0_157 = arith.constant 0 : index
    %135 = vector.load %arg6[%c3_155, %c0_156, %c0_157] : memref<5x84x160xf32, #tpu.memory_space<vmem>>, vector<1x84x160xf32>
    %136 = vector.shape_cast %135 : vector<1x84x160xf32> to vector<84x160xf32>
    %cst_158 = arith.constant dense<0.000000e+00> : vector<10x160xf32>
    %137 = tpu.matmul %134, %136, %cst_158 {dimension_numbers = #tpu.dot_dimension_numbers<[1], [0], [0], [1], [0, 0, 1, 1], [], []>} : vector<10x84xf32>, vector<84x160xf32>, vector<10x160xf32> -> vector<10x160xf32>
    %138 = arith.addf %133, %137 : vector<10x160xf32>
    %c4_159 = arith.constant 4 : index
    %c0_160 = arith.constant 0 : index
    %139 = vector.load %arg17[%c4_159, %c0_160] : memref<14x84xf32, #tpu.memory_space<vmem>>, vector<10x84xf32>
    %c4_161 = arith.constant 4 : index
    %c0_162 = arith.constant 0 : index
    %c0_163 = arith.constant 0 : index
    %140 = vector.load %arg6[%c4_161, %c0_162, %c0_163] : memref<5x84x160xf32, #tpu.memory_space<vmem>>, vector<1x84x160xf32>
    %141 = vector.shape_cast %140 : vector<1x84x160xf32> to vector<84x160xf32>
    %cst_164 = arith.constant dense<0.000000e+00> : vector<10x160xf32>
    %142 = tpu.matmul %139, %141, %cst_164 {dimension_numbers = #tpu.dot_dimension_numbers<[1], [0], [0], [1], [0, 0, 1, 1], [], []>} : vector<10x84xf32>, vector<84x160xf32>, vector<10x160xf32> -> vector<10x160xf32>
    %143 = arith.addf %138, %142 : vector<10x160xf32>
    %c0_165 = arith.constant 0 : index
    %c0_166 = arith.constant 0 : index
    %144 = vector.load %arg7[%c0_165, %c0_166] : memref<1x160xf32, #tpu.memory_space<vmem>>, vector<1x160xf32>
    %145 = vector.broadcast %144 : vector<1x160xf32> to vector<10x160xf32>
    %146 = arith.addf %143, %145 : vector<10x160xf32>
    %cst_167 = arith.constant 0.000000e+00 : f32
    %147 = vector.broadcast %cst_167 : f32 to vector<10x160xf32>
    %148 = arith.maximumf %146, %147 : vector<10x160xf32>
    %c0_168 = arith.constant 0 : index
    %c0_169 = arith.constant 0 : index
    %c0_170 = arith.constant 0 : index
    %149 = vector.load %arg8[%c0_168, %c0_169, %c0_170] : memref<2x5x10xf32, #tpu.memory_space<vmem>>, vector<1x5x10xf32>
    %150 = vector.shape_cast %149 : vector<1x5x10xf32> to vector<5x10xf32>
    %cst_171 = arith.constant dense<0.000000e+00> : vector<5x160xf32>
    %151 = tpu.matmul %150, %148, %cst_171 {dimension_numbers = #tpu.dot_dimension_numbers<[1], [0], [0], [1], [0, 0, 1, 1], [], []>} : vector<5x10xf32>, vector<10x160xf32>, vector<5x160xf32> -> vector<5x160xf32>
    %c1_172 = arith.constant 1 : index
    %c0_173 = arith.constant 0 : index
    %c0_174 = arith.constant 0 : index
    %152 = vector.load %arg8[%c1_172, %c0_173, %c0_174] : memref<2x5x10xf32, #tpu.memory_space<vmem>>, vector<1x5x10xf32>
    %153 = vector.shape_cast %152 : vector<1x5x10xf32> to vector<5x10xf32>
    %cst_175 = arith.constant dense<0.000000e+00> : vector<5x160xf32>
    %154 = tpu.matmul %153, %148, %cst_175 {dimension_numbers = #tpu.dot_dimension_numbers<[1], [0], [0], [1], [0, 0, 1, 1], [], []>} : vector<5x10xf32>, vector<10x160xf32>, vector<5x160xf32> -> vector<5x160xf32>
    %c0_176 = arith.constant 0 : index
    %c0_177 = arith.constant 0 : index
    %c0_178 = arith.constant 0 : index
    %155 = vector.load %arg9[%c0_176, %c0_177, %c0_178] : memref<2x160x80xf32, #tpu.memory_space<vmem>>, vector<1x160x80xf32>
    %156 = vector.shape_cast %155 : vector<1x160x80xf32> to vector<160x80xf32>
    %cst_179 = arith.constant dense<0.000000e+00> : vector<5x80xf32>
    %157 = tpu.matmul %151, %156, %cst_179 {dimension_numbers = #tpu.dot_dimension_numbers<[1], [0], [0], [1], [0, 0, 1, 1], [], []>} : vector<5x160xf32>, vector<160x80xf32>, vector<5x80xf32> -> vector<5x80xf32>
    %c1_180 = arith.constant 1 : index
    %c0_181 = arith.constant 0 : index
    %c0_182 = arith.constant 0 : index
    %158 = vector.load %arg9[%c1_180, %c0_181, %c0_182] : memref<2x160x80xf32, #tpu.memory_space<vmem>>, vector<1x160x80xf32>
    %159 = vector.shape_cast %158 : vector<1x160x80xf32> to vector<160x80xf32>
    %cst_183 = arith.constant dense<0.000000e+00> : vector<5x80xf32>
    %160 = tpu.matmul %151, %159, %cst_183 {dimension_numbers = #tpu.dot_dimension_numbers<[1], [0], [0], [1], [0, 0, 1, 1], [], []>} : vector<5x160xf32>, vector<160x80xf32>, vector<5x80xf32> -> vector<5x80xf32>
    %161 = arith.maximumf %157, %160 : vector<5x80xf32>
    %c0_184 = arith.constant 0 : index
    %c0_185 = arith.constant 0 : index
    %c0_186 = arith.constant 0 : index
    %162 = vector.load %arg9[%c0_184, %c0_185, %c0_186] : memref<2x160x80xf32, #tpu.memory_space<vmem>>, vector<1x160x80xf32>
    %163 = vector.shape_cast %162 : vector<1x160x80xf32> to vector<160x80xf32>
    %cst_187 = arith.constant dense<0.000000e+00> : vector<5x80xf32>
    %164 = tpu.matmul %154, %163, %cst_187 {dimension_numbers = #tpu.dot_dimension_numbers<[1], [0], [0], [1], [0, 0, 1, 1], [], []>} : vector<5x160xf32>, vector<160x80xf32>, vector<5x80xf32> -> vector<5x80xf32>
    %c1_188 = arith.constant 1 : index
    %c0_189 = arith.constant 0 : index
    %c0_190 = arith.constant 0 : index
    %165 = vector.load %arg9[%c1_188, %c0_189, %c0_190] : memref<2x160x80xf32, #tpu.memory_space<vmem>>, vector<1x160x80xf32>
    %166 = vector.shape_cast %165 : vector<1x160x80xf32> to vector<160x80xf32>
    %cst_191 = arith.constant dense<0.000000e+00> : vector<5x80xf32>
    %167 = tpu.matmul %154, %166, %cst_191 {dimension_numbers = #tpu.dot_dimension_numbers<[1], [0], [0], [1], [0, 0, 1, 1], [], []>} : vector<5x160xf32>, vector<160x80xf32>, vector<5x80xf32> -> vector<5x80xf32>
    %168 = arith.maximumf %164, %167 : vector<5x80xf32>
    %169 = arith.maximumf %161, %168 : vector<5x80xf32>
    %c0_192 = arith.constant 0 : index
    %c0_193 = arith.constant 0 : index
    %170 = vector.load %arg18[%c0_192, %c0_193] : memref<5x80xf32, #tpu.memory_space<vmem>>, vector<5x80xf32>
    tpu.vector_store %arg18[%c0_192, %c0_193], %169 {strides = array<i32>} : memref<5x80xf32, #tpu.memory_space<vmem>>, vector<5x80xf32>,
    %c0_194 = arith.constant 0 : index
    %c0_195 = arith.constant 0 : index
    %171 = vector.load %arg11[%c0_194, %c0_195] : memref<1x120xf32, #tpu.memory_space<vmem>>, vector<1x120xf32>
    %c0_196 = arith.constant 0 : index
    %c0_197 = arith.constant 0 : index
    %172 = vector.load %arg18[%c0_196, %c0_197] : memref<5x80xf32, #tpu.memory_space<vmem>>, vector<1x80xf32>
    %c0_198 = arith.constant 0 : index
    %c0_199 = arith.constant 0 : index
    %c0_200 = arith.constant 0 : index
    %173 = vector.load %arg10[%c0_198, %c0_199, %c0_200] : memref<5x80x120xf32, #tpu.memory_space<vmem>>, vector<1x80x120xf32>
    %174 = vector.shape_cast %173 : vector<1x80x120xf32> to vector<80x120xf32>
    %cst_201 = arith.constant dense<0.000000e+00> : vector<1x120xf32>
    %175 = tpu.matmul %172, %174, %cst_201 {dimension_numbers = #tpu.dot_dimension_numbers<[1], [0], [0], [1], [0, 0, 1, 1], [], []>} : vector<1x80xf32>, vector<80x120xf32>, vector<1x120xf32> -> vector<1x120xf32>
    %176 = arith.addf %171, %175 : vector<1x120xf32>
    %c1_202 = arith.constant 1 : index
    %c0_203 = arith.constant 0 : index
    %177 = vector.load %arg18[%c1_202, %c0_203] : memref<5x80xf32, #tpu.memory_space<vmem>>, vector<1x80xf32>
    %c1_204 = arith.constant 1 : index
    %c0_205 = arith.constant 0 : index
    %c0_206 = arith.constant 0 : index
    %178 = vector.load %arg10[%c1_204, %c0_205, %c0_206] : memref<5x80x120xf32, #tpu.memory_space<vmem>>, vector<1x80x120xf32>
    %179 = vector.shape_cast %178 : vector<1x80x120xf32> to vector<80x120xf32>
    %cst_207 = arith.constant dense<0.000000e+00> : vector<1x120xf32>
    %180 = tpu.matmul %177, %179, %cst_207 {dimension_numbers = #tpu.dot_dimension_numbers<[1], [0], [0], [1], [0, 0, 1, 1], [], []>} : vector<1x80xf32>, vector<80x120xf32>, vector<1x120xf32> -> vector<1x120xf32>
    %181 = arith.addf %176, %180 : vector<1x120xf32>
    %c2_208 = arith.constant 2 : index
    %c0_209 = arith.constant 0 : index
    %182 = vector.load %arg18[%c2_208, %c0_209] : memref<5x80xf32, #tpu.memory_space<vmem>>, vector<1x80xf32>
    %c2_210 = arith.constant 2 : index
    %c0_211 = arith.constant 0 : index
    %c0_212 = arith.constant 0 : index
    %183 = vector.load %arg10[%c2_210, %c0_211, %c0_212] : memref<5x80x120xf32, #tpu.memory_space<vmem>>, vector<1x80x120xf32>
    %184 = vector.shape_cast %183 : vector<1x80x120xf32> to vector<80x120xf32>
    %cst_213 = arith.constant dense<0.000000e+00> : vector<1x120xf32>
    %185 = tpu.matmul %182, %184, %cst_213 {dimension_numbers = #tpu.dot_dimension_numbers<[1], [0], [0], [1], [0, 0, 1, 1], [], []>} : vector<1x80xf32>, vector<80x120xf32>, vector<1x120xf32> -> vector<1x120xf32>
    %186 = arith.addf %181, %185 : vector<1x120xf32>
    %c3_214 = arith.constant 3 : index
    %c0_215 = arith.constant 0 : index
    %187 = vector.load %arg18[%c3_214, %c0_215] : memref<5x80xf32, #tpu.memory_space<vmem>>, vector<1x80xf32>
    %c3_216 = arith.constant 3 : index
    %c0_217 = arith.constant 0 : index
    %c0_218 = arith.constant 0 : index
    %188 = vector.load %arg10[%c3_216, %c0_217, %c0_218] : memref<5x80x120xf32, #tpu.memory_space<vmem>>, vector<1x80x120xf32>
    %189 = vector.shape_cast %188 : vector<1x80x120xf32> to vector<80x120xf32>
    %cst_219 = arith.constant dense<0.000000e+00> : vector<1x120xf32>
    %190 = tpu.matmul %187, %189, %cst_219 {dimension_numbers = #tpu.dot_dimension_numbers<[1], [0], [0], [1], [0, 0, 1, 1], [], []>} : vector<1x80xf32>, vector<80x120xf32>, vector<1x120xf32> -> vector<1x120xf32>
    %191 = arith.addf %186, %190 : vector<1x120xf32>
    %c4_220 = arith.constant 4 : index
    %c0_221 = arith.constant 0 : index
    %192 = vector.load %arg18[%c4_220, %c0_221] : memref<5x80xf32, #tpu.memory_space<vmem>>, vector<1x80xf32>
    %c4_222 = arith.constant 4 : index
    %c0_223 = arith.constant 0 : index
    %c0_224 = arith.constant 0 : index
    %193 = vector.load %arg10[%c4_222, %c0_223, %c0_224] : memref<5x80x120xf32, #tpu.memory_space<vmem>>, vector<1x80x120xf32>
    %194 = vector.shape_cast %193 : vector<1x80x120xf32> to vector<80x120xf32>
    %cst_225 = arith.constant dense<0.000000e+00> : vector<1x120xf32>
    %195 = tpu.matmul %192, %194, %cst_225 {dimension_numbers = #tpu.dot_dimension_numbers<[1], [0], [0], [1], [0, 0, 1, 1], [], []>} : vector<1x80xf32>, vector<80x120xf32>, vector<1x120xf32> -> vector<1x120xf32>
    %196 = arith.addf %191, %195 : vector<1x120xf32>
    %cst_226 = arith.constant 0.000000e+00 : f32
    %197 = vector.broadcast %cst_226 : f32 to vector<1x120xf32>
    %198 = arith.maximumf %196, %197 : vector<1x120xf32>
    %c0_227 = arith.constant 0 : index
    %c0_228 = arith.constant 0 : index
    %199 = vector.load %arg12[%c0_227, %c0_228] : memref<120x84xf32, #tpu.memory_space<vmem>>, vector<120x84xf32>
    %cst_229 = arith.constant dense<0.000000e+00> : vector<1x84xf32>
    %200 = tpu.matmul %198, %199, %cst_229 {dimension_numbers = #tpu.dot_dimension_numbers<[1], [0], [0], [1], [0, 0, 1, 1], [], []>} : vector<1x120xf32>, vector<120x84xf32>, vector<1x84xf32> -> vector<1x84xf32>
    %c0_230 = arith.constant 0 : index
    %c0_231 = arith.constant 0 : index
    %201 = vector.load %arg13[%c0_230, %c0_231] : memref<1x84xf32, #tpu.memory_space<vmem>>, vector<1x84xf32>
    %202 = arith.addf %200, %201 : vector<1x84xf32>
    %cst_232 = arith.constant 0.000000e+00 : f32
    %203 = vector.broadcast %cst_232 : f32 to vector<1x84xf32>
    %204 = arith.maximumf %202, %203 : vector<1x84xf32>
    %c0_233 = arith.constant 0 : index
    %c0_234 = arith.constant 0 : index
    %205 = vector.load %arg14[%c0_233, %c0_234] : memref<84x10xf32, #tpu.memory_space<vmem>>, vector<84x10xf32>
    %cst_235 = arith.constant dense<0.000000e+00> : vector<1x10xf32>
    %206 = tpu.matmul %204, %205, %cst_235 {dimension_numbers = #tpu.dot_dimension_numbers<[1], [0], [0], [1], [0, 0, 1, 1], [], []>} : vector<1x84xf32>, vector<84x10xf32>, vector<1x10xf32> -> vector<1x10xf32>
    %c0_236 = arith.constant 0 : index
    %c0_237 = arith.constant 0 : index
    %207 = vector.load %arg15[%c0_236, %c0_237] : memref<1x10xf32, #tpu.memory_space<vmem>>, vector<1x10xf32>
    %208 = arith.addf %206, %207 : vector<1x10xf32>
    %cst_238 = arith.constant 0.000000e+00 : f32
    %209 = vector.broadcast %cst_238 : f32 to vector<1x10xf32>
    %210 = arith.maximumf %208, %209 : vector<1x10xf32>
    %c0_239 = arith.constant 0 : index
    %c0_240 = arith.constant 0 : index
    %c0_241 = arith.constant 0 : index
    %211 = vector.load %arg16[%c0_239, %c0_240, %c0_241] : memref<1x1x10xf32, #tpu.memory_space<vmem>>, vector<1x1x10xf32>
    %212 = vector.shape_cast %211 : vector<1x1x10xf32> to vector<1x10xf32>
    %213 = vector.shape_cast %210 : vector<1x10xf32> to vector<1x1x10xf32>
    tpu.vector_store %arg16[%c0_239, %c0_240, %c0_241], %213 {strides = array<i32>} : memref<1x1x10xf32, #tpu.memory_space<vmem>>, vector<1x1x10xf32>,
    return
  }
  func.func @transform_0(%arg0: i32) -> (i32, i32, i32, i32) {
    %c0_i32 = arith.constant 0 : i32
    %c0_i32_0 = arith.constant 0 : i32
    %c0_i32_1 = arith.constant 0 : i32
    %c0_i32_2 = arith.constant 0 : i32
    return %arg0, %c0_i32, %c0_i32_0, %c0_i32_1 : i32, i32, i32, i32
  }
  func.func @transform_1(%arg0: i32) -> (i32, i32, i32) {
    %c0_i32 = arith.constant 0 : i32
    %c0_i32_0 = arith.constant 0 : i32
    %c0_i32_1 = arith.constant 0 : i32
    %c0_i32_2 = arith.constant 0 : i32
    return %c0_i32, %c0_i32_0, %c0_i32_1 : i32, i32, i32
  }
  func.func @transform_2(%arg0: i32) -> (i32, i32) {
    %c0_i32 = arith.constant 0 : i32
    %c0_i32_0 = arith.constant 0 : i32
    %c0_i32_1 = arith.constant 0 : i32
    return %c0_i32, %c0_i32_0 : i32, i32
  }
  func.func @transform_3(%arg0: i32) -> (i32, i32, i32) {
    %c0_i32 = arith.constant 0 : i32
    %c0_i32_0 = arith.constant 0 : i32
    %c0_i32_1 = arith.constant 0 : i32
    %c0_i32_2 = arith.constant 0 : i32
    return %c0_i32, %c0_i32_0, %c0_i32_1 : i32, i32, i32
  }
  func.func @transform_4(%arg0: i32) -> (i32, i32, i32) {
    %c0_i32 = arith.constant 0 : i32
    %c0_i32_0 = arith.constant 0 : i32
    %c0_i32_1 = arith.constant 0 : i32
    %c0_i32_2 = arith.constant 0 : i32
    return %c0_i32, %c0_i32_0, %c0_i32_1 : i32, i32, i32
  }
  func.func @transform_5(%arg0: i32) -> (i32, i32, i32) {
    %c0_i32 = arith.constant 0 : i32
    %c0_i32_0 = arith.constant 0 : i32
    %c0_i32_1 = arith.constant 0 : i32
    %c0_i32_2 = arith.constant 0 : i32
    return %c0_i32, %c0_i32_0, %c0_i32_1 : i32, i32, i32
  }
  func.func @transform_6(%arg0: i32) -> (i32, i32) {
    %c0_i32 = arith.constant 0 : i32
    %c0_i32_0 = arith.constant 0 : i32
    %c0_i32_1 = arith.constant 0 : i32
    return %c0_i32, %c0_i32_0 : i32, i32
  }
  func.func @transform_7(%arg0: i32) -> (i32, i32, i32) {
    %c0_i32 = arith.constant 0 : i32
    %c0_i32_0 = arith.constant 0 : i32
    %c0_i32_1 = arith.constant 0 : i32
    %c0_i32_2 = arith.constant 0 : i32
    return %c0_i32, %c0_i32_0, %c0_i32_1 : i32, i32, i32
  }
  func.func @transform_8(%arg0: i32) -> (i32, i32, i32) {
    %c0_i32 = arith.constant 0 : i32
    %c0_i32_0 = arith.constant 0 : i32
    %c0_i32_1 = arith.constant 0 : i32
    %c0_i32_2 = arith.constant 0 : i32
    return %c0_i32, %c0_i32_0, %c0_i32_1 : i32, i32, i32
  }
  func.func @transform_9(%arg0: i32) -> (i32, i32, i32) {
    %c0_i32 = arith.constant 0 : i32
    %c0_i32_0 = arith.constant 0 : i32
    %c0_i32_1 = arith.constant 0 : i32
    %c0_i32_2 = arith.constant 0 : i32
    return %c0_i32, %c0_i32_0, %c0_i32_1 : i32, i32, i32
  }
  func.func @transform_10(%arg0: i32) -> (i32, i32) {
    %c0_i32 = arith.constant 0 : i32
    %c0_i32_0 = arith.constant 0 : i32
    %c0_i32_1 = arith.constant 0 : i32
    return %c0_i32, %c0_i32_0 : i32, i32
  }
  func.func @transform_11(%arg0: i32) -> (i32, i32) {
    %c0_i32 = arith.constant 0 : i32
    %c0_i32_0 = arith.constant 0 : i32
    %c0_i32_1 = arith.constant 0 : i32
    return %c0_i32, %c0_i32_0 : i32, i32
  }
  func.func @transform_12(%arg0: i32) -> (i32, i32) {
    %c0_i32 = arith.constant 0 : i32
    %c0_i32_0 = arith.constant 0 : i32
    %c0_i32_1 = arith.constant 0 : i32
    return %c0_i32, %c0_i32_0 : i32, i32
  }
  func.func @transform_13(%arg0: i32) -> (i32, i32) {
    %c0_i32 = arith.constant 0 : i32
    %c0_i32_0 = arith.constant 0 : i32
    %c0_i32_1 = arith.constant 0 : i32
    return %c0_i32, %c0_i32_0 : i32, i32
  }
  func.func @transform_14(%arg0: i32) -> (i32, i32) {
    %c0_i32 = arith.constant 0 : i32
    %c0_i32_0 = arith.constant 0 : i32
    %c0_i32_1 = arith.constant 0 : i32
    return %c0_i32, %c0_i32_0 : i32, i32
  }
  func.func @transform_15(%arg0: i32) -> (i32, i32, i32) {
    %c0_i32 = arith.constant 0 : i32
    %c0_i32_0 = arith.constant 0 : i32
    %c0_i32_1 = arith.constant 0 : i32
    return %arg0, %c0_i32, %c0_i32_0 : i32, i32, i32
  }
}

</mosaic_0001>

<llo_original>
// kernel: convnet_forward.1
$region0: #{convnet_forward.1}
  #allocation0 [shape = 'u32[]', space=smem, size = 0x4, offset = 0x4, fixed_abs, tag = 'smem constant byte address 0x4 - core index']
  #allocation1 [shape = 'u32[144,128]{1,0:T(1,128)}', space=vmem, size = 0x12000, scoped, tag = 'internal scratch']
  #allocation2 [shape = 'f32[14,84]{1,0:T(8,128)}', space=vmem, size = 0x2000, scoped, tag = 'scratch operand']
  #allocation3 [shape = 'f32[5,80]{1,0:T(8,128)}', space=vmem, size = 0x1000, scoped, tag = 'scratch operand']
  %s0 = inlined_call_operand.hbm [shape: f32[2,3,32,32], index: 0, kind: input, shape index: {}]
  %s1 = inlined_call_operand.vmem [shape: f32[15,32,168], index: 1, kind: input, shape index: {}]
  %s2 = inlined_call_operand.vmem [shape: f32[1,168], index: 2, kind: input, shape index: {}]
  %s3 = inlined_call_operand.vmem [shape: f32[2,14,28], index: 3, kind: input, shape index: {}]
  %s4 = inlined_call_operand.vmem [shape: f32[2,168,84], index: 4, kind: input, shape index: {}]
  %s5 = inlined_call_operand.vmem [shape: f32[5,84,160], index: 5, kind: input, shape index: {}]
  %s6 = inlined_call_operand.vmem [shape: f32[1,160], index: 6, kind: input, shape index: {}]
  %s7 = inlined_call_operand.vmem [shape: f32[2,5,10], index: 7, kind: input, shape index: {}]
  %s8 = inlined_call_operand.vmem [shape: f32[2,160,80], index: 8, kind: input, shape index: {}]
  %s9 = inlined_call_operand.vmem [shape: f32[5,80,120], index: 9, kind: input, shape index: {}]
  %s10 = inlined_call_operand.vmem [shape: f32[1,120], index: 10, kind: input, shape index: {}]
  %s11 = inlined_call_operand.vmem [shape: f32[120,84], index: 11, kind: input, shape index: {}]
  %s12 = inlined_call_operand.vmem [shape: f32[1,84], index: 12, kind: input, shape index: {}]
  %s13 = inlined_call_operand.vmem [shape: f32[84,10], index: 13, kind: input, shape index: {}]
  %s14 = inlined_call_operand.vmem [shape: f32[1,10], index: 14, kind: input, shape index: {}]
  %s15 = inlined_call_operand.hbm [shape: f32[2,1,10], index: 15, kind: output, shape index: {}]
  %s16 = sld [smem:[#allocation0]]
  $region97: #{convnet_forward.1} parent=0
    _
  %s18 = ssub.s32 1, %s16
  %s19 = scalar_select 0, %s18, %s16
  $region1: #{convnet_forward.1} parent=0
    #allocation4 [shape = 'u8[98304]{0}', space=vmem, size = 0x18000, scoped, tag = 'input window, operand 0']
    #allocation5 [shape = 's32[2]{0}', space=sflag, size = 0x8, scoped, tag = 'scoped memory for convnet_forward.1']
    #allocation6 [shape = 's32[2]{0}', space=sflag, size = 0x8, scoped, tag = 'scoped memory for convnet_forward.1']
    #allocation7 [shape = 'u8[1024]{0}', space=vmem, size = 0x400, scoped, tag = 'output window, operand 0']
    %20 = vsyncpa [#allocation5], 0
    %s21 = scalar_lea.sflag [#allocation5], 1
    %22 = vsyncpa %s21, 0
    %23 = vsyncpa [#allocation6], 0
    %s24 = scalar_lea.sflag [#allocation6], 1
    %25 = vsyncpa %s24, 0
    loop: start=0, step=1, limit=4
    $region2: #{convnet_forward.1} parent=1 // loop_pre_header
      _
    $region3: #{convnet_forward.1} parent=1 // loop_header
      %s27 = sphi 0, %s31
      %p28 = scmp.ge.s32.totalorder %s27, 4
      %s37 = sphi 0, %s39
      %s40 = sphi 0, %s37
      %s41 = sphi 0, %s40
      %s57 = sphi 0, %s41
      %s61 = sphi 0, %s61
      %s63 = sphi 0, %s61
      %s64 = sphi 0, %s63
      %s78 = sphi 0, %s64
      %s82 = sphi 0, %s82
      %s84 = sphi 0, %s82
      %s85 = sphi 0, %s84
      %s99 = sphi 0, %s85
      %s103 = sphi 0, %s103
      %s105 = sphi 0, %s103
      %s106 = sphi 0, %s105
      %s120 = sphi 0, %s106
      %s124 = sphi 0, %s124
      %s126 = sphi 0, %s124
      %s127 = sphi 0, %s126
      %s141 = sphi 0, %s127
      %s145 = sphi 0, %s145
      %s147 = sphi 0, %s145
      %s148 = sphi 0, %s147
      %s162 = sphi 0, %s148
      %s166 = sphi 0, %s166
      %s168 = sphi 0, %s166
      %s169 = sphi 0, %s168
      %s183 = sphi 0, %s169
      %s187 = sphi 0, %s187
      %s189 = sphi 0, %s187
      %s190 = sphi 0, %s189
      %s204 = sphi 0, %s190
      %s208 = sphi 0, %s208
      %s210 = sphi 0, %s208
      %s211 = sphi 0, %s210
      %s225 = sphi 0, %s211
      %s229 = sphi 0, %s229
      %s231 = sphi 0, %s229
      %s232 = sphi 0, %s231
      %s246 = sphi 0, %s232
      %s250 = sphi 0, %s250
      %s252 = sphi 0, %s250
      %s253 = sphi 0, %s252
      %s267 = sphi 0, %s253
      %s271 = sphi 0, %s271
      %s273 = sphi 0, %s271
      %s274 = sphi 0, %s273
      %s288 = sphi 0, %s274
      %s292 = sphi 0, %s292
      %s294 = sphi 0, %s292
      %s295 = sphi 0, %s294
      %s309 = sphi 0, %s295
      %s313 = sphi 0, %s313
      %s315 = sphi 0, %s313
      %s316 = sphi 0, %s315
      %s330 = sphi 0, %s316
      %s334 = sphi 0, %s334
      %s336 = sphi 0, %s334
      %s337 = sphi 0, %s336
      %s351 = sphi 0, %s337
      %s357 = sphi 0, %s359
      %s360 = sphi 0, %s357
      %s361 = sphi 0, %s360
      %s377 = sphi 0, %s361
    $region4: #{convnet_forward.1} parent=1 // loop_header_branch
      %30 = sbr.rel (%p28) target = $region8
    $region5: #{convnet_forward.1} parent=1 // loop_body
      %s32 = ssub.s32 %s27, 1
      %s33 = ssub.s32 %s27, 2
      %s34 = sadd.s32 %s27, 1
      %s35 = ssub.s32 %s27, %s34
      %p36 = scmp.eq.s32.totalorder %s35, 0
      %s38 = sadd.s32 %s37, 1
      %s39 = scalar_select %p36, %s37, %s38
      %p42 = pneg %p36
      %p43 = scmp.eq.s32.totalorder %s27, 1
      %p44 = por %p42, %p43
      %p45 = scmp.ne.s32.totalorder %s37, %s40
      %p46 = scmp.eq.s32.totalorder %s27, 0
      %p47 = por %p45, %p46
      %p48 = scmp.ne.s32.totalorder %s37, %s40
      %p49 = scmp.eq.s32.totalorder %s32, 1
      %p50 = por %p48, %p49
      %p51 = scmp.ne.s32.totalorder %s40, %s41
      %p52 = scmp.eq.s32.totalorder %s32, 0
      %p53 = por %p51, %p52
      %p54 = scmp.ne.s32.totalorder %s40, %s41
      %p55 = scmp.eq.s32.totalorder %s33, 1
      %p56 = por %p54, %p55
      %p58 = scmp.ne.s32.totalorder %s41, %s57
      %p59 = scmp.eq.s32.totalorder %s33, 0
      %p60 = por %p58, %p59
      %s62 = sadd.s32 %s61, 1
      %p65 = scmp.eq.s32.totalorder %s27, 1
      %p66 = scmp.ne.s32.totalorder %s61, %s63
      %p67 = scmp.eq.s32.totalorder %s27, 0
      %p68 = por %p66, %p67
      %p69 = scmp.ne.s32.totalorder %s61, %s63
      %p70 = scmp.eq.s32.totalorder %s32, 1
      %p71 = por %p69, %p70
      %p72 = scmp.ne.s32.totalorder %s63, %s64
      %p73 = scmp.eq.s32.totalorder %s32, 0
      %p74 = por %p72, %p73
      %p75 = scmp.ne.s32.totalorder %s63, %s64
      %p76 = scmp.eq.s32.totalorder %s33, 1
      %p77 = por %p75, %p76
      %p79 = scmp.ne.s32.totalorder %s64, %s78
      %p80 = scmp.eq.s32.totalorder %s33, 0
      %p81 = por %p79, %p80
      %s83 = sadd.s32 %s82, 1
      %p86 = scmp.eq.s32.totalorder %s27, 1
      %p87 = scmp.ne.s32.totalorder %s82, %s84
      %p88 = scmp.eq.s32.totalorder %s27, 0
      %p89 = por %p87, %p88
      %p90 = scmp.ne.s32.totalorder %s82, %s84
      %p91 = scmp.eq.s32.totalorder %s32, 1
      %p92 = por %p90, %p91
      %p93 = scmp.ne.s32.totalorder %s84, %s85
      %p94 = scmp.eq.s32.totalorder %s32, 0
      %p95 = por %p93, %p94
      %p96 = scmp.ne.s32.totalorder %s84, %s85
      %p97 = scmp.eq.s32.totalorder %s33, 1
      %p98 = por %p96, %p97
      %p100 = scmp.ne.s32.totalorder %s85, %s99
      %p101 = scmp.eq.s32.totalorder %s33, 0
      %p102 = por %p100, %p101
      %s104 = sadd.s32 %s103, 1
      %p107 = scmp.eq.s32.totalorder %s27, 1
      %p108 = scmp.ne.s32.totalorder %s103, %s105
      %p109 = scmp.eq.s32.totalorder %s27, 0
      %p110 = por %p108, %p109
      %p111 = scmp.ne.s32.totalorder %s103, %s105
      %p112 = scmp.eq.s32.totalorder %s32, 1
      %p113 = por %p111, %p112
      %p114 = scmp.ne.s32.totalorder %s105, %s106
      %p115 = scmp.eq.s32.totalorder %s32, 0
      %p116 = por %p114, %p115
      %p117 = scmp.ne.s32.totalorder %s105, %s106
      %p118 = scmp.eq.s32.totalorder %s33, 1
      %p119 = por %p117, %p118
      %p121 = scmp.ne.s32.totalorder %s106, %s120
      %p122 = scmp.eq.s32.totalorder %s33, 0
      %p123 = por %p121, %p122
      %s125 = sadd.s32 %s124, 1
      %p128 = scmp.eq.s32.totalorder %s27, 1
      %p129 = scmp.ne.s32.totalorder %s124, %s126
      %p130 = scmp.eq.s32.totalorder %s27, 0
      %p131 = por %p129, %p130
      %p132 = scmp.ne.s32.totalorder %s124, %s126
      %p133 = scmp.eq.s32.totalorder %s32, 1
      %p134 = por %p132, %p133
      %p135 = scmp.ne.s32.totalorder %s126, %s127
      %p136 = scmp.eq.s32.totalorder %s32, 0
      %p137 = por %p135, %p136
      %p138 = scmp.ne.s32.totalorder %s126, %s127
      %p139 = scmp.eq.s32.totalorder %s33, 1
      %p140 = por %p138, %p139
      %p142 = scmp.ne.s32.totalorder %s127, %s141
      %p143 = scmp.eq.s32.totalorder %s33, 0
      %p144 = por %p142, %p143
      %s146 = sadd.s32 %s145, 1
      %p149 = scmp.eq.s32.totalorder %s27, 1
      %p150 = scmp.ne.s32.totalorder %s145, %s147
      %p151 = scmp.eq.s32.totalorder %s27, 0
      %p152 = por %p150, %p151
      %p153 = scmp.ne.s32.totalorder %s145, %s147
      %p154 = scmp.eq.s32.totalorder %s32, 1
      %p155 = por %p153, %p154
      %p156 = scmp.ne.s32.totalorder %s147, %s148
      %p157 = scmp.eq.s32.totalorder %s32, 0
      %p158 = por %p156, %p157
      %p159 = scmp.ne.s32.totalorder %s147, %s148
      %p160 = scmp.eq.s32.totalorder %s33, 1
      %p161 = por %p159, %p160
      %p163 = scmp.ne.s32.totalorder %s148, %s162
      %p164 = scmp.eq.s32.totalorder %s33, 0
      %p165 = por %p163, %p164
      %s167 = sadd.s32 %s166, 1
      %p170 = scmp.eq.s32.totalorder %s27, 1
      %p171 = scmp.ne.s32.totalorder %s166, %s168
      %p172 = scmp.eq.s32.totalorder %s27, 0
      %p173 = por %p171, %p172
      %p174 = scmp.ne.s32.totalorder %s166, %s168
      %p175 = scmp.eq.s32.totalorder %s32, 1
      %p176 = por %p174, %p175
      %p177 = scmp.ne.s32.totalorder %s168, %s169
      %p178 = scmp.eq.s32.totalorder %s32, 0
      %p179 = por %p177, %p178
      %p180 = scmp.ne.s32.totalorder %s168, %s169
      %p181 = scmp.eq.s32.totalorder %s33, 1
      %p182 = por %p180, %p181
      %p184 = scmp.ne.s32.totalorder %s169, %s183
      %p185 = scmp.eq.s32.totalorder %s33, 0
      %p186 = por %p184, %p185
      %s188 = sadd.s32 %s187, 1
      %p191 = scmp.eq.s32.totalorder %s27, 1
      %p192 = scmp.ne.s32.totalorder %s187, %s189
      %p193 = scmp.eq.s32.totalorder %s27, 0
      %p194 = por %p192, %p193
      %p195 = scmp.ne.s32.totalorder %s187, %s189
      %p196 = scmp.eq.s32.totalorder %s32, 1
      %p197 = por %p195, %p196
      %p198 = scmp.ne.s32.totalorder %s189, %s190
      %p199 = scmp.eq.s32.totalorder %s32, 0
      %p200 = por %p198, %p199
      %p201 = scmp.ne.s32.totalorder %s189, %s190
      %p202 = scmp.eq.s32.totalorder %s33, 1
      %p203 = por %p201, %p202
      %p205 = scmp.ne.s32.totalorder %s190, %s204
      %p206 = scmp.eq.s32.totalorder %s33, 0
      %p207 = por %p205, %p206
      %s209 = sadd.s32 %s208, 1
      %p212 = scmp.eq.s32.totalorder %s27, 1
      %p213 = scmp.ne.s32.totalorder %s208, %s210
      %p214 = scmp.eq.s32.totalorder %s27, 0
      %p215 = por %p213, %p214
      %p216 = scmp.ne.s32.totalorder %s208, %s210
      %p217 = scmp.eq.s32.totalorder %s32, 1
      %p218 = por %p216, %p217
      %p219 = scmp.ne.s32.totalorder %s210, %s211
      %p220 = scmp.eq.s32.totalorder %s32, 0
      %p221 = por %p219, %p220
      %p222 = scmp.ne.s32.totalorder %s210, %s211
      %p223 = scmp.eq.s32.totalorder %s33, 1
      %p224 = por %p222, %p223
      %p226 = scmp.ne.s32.totalorder %s211, %s225
      %p227 = scmp.eq.s32.totalorder %s33, 0
      %p228 = por %p226, %p227
      %s230 = sadd.s32 %s229, 1
      %p233 = scmp.eq.s32.totalorder %s27, 1
      %p234 = scmp.ne.s32.totalorder %s229, %s231
      %p235 = scmp.eq.s32.totalorder %s27, 0
      %p236 = por %p234, %p235
      %p237 = scmp.ne.s32.totalorder %s229, %s231
      %p238 = scmp.eq.s32.totalorder %s32, 1
      %p239 = por %p237, %p238
      %p240 = scmp.ne.s32.totalorder %s231, %s232
      %p241 = scmp.eq.s32.totalorder %s32, 0
      %p242 = por %p240, %p241
      %p243 = scmp.ne.s32.totalorder %s231, %s232
      %p244 = scmp.eq.s32.totalorder %s33, 1
      %p245 = por %p243, %p244
      %p247 = scmp.ne.s32.totalorder %s232, %s246
      %p248 = scmp.eq.s32.totalorder %s33, 0
      %p249 = por %p247, %p248
      %s251 = sadd.s32 %s250, 1
      %p254 = scmp.eq.s32.totalorder %s27, 1
      %p255 = scmp.ne.s32.totalorder %s250, %s252
      %p256 = scmp.eq.s32.totalorder %s27, 0
      %p257 = por %p255, %p256
      %p258 = scmp.ne.s32.totalorder %s250, %s252
      %p259 = scmp.eq.s32.totalorder %s32, 1
      %p260 = por %p258, %p259
      %p261 = scmp.ne.s32.totalorder %s252, %s253
      %p262 = scmp.eq.s32.totalorder %s32, 0
      %p263 = por %p261, %p262
      %p264 = scmp.ne.s32.totalorder %s252, %s253
      %p265 = scmp.eq.s32.totalorder %s33, 1
      %p266 = por %p264, %p265
      %p268 = scmp.ne.s32.totalorder %s253, %s267
      %p269 = scmp.eq.s32.totalorder %s33, 0
      %p270 = por %p268, %p269
      %s272 = sadd.s32 %s271, 1
      %p275 = scmp.eq.s32.totalorder %s27, 1
      %p276 = scmp.ne.s32.totalorder %s271, %s273
      %p277 = scmp.eq.s32.totalorder %s27, 0
      %p278 = por %p276, %p277
      %p279 = scmp.ne.s32.totalorder %s271, %s273
      %p280 = scmp.eq.s32.totalorder %s32, 1
      %p281 = por %p279, %p280
      %p282 = scmp.ne.s32.totalorder %s273, %s274
      %p283 = scmp.eq.s32.totalorder %s32, 0
      %p284 = por %p282, %p283
      %p285 = scmp.ne.s32.totalorder %s273, %s274
      %p286 = scmp.eq.s32.totalorder %s33, 1
      %p287 = por %p285, %p286
      %p289 = scmp.ne.s32.totalorder %s274, %s288
      %p290 = scmp.eq.s32.totalorder %s33, 0
      %p291 = por %p289, %p290
      %s293 = sadd.s32 %s292, 1
      %p296 = scmp.eq.s32.totalorder %s27, 1
      %p297 = scmp.ne.s32.totalorder %s292, %s294
      %p298 = scmp.eq.s32.totalorder %s27, 0
      %p299 = por %p297, %p298
      %p300 = scmp.ne.s32.totalorder %s292, %s294
      %p301 = scmp.eq.s32.totalorder %s32, 1
      %p302 = por %p300, %p301
      %p303 = scmp.ne.s32.totalorder %s294, %s295
      %p304 = scmp.eq.s32.totalorder %s32, 0
      %p305 = por %p303, %p304
      %p306 = scmp.ne.s32.totalorder %s294, %s295
      %p307 = scmp.eq.s32.totalorder %s33, 1
      %p308 = por %p306, %p307
      %p310 = scmp.ne.s32.totalorder %s295, %s309
      %p311 = scmp.eq.s32.totalorder %s33, 0
      %p312 = por %p310, %p311
      %s314 = sadd.s32 %s313, 1
      %p317 = scmp.eq.s32.totalorder %s27, 1
      %p318 = scmp.ne.s32.totalorder %s313, %s315
      %p319 = scmp.eq.s32.totalorder %s27, 0
      %p320 = por %p318, %p319
      %p321 = scmp.ne.s32.totalorder %s313, %s315
      %p322 = scmp.eq.s32.totalorder %s32, 1
      %p323 = por %p321, %p322
      %p324 = scmp.ne.s32.totalorder %s315, %s316
      %p325 = scmp.eq.s32.totalorder %s32, 0
      %p326 = por %p324, %p325
      %p327 = scmp.ne.s32.totalorder %s315, %s316
      %p328 = scmp.eq.s32.totalorder %s33, 1
      %p329 = por %p327, %p328
      %p331 = scmp.ne.s32.totalorder %s316, %s330
      %p332 = scmp.eq.s32.totalorder %s33, 0
      %p333 = por %p331, %p332
      %s335 = sadd.s32 %s334, 1
      %p338 = scmp.eq.s32.totalorder %s27, 1
      %p339 = scmp.ne.s32.totalorder %s334, %s336
      %p340 = scmp.eq.s32.totalorder %s27, 0
      %p341 = por %p339, %p340
      %p342 = scmp.ne.s32.totalorder %s334, %s336
      %p343 = scmp.eq.s32.totalorder %s32, 1
      %p344 = por %p342, %p343
      %p345 = scmp.ne.s32.totalorder %s336, %s337
      %p346 = scmp.eq.s32.totalorder %s32, 0
      %p347 = por %p345, %p346
      %p348 = scmp.ne.s32.totalorder %s336, %s337
      %p349 = scmp.eq.s32.totalorder %s33, 1
      %p350 = por %p348, %p349
      %p352 = scmp.ne.s32.totalorder %s337, %s351
      %p353 = scmp.eq.s32.totalorder %s33, 0
      %p354 = por %p352, %p353
      %s355 = ssub.s32 %s27, %s34
      %p356 = scmp.eq.s32.totalorder %s355, 0
      %s358 = sadd.s32 %s357, 1
      %s359 = scalar_select %p356, %s357, %s358
      %p362 = pneg %p356
      %p363 = scmp.eq.s32.totalorder %s27, 1
      %p364 = por %p362, %p363
      %p365 = scmp.ne.s32.totalorder %s357, %s360
      %p366 = scmp.eq.s32.totalorder %s27, 0
      %p367 = por %p365, %p366
      %p368 = scmp.ne.s32.totalorder %s357, %s360
      %p369 = scmp.eq.s32.totalorder %s32, 1
      %p370 = por %p368, %p369
      %p371 = scmp.ne.s32.totalorder %s360, %s361
      %p372 = scmp.eq.s32.totalorder %s32, 0
      %p373 = por %p371, %p372
      %p374 = scmp.ne.s32.totalorder %s360, %s361
      %p375 = scmp.eq.s32.totalorder %s33, 1
      %p376 = por %p374, %p375
      %p378 = scmp.ne.s32.totalorder %s361, %s377
      %p379 = scmp.eq.s32.totalorder %s33, 0
      %p380 = por %p378, %p379
      %p381 = scmp.le.s32.totalorder 1, %s27
      %p382 = scmp.lt.s32.totalorder %s27, 3
      %p383 = pnand %p381, %p382
      %p384 = pneg %p383
      // Predicated region
      $region9: #{convnet_forward.1} parent=5 // pred_check
        _
      $region10: #{convnet_forward.1} parent=5 // pred_check_branch
        %386 = sbr.rel (%p383) target = $region12
      $region11: #{convnet_forward.1} parent=5 // pred_region
        %s387 = ssub.s32 %s27, 1
        // Predicated region
        $region13: #{convnet_forward.1} parent=11 // pred_check
          %p388 = pneg %p74
        $region14: #{convnet_forward.1} parent=11 // pred_check_branch
          %390 = sbr.rel (%p388) target = $region16
        $region15: #{convnet_forward.1} parent=11 // pred_region
          _
        $region16: #{convnet_forward.1} parent=11 // pred_fallthru
          _
        // Predicated region
        $region17: #{convnet_forward.1} parent=11 // pred_check
          %p391 = pneg %p95
        $region18: #{convnet_forward.1} parent=11 // pred_check_branch
          %393 = sbr.rel (%p391) target = $region20
        $region19: #{convnet_forward.1} parent=11 // pred_region
          _
        $region20: #{convnet_forward.1} parent=11 // pred_fallthru
          _
        // Predicated region
        $region21: #{convnet_forward.1} parent=11 // pred_check
          %p394 = pneg %p116
        $region22: #{convnet_forward.1} parent=11 // pred_check_branch
          %396 = sbr.rel (%p394) target = $region24
        $region23: #{convnet_forward.1} parent=11 // pred_region
          _
        $region24: #{convnet_forward.1} parent=11 // pred_fallthru
          _
        // Predicated region
        $region25: #{convnet_forward.1} parent=11 // pred_check
          %p397 = pneg %p137
        $region26: #{convnet_forward.1} parent=11 // pred_check_branch
          %399 = sbr.rel (%p397) target = $region28
        $region27: #{convnet_forward.1} parent=11 // pred_region
          _
        $region28: #{convnet_forward.1} parent=11 // pred_fallthru
          _
        // Predicated region
        $region29: #{convnet_forward.1} parent=11 // pred_check
          %p400 = pneg %p158
        $region30: #{convnet_forward.1} parent=11 // pred_check_branch
          %402 = sbr.rel (%p400) target = $region32
        $region31: #{convnet_forward.1} parent=11 // pred_region
          _
        $region32: #{convnet_forward.1} parent=11 // pred_fallthru
          _
        // Predicated region
        $region33: #{convnet_forward.1} parent=11 // pred_check
          %p403 = pneg %p179
        $region34: #{convnet_forward.1} parent=11 // pred_check_branch
          %405 = sbr.rel (%p403) target = $region36
        $region35: #{convnet_forward.1} parent=11 // pred_region
          _
        $region36: #{convnet_forward.1} parent=11 // pred_fallthru
          _
        // Predicated region
        $region37: #{convnet_forward.1} parent=11 // pred_check
          %p406 = pneg %p200
        $region38: #{convnet_forward.1} parent=11 // pred_check_branch
          %408 = sbr.rel (%p406) target = $region40
        $region39: #{convnet_forward.1} parent=11 // pred_region
          _
        $region40: #{convnet_forward.1} parent=11 // pred_fallthru
          _
        // Predicated region
        $region41: #{convnet_forward.1} parent=11 // pred_check
          %p409 = pneg %p221
        $region42: #{convnet_forward.1} parent=11 // pred_check_branch
          %411 = sbr.rel (%p409) target = $region44
        $region43: #{convnet_forward.1} parent=11 // pred_region
          _
        $region44: #{convnet_forward.1} parent=11 // pred_fallthru
          _
        // Predicated region
        $region45: #{convnet_forward.1} parent=11 // pred_check
          %p412 = pneg %p242
        $region46: #{convnet_forward.1} parent=11 // pred_check_branch
          %414 = sbr.rel (%p412) target = $region48
        $region47: #{convnet_forward.1} parent=11 // pred_region
          _
        $region48: #{convnet_forward.1} parent=11 // pred_fallthru
          _
        // Predicated region
        $region49: #{convnet_forward.1} parent=11 // pred_check
          %p415 = pneg %p263
        $region50: #{convnet_forward.1} parent=11 // pred_check_branch
          %417 = sbr.rel (%p415) target = $region52
        $region51: #{convnet_forward.1} parent=11 // pred_region
          _
        $region52: #{convnet_forward.1} parent=11 // pred_fallthru
          _
        // Predicated region
        $region53: #{convnet_forward.1} parent=11 // pred_check
          %p418 = pneg %p284
        $region54: #{convnet_forward.1} parent=11 // pred_check_branch
          %420 = sbr.rel (%p418) target = $region56
        $region55: #{convnet_forward.1} parent=11 // pred_region
          _
        $region56: #{convnet_forward.1} parent=11 // pred_fallthru
          _
        // Predicated region
        $region57: #{convnet_forward.1} parent=11 // pred_check
          %p421 = pneg %p305
        $region58: #{convnet_forward.1} parent=11 // pred_check_branch
          %423 = sbr.rel (%p421) target = $region60
        $region59: #{convnet_forward.1} parent=11 // pred_region
          _
        $region60: #{convnet_forward.1} parent=11 // pred_fallthru
          _
        // Predicated region
        $region61: #{convnet_forward.1} parent=11 // pred_check
          %p424 = pneg %p326
        $region62: #{convnet_forward.1} parent=11 // pred_check_branch
          %426 = sbr.rel (%p424) target = $region64
        $region63: #{convnet_forward.1} parent=11 // pred_region
          _
        $region64: #{convnet_forward.1} parent=11 // pred_fallthru
          _
        // Predicated region
        $region65: #{convnet_forward.1} parent=11 // pred_check
          %p427 = pneg %p347
        $region66: #{convnet_forward.1} parent=11 // pred_check_branch
          %429 = sbr.rel (%p427) target = $region68
        $region67: #{convnet_forward.1} parent=11 // pred_region
          _
        $region68: #{convnet_forward.1} parent=11 // pred_fallthru
          _
      $region12: #{convnet_forward.1} parent=5 // pred_fallthru
        _
      %p430 = scmp.lt.s32.totalorder %s27, 2
      // Predicated region
      $region69: #{convnet_forward.1} parent=5 // pred_check
        %p431 = pneg %p430
      $region70: #{convnet_forward.1} parent=5 // pred_check_branch
        %433 = sbr.rel (%p431) target = $region72
      $region71: #{convnet_forward.1} parent=5 // pred_region
        // Predicated region
        $region73: #{convnet_forward.1} parent=71 // pred_check
          %p434 = pneg %p47
        $region74: #{convnet_forward.1} parent=71 // pred_check_branch
          %436 = sbr.rel (%p434) target = $region76
        $region75: #{convnet_forward.1} parent=71 // pred_region
          %s437 = sand.u32 %s37, 1
          %s438 = scalar_lea.sflag [#allocation5], %s437
          %s439 = sand.u32 %s37, 1
          %s440 = smul.addr %s439, 96
          %s441 = scalar_lea.vmem [#allocation4], %s440
          %s443 = ssub.s32 1536, 1536
          %444 = vsyncadd %s438, %s443
          %s445 = smul.addr %s27, 12
          %s446 = smul.addr %s445, 128
          %s447 = scalar_lea.hbm %s0, %s446
          %s448 = sshll.u32 %s441, 4
          %s449 = int_to_ptr.vmem [resolvable:$true] %s448
          %454 = dma.hbm_to_vmem [thread:$0]  %s447, 1536, %s449, %s438, 128, 128, 8
        $region76: #{convnet_forward.1} parent=71 // pred_fallthru
          _
      $region72: #{convnet_forward.1} parent=5 // pred_fallthru
        _
      %p455 = scmp.le.s32.totalorder 1, %s27
      %p456 = scmp.lt.s32.totalorder %s27, 3
      %p457 = pnand %p455, %p456
      %p458 = pneg %p457
      // Predicated region
      $region77: #{convnet_forward.1} parent=5 // pred_check
        _
      $region78: #{convnet_forward.1} parent=5 // pred_check_branch
        %460 = sbr.rel (%p457) target = $region80
      $region79: #{convnet_forward.1} parent=5 // pred_region
        %s461 = ssub.s32 %s27, 1
        %s462 = sand.u32 %s40, 1
        %s463 = scalar_lea.sflag [#allocation5], %s462
        %s464 = sand.u32 %s40, 1
        %s465 = smul.addr %s464, 96
        %s466 = scalar_lea.vmem [#allocation4], %s465
        // Predicated region
        $region81: #{convnet_forward.1} parent=79 // pred_check
          %p467 = pneg %p53
        $region82: #{convnet_forward.1} parent=79 // pred_check_branch
          %469 = sbr.rel (%p467) target = $region84
        $region83: #{convnet_forward.1} parent=79 // pred_region
          %470 = dma.done %s463, 1536
        $region84: #{convnet_forward.1} parent=79 // pred_fallthru
          _
        %s471 = sand.u32 %s40, 1
        %s472 = scalar_lea.sflag [#allocation5], %s471
        %s473 = sand.u32 %s40, 1
        %s474 = smul.addr %s473, 96
        %s475 = scalar_lea.vmem [#allocation4], %s474
        %p476 = pneg %p53
        %p477 = pneg %p50
        %p478 = pneg %p74
        %p479 = pneg %p71
        %p480 = pneg %p95
        %p481 = pneg %p92
        %p482 = pneg %p116
        %p483 = pneg %p113
        %p484 = pneg %p137
        %p485 = pneg %p134
        %p486 = pneg %p158
        %p487 = pneg %p155
        %p488 = pneg %p179
        %p489 = pneg %p176
        %p490 = pneg %p200
        %p491 = pneg %p197
        %p492 = pneg %p221
        %p493 = pneg %p218
        %p494 = pneg %p242
        %p495 = pneg %p239
        %p496 = pneg %p263
        %p497 = pneg %p260
        %p498 = pneg %p284
        %p499 = pneg %p281
        %p500 = pneg %p305
        %p501 = pneg %p302
        %p502 = pneg %p326
        %p503 = pneg %p323
        %p504 = pneg %p347
        %p505 = pneg %p344
        %p506 = pneg %p373
        %p507 = pneg %p370
        %s508 = sand.u32 %s360, 1
        %s509 = scalar_lea.sflag [#allocation6], %s508
        %s510 = sand.u32 %s360, 1
        %s511 = scalar_lea.vmem [#allocation7], %s510
        %v512 = vld [vmem:[%s466] sm:$0xff]
        %v513 = vld [vmem:[%s466 + $0x8] sm:$0xff]
        %v514 = vld [vmem:[%s466 + $0x10] sm:$0xff]
        %v515 = vld [vmem:[%s466 + $0x18] sm:$0xf]
        %v516 = vld [vmem:[%s1] sm:$0xff]
        %v517 = vld [vmem:[%s1 + $0x8] sm:$0xff]
        %v518 = vld [vmem:[%s1 + $0x10] sm:$0xff]
        %v519 = vld [vmem:[%s1 + $0x18] sm:$0xff]
        %v520 = vld [vmem:[%s1 + $0x20] sm:$0xff]
        %v521 = vld [vmem:[%s1 + $0x28] sm:$0xff]
        %v522 = vld [vmem:[%s1 + $0x30] sm:$0xff]
        %v523 = vld [vmem:[%s1 + $0x38] sm:$0xff]
        %v524 = vld [vmem:[%s466 + $0x1] sm:$0xff]
        %v525 = vld [vmem:[%s466 + $0x9] sm:$0xff]
        %v526 = vld [vmem:[%s466 + $0x11] sm:$0xff]
        %v527 = vld [vmem:[%s466 + $0x19] sm:$0xf]
        %s528 = scalar_lea.vmem %s1, 64
        %v529 = vld [vmem:[%s528] sm:$0xff]
        %v530 = vld [vmem:[%s528 + $0x8] sm:$0xff]
        %v531 = vld [vmem:[%s528 + $0x10] sm:$0xff]
        %v532 = vld [vmem:[%s528 + $0x18] sm:$0xff]
        %v533 = vld [vmem:[%s528 + $0x20] sm:$0xff]
        %v534 = vld [vmem:[%s528 + $0x28] sm:$0xff]
        %v535 = vld [vmem:[%s528 + $0x30] sm:$0xff]
        %v536 = vld [vmem:[%s528 + $0x38] sm:$0xff]
        %vm537 = vcmask 261120
        %v539 = vsel %vm537, %v524, 0
        %v542 = vsel %vm537, %v525, 0
        %v545 = vsel %vm537, %v526, 0
        %v548 = vsel %vm537, %v527, 0
        %550 = vmatprep.subr.mxu0 %v530
        %551 = vmatpush1.msra.mxu0 %v529
        %552 = vmatprep.subr.mxu0 %v532
        %553 = vmatpush1.msra.mxu0 %v531
        %554 = vmatprep.subr.mxu0 %v534
        %555 = vmatpush1.msra.mxu0 %v533
        %556 = vmatprep.subr.mxu0 %v536
        %557 = vmatpush1.msra.mxu0 %v535
        %558 = vmatprep.subr.mxu0 0.0
        %559 = vmatpush1.msra.mxu0 0.0
        %560 = vmatprep.subr.mxu0 0.0
        %561 = vmatpush1.msra.mxu0 0.0
        %562 = vmatprep.subr.mxu0 0.0
        %563 = vmatpush1.msra.mxu0 0.0
        %564 = vmatprep.subr.mxu0 0.0
        %565 = vmatpush1.msra.mxu0 0.0
        %566 = vmatprep.subr.mxu0 0.0
        %567 = vmatpush1.msra.mxu0 0.0
        %568 = vmatprep.subr.mxu0 0.0
        %569 = vmatpush1.msra.mxu0 0.0
        %570 = vmatprep.subr.mxu0 0.0
        %571 = vmatpush1.msra.mxu0 0.0
        %572 = vmatprep.subr.mxu0 0.0
        %573 = vmatpush1.msra.mxu0 0.0
        %574 = vmatprep.subr.mxu0 0.0
        %575 = vmatpush1.msra.mxu0 0.0
        %576 = vmatprep.subr.mxu0 0.0
        %577 = vmatpush1.msra.mxu0 0.0
        %578 = vmatprep.subr.mxu0 0.0
        %579 = vmatpush1.msra.mxu0 0.0
        %580 = vmatprep.subr.mxu0 0.0
        %581 = vmatpush1.msra.mxu0 0.0
        %582 = vmatprep.subr.mxu0 0.0
        %583 = vmatpush1.msra.mxu0 0.0
        %584 = vmatprep.subr.mxu0 0.0
        %585 = vmatpush1.msra.mxu0 0.0
        %586 = vmatprep.subr.mxu0 0.0
        %587 = vmatpush1.msra.mxu0 0.0
        %588 = vmatprep.subr.mxu0 0.0
        %589 = vmatpush1.msra.mxu0 0.0
        %590 = vmatprep.subr.mxu0 0.0
        %591 = vmatpush1.msra.mxu0 0.0
        %592 = vmatprep.subr.mxu0 0.0
        %593 = vmatpush1.msra.mxu0 0.0
        %594 = vmatprep.subr.mxu0 0.0
        %595 = vmatpush1.msra.mxu0 0.0
        %596 = vmatprep.subr.mxu0 0.0
        %597 = vmatpush1.msra.mxu0 0.0
        %598 = vmatprep.subr.mxu0 0.0
        %599 = vmatpush1.msra.mxu0 0.0
        %600 = vmatprep.subr.mxu0 0.0
        %601 = vmatpush1.msra.mxu0 0.0
        %602 = vmatprep.subr.mxu0 0.0
        %603 = vmatpush1.msra.mxu0 0.0
        %604 = vmatprep.subr.mxu0 0.0
        %605 = vmatpush1.msra.mxu0 0.0
        %606 = vmatprep.subr.mxu0 0.0
        %607 = vmatpush1.msra.mxu0 0.0
        %608 = vmatprep.subr.mxu0 0.0
        %609 = vmatpush1.msra.mxu0 0.0
        %610 = vmatprep.subr.mxu0 0.0
        %611 = vmatpush1.msra.mxu0 0.0
        %612 = vmatprep.subr.mxu0 0.0
        %613 = vmatpush1.msra.mxu0 0.0
        %614 = vmatprep.mubr.f32.mxu0 0.0
        %615 = vmatmul.mubr.f32.gmra.mrb[0].mxu0 %v539
        %v616 = vpop.f32.mrb[0].mxu0
        %v617 = vadd.f32 0.0, %v616
        %v618 = vpop.f32.mrb[0].mxu0
        %v619 = vadd.f32 0.0, %v618
        %620 = vmatprep.mubr.f32.mxu0 0.0
        %621 = vmatmul.mubr.f32.gmra.mrb[0].mxu0 %v542
        %v622 = vpop.f32.mrb[0].mxu0
        %v623 = vadd.f32 0.0, %v622
        %v624 = vpop.f32.mrb[0].mxu0
        %v625 = vadd.f32 0.0, %v624
        %626 = vmatprep.mubr.f32.mxu0 0.0
        %627 = vmatmul.mubr.f32.gmra.mrb[0].mxu0 %v545
        %v628 = vpop.f32.mrb[0].mxu0
        %v629 = vadd.f32 0.0, %v628
        %v630 = vpop.f32.mrb[0].mxu0
        %v631 = vadd.f32 0.0, %v630
        %632 = vmatprep.mubr.f32.mxu0 0.0
        %633 = vmatmul.mubr.f32.gmra.mrb[0].mxu0 %v548
        %v634 = vpop.f32.mrb[0].mxu0
        %v635 = vadd.f32 0.0, %v634
        %v636 = vpop.f32.mrb[0].mxu0
        %v637 = vadd.f32 0.0, %v636
        %638 = vdwg.mxu0
        %v640 = vsel %vm537, %v512, 0
        %v643 = vsel %vm537, %v513, 0
        %v646 = vsel %vm537, %v514, 0
        %v649 = vsel %vm537, %v515, 0
        %651 = vmatprep.subr.mxu0 %v517
        %652 = vmatpush1.msra.mxu0 %v516
        %653 = vmatprep.subr.mxu0 %v519
        %654 = vmatpush1.msra.mxu0 %v518
        %655 = vmatprep.subr.mxu0 %v521
        %656 = vmatpush1.msra.mxu0 %v520
        %657 = vmatprep.subr.mxu0 %v523
        %658 = vmatpush1.msra.mxu0 %v522
        %659 = vmatprep.subr.mxu0 0.0
        %660 = vmatpush1.msra.mxu0 0.0
        %661 = vmatprep.subr.mxu0 0.0
        %662 = vmatpush1.msra.mxu0 0.0
        %663 = vmatprep.subr.mxu0 0.0
        %664 = vmatpush1.msra.mxu0 0.0
        %665 = vmatprep.subr.mxu0 0.0
        %666 = vmatpush1.msra.mxu0 0.0
        %667 = vmatprep.subr.mxu0 0.0
        %668 = vmatpush1.msra.mxu0 0.0
        %669 = vmatprep.subr.mxu0 0.0
        %670 = vmatpush1.msra.mxu0 0.0
        %671 = vmatprep.subr.mxu0 0.0
        %672 = vmatpush1.msra.mxu0 0.0
        %673 = vmatprep.subr.mxu0 0.0
        %674 = vmatpush1.msra.mxu0 0.0
        %675 = vmatprep.subr.mxu0 0.0
        %676 = vmatpush1.msra.mxu0 0.0
        %677 = vmatprep.subr.mxu0 0.0
        %678 = vmatpush1.msra.mxu0 0.0
        %679 = vmatprep.subr.mxu0 0.0
        %680 = vmatpush1.msra.mxu0 0.0
        %681 = vmatprep.subr.mxu0 0.0
        %682 = vmatpush1.msra.mxu0 0.0
        %683 = vmatprep.subr.mxu0 0.0
        %684 = vmatpush1.msra.mxu0 0.0
        %685 = vmatprep.subr.mxu0 0.0
        %686 = vmatpush1.msra.mxu0 0.0
        %687 = vmatprep.subr.mxu0 0.0
        %688 = vmatpush1.msra.mxu0 0.0
        %689 = vmatprep.subr.mxu0 0.0
        %690 = vmatpush1.msra.mxu0 0.0
        %691 = vmatprep.subr.mxu0 0.0
        %692 = vmatpush1.msra.mxu0 0.0
        %693 = vmatprep.subr.mxu0 0.0
        %694 = vmatpush1.msra.mxu0 0.0
        %695 = vmatprep.subr.mxu0 0.0
        %696 = vmatpush1.msra.mxu0 0.0
        %697 = vmatprep.subr.mxu0 0.0
        %698 = vmatpush1.msra.mxu0 0.0
        %699 = vmatprep.subr.mxu0 0.0
        %700 = vmatpush1.msra.mxu0 0.0
        %701 = vmatprep.subr.mxu0 0.0
        %702 = vmatpush1.msra.mxu0 0.0
        %703 = vmatprep.subr.mxu0 0.0
        %704 = vmatpush1.msra.mxu0 0.0
        %705 = vmatprep.subr.mxu0 0.0
        %706 = vmatpush1.msra.mxu0 0.0
        %707 = vmatprep.subr.mxu0 0.0
        %708 = vmatpush1.msra.mxu0 0.0
        %709 = vmatprep.subr.mxu0 0.0
        %710 = vmatpush1.msra.mxu0 0.0
        %711 = vmatprep.subr.mxu0 0.0
        %712 = vmatpush1.msra.mxu0 0.0
        %713 = vmatprep.subr.mxu0 0.0
        %714 = vmatpush1.msra.mxu0 0.0
        %715 = vmatprep.mubr.f32.mxu0 0.0
        %716 = vmatmul.mubr.f32.gmra.mrb[0].mxu0 %v640
        %v717 = vpop.f32.mrb[0].mxu0
        %v718 = vadd.f32 %v617, %v717
        %v719 = vpop.f32.mrb[0].mxu0
        %v720 = vadd.f32 %v619, %v719
        %721 = vmatprep.mubr.f32.mxu0 0.0
        %722 = vmatmul.mubr.f32.gmra.mrb[0].mxu0 %v643
        %v723 = vpop.f32.mrb[0].mxu0
        %v724 = vadd.f32 %v623, %v723
        %v725 = vpop.f32.mrb[0].mxu0
        %v726 = vadd.f32 %v625, %v725
        %727 = vmatprep.mubr.f32.mxu0 0.0
        %728 = vmatmul.mubr.f32.gmra.mrb[0].mxu0 %v646
        %v729 = vpop.f32.mrb[0].mxu0
        %v730 = vadd.f32 %v629, %v729
        %v731 = vpop.f32.mrb[0].mxu0
        %v732 = vadd.f32 %v631, %v731
        %733 = vmatprep.mubr.f32.mxu0 0.0
        %734 = vmatmul.mubr.f32.gmra.mrb[0].mxu0 %v649
        %v735 = vpop.f32.mrb[0].mxu0
        %v736 = vadd.f32 %v635, %v735
        %v737 = vpop.f32.mrb[0].mxu0
        %v738 = vadd.f32 %v637, %v737
        %739 = vdwg.mxu0
        %v740 = vld [vmem:[%s466 + $0x2] sm:$0xff]
        %v741 = vld [vmem:[%s466 + $0xa] sm:$0xff]
        %v742 = vld [vmem:[%s466 + $0x12] sm:$0xff]
        %v743 = vld [vmem:[%s466 + $0x1a] sm:$0xf]
        %s744 = scalar_lea.vmem %s1, 128
        %v745 = vld [vmem:[%s744] sm:$0xff]
        %v746 = vld [vmem:[%s744 + $0x8] sm:$0xff]
        %v747 = vld [vmem:[%s744 + $0x10] sm:$0xff]
        %v748 = vld [vmem:[%s744 + $0x18] sm:$0xff]
        %v749 = vld [vmem:[%s744 + $0x20] sm:$0xff]
        %v750 = vld [vmem:[%s744 + $0x28] sm:$0xff]
        %v751 = vld [vmem:[%s744 + $0x30] sm:$0xff]
        %v752 = vld [vmem:[%s744 + $0x38] sm:$0xff]
        %v754 = vsel %vm537, %v740, 0
        %v757 = vsel %vm537, %v741, 0
        %v760 = vsel %vm537, %v742, 0
        %v763 = vsel %vm537, %v743, 0
        %765 = vmatprep.subr.mxu0 %v746
        %766 = vmatpush1.msra.mxu0 %v745
        %767 = vmatprep.subr.mxu0 %v748
        %768 = vmatpush1.msra.mxu0 %v747
        %769 = vmatprep.subr.mxu0 %v750
        %770 = vmatpush1.msra.mxu0 %v749
        %771 = vmatprep.subr.mxu0 %v752
        %772 = vmatpush1.msra.mxu0 %v751
        %773 = vmatprep.subr.mxu0 0.0
        %774 = vmatpush1.msra.mxu0 0.0
        %775 = vmatprep.subr.mxu0 0.0
        %776 = vmatpush1.msra.mxu0 0.0
        %777 = vmatprep.subr.mxu0 0.0
        %778 = vmatpush1.msra.mxu0 0.0
        %779 = vmatprep.subr.mxu0 0.0
        %780 = vmatpush1.msra.mxu0 0.0
        %781 = vmatprep.subr.mxu0 0.0
        %782 = vmatpush1.msra.mxu0 0.0
        %783 = vmatprep.subr.mxu0 0.0
        %784 = vmatpush1.msra.mxu0 0.0
        %785 = vmatprep.subr.mxu0 0.0
        %786 = vmatpush1.msra.mxu0 0.0
        %787 = vmatprep.subr.mxu0 0.0
        %788 = vmatpush1.msra.mxu0 0.0
        %789 = vmatprep.subr.mxu0 0.0
        %790 = vmatpush1.msra.mxu0 0.0
        %791 = vmatprep.subr.mxu0 0.0
        %792 = vmatpush1.msra.mxu0 0.0
        %793 = vmatprep.subr.mxu0 0.0
        %794 = vmatpush1.msra.mxu0 0.0
        %795 = vmatprep.subr.mxu0 0.0
        %796 = vmatpush1.msra.mxu0 0.0
        %797 = vmatprep.subr.mxu0 0.0
        %798 = vmatpush1.msra.mxu0 0.0
        %799 = vmatprep.subr.mxu0 0.0
        %800 = vmatpush1.msra.mxu0 0.0
        %801 = vmatprep.subr.mxu0 0.0
        %802 = vmatpush1.msra.mxu0 0.0
        %803 = vmatprep.subr.mxu0 0.0
        %804 = vmatpush1.msra.mxu0 0.0
        %805 = vmatprep.subr.mxu0 0.0
        %806 = vmatpush1.msra.mxu0 0.0
        %807 = vmatprep.subr.mxu0 0.0
        %808 = vmatpush1.msra.mxu0 0.0
        %809 = vmatprep.subr.mxu0 0.0
        %810 = vmatpush1.msra.mxu0 0.0
        %811 = vmatprep.subr.mxu0 0.0
        %812 = vmatpush1.msra.mxu0 0.0
        %813 = vmatprep.subr.mxu0 0.0
        %814 = vmatpush1.msra.mxu0 0.0
        %815 = vmatprep.subr.mxu0 0.0
        %816 = vmatpush1.msra.mxu0 0.0
        %817 = vmatprep.subr.mxu0 0.0
        %818 = vmatpush1.msra.mxu0 0.0
        %819 = vmatprep.subr.mxu0 0.0
        %820 = vmatpush1.msra.mxu0 0.0
        %821 = vmatprep.subr.mxu0 0.0
        %822 = vmatpush1.msra.mxu0 0.0
        %823 = vmatprep.subr.mxu0 0.0
        %824 = vmatpush1.msra.mxu0 0.0
        %825 = vmatprep.subr.mxu0 0.0
        %826 = vmatpush1.msra.mxu0 0.0
        %827 = vmatprep.subr.mxu0 0.0
        %828 = vmatpush1.msra.mxu0 0.0
        %829 = vmatprep.mubr.f32.mxu0 0.0
        %830 = vmatmul.mubr.f32.gmra.mrb[0].mxu0 %v754
        %v831 = vpop.f32.mrb[0].mxu0
        %v832 = vadd.f32 0.0, %v831
        %v833 = vpop.f32.mrb[0].mxu0
        %v834 = vadd.f32 0.0, %v833
        %835 = vmatprep.mubr.f32.mxu0 0.0
        %836 = vmatmul.mubr.f32.gmra.mrb[0].mxu0 %v757
        %v837 = vpop.f32.mrb[0].mxu0
        %v838 = vadd.f32 0.0, %v837
        %v839 = vpop.f32.mrb[0].mxu0
        %v840 = vadd.f32 0.0, %v839
        %841 = vmatprep.mubr.f32.mxu0 0.0
        %842 = vmatmul.mubr.f32.gmra.mrb[0].mxu0 %v760
        %v843 = vpop.f32.mrb[0].mxu0
        %v844 = vadd.f32 0.0, %v843
        %v845 = vpop.f32.mrb[0].mxu0
        %v846 = vadd.f32 0.0, %v845
        %847 = vmatprep.mubr.f32.mxu0 0.0
        %848 = vmatmul.mubr.f32.gmra.mrb[0].mxu0 %v763
        %v849 = vpop.f32.mrb[0].mxu0
        %v850 = vadd.f32 0.0, %v849
        %v851 = vpop.f32.mrb[0].mxu0
        %v852 = vadd.f32 0.0, %v851
        %853 = vdwg.mxu0
        %v854 = vadd.f32 %v718, %v832
        %v855 = vadd.f32 %v720, %v834
        %v856 = vadd.f32 %v724, %v838
        %v857 = vadd.f32 %v726, %v840
        %v858 = vadd.f32 %v730, %v844
        %v859 = vadd.f32 %v732, %v846
        %v860 = vadd.f32 %v736, %v850
        %v861 = vadd.f32 %v738, %v852
        %v862 = vld [vmem:[%s466 + $0x3] sm:$0xff]
        %v863 = vld [vmem:[%s466 + $0xb] sm:$0xff]
        %v864 = vld [vmem:[%s466 + $0x13] sm:$0xff]
        %v865 = vld [vmem:[%s466 + $0x1b] sm:$0xf]
        %s866 = scalar_lea.vmem %s1, 192
        %v867 = vld [vmem:[%s866] sm:$0xff]
        %v868 = vld [vmem:[%s866 + $0x8] sm:$0xff]
        %v869 = vld [vmem:[%s866 + $0x10] sm:$0xff]
        %v870 = vld [vmem:[%s866 + $0x18] sm:$0xff]
        %v871 = vld [vmem:[%s866 + $0x20] sm:$0xff]
        %v872 = vld [vmem:[%s866 + $0x28] sm:$0xff]
        %v873 = vld [vmem:[%s866 + $0x30] sm:$0xff]
        %v874 = vld [vmem:[%s866 + $0x38] sm:$0xff]
        %v876 = vsel %vm537, %v862, 0
        %v879 = vsel %vm537, %v863, 0
        %v882 = vsel %vm537, %v864, 0
        %v885 = vsel %vm537, %v865, 0
        %887 = vmatprep.subr.mxu0 %v868
        %888 = vmatpush1.msra.mxu0 %v867
        %889 = vmatprep.subr.mxu0 %v870
        %890 = vmatpush1.msra.mxu0 %v869
        %891 = vmatprep.subr.mxu0 %v872
        %892 = vmatpush1.msra.mxu0 %v871
        %893 = vmatprep.subr.mxu0 %v874
        %894 = vmatpush1.msra.mxu0 %v873
        %895 = vmatprep.subr.mxu0 0.0
        %896 = vmatpush1.msra.mxu0 0.0
        %897 = vmatprep.subr.mxu0 0.0
        %898 = vmatpush1.msra.mxu0 0.0
        %899 = vmatprep.subr.mxu0 0.0
        %900 = vmatpush1.msra.mxu0 0.0
        %901 = vmatprep.subr.mxu0 0.0
        %902 = vmatpush1.msra.mxu0 0.0
        %903 = vmatprep.subr.mxu0 0.0
        %904 = vmatpush1.msra.mxu0 0.0
        %905 = vmatprep.subr.mxu0 0.0
        %906 = vmatpush1.msra.mxu0 0.0
        %907 = vmatprep.subr.mxu0 0.0
        %908 = vmatpush1.msra.mxu0 0.0
        %909 = vmatprep.subr.mxu0 0.0
        %910 = vmatpush1.msra.mxu0 0.0
        %911 = vmatprep.subr.mxu0 0.0
        %912 = vmatpush1.msra.mxu0 0.0
        %913 = vmatprep.subr.mxu0 0.0
        %914 = vmatpush1.msra.mxu0 0.0
        %915 = vmatprep.subr.mxu0 0.0
        %916 = vmatpush1.msra.mxu0 0.0
        %917 = vmatprep.subr.mxu0 0.0
        %918 = vmatpush1.msra.mxu0 0.0
        %919 = vmatprep.subr.mxu0 0.0
        %920 = vmatpush1.msra.mxu0 0.0
        %921 = vmatprep.subr.mxu0 0.0
        %922 = vmatpush1.msra.mxu0 0.0
        %923 = vmatprep.subr.mxu0 0.0
        %924 = vmatpush1.msra.mxu0 0.0
        %925 = vmatprep.subr.mxu0 0.0
        %926 = vmatpush1.msra.mxu0 0.0
        %927 = vmatprep.subr.mxu0 0.0
        %928 = vmatpush1.msra.mxu0 0.0
        %929 = vmatprep.subr.mxu0 0.0
        %930 = vmatpush1.msra.mxu0 0.0
        %931 = vmatprep.subr.mxu0 0.0
        %932 = vmatpush1.msra.mxu0 0.0
        %933 = vmatprep.subr.mxu0 0.0
        %934 = vmatpush1.msra.mxu0 0.0
        %935 = vmatprep.subr.mxu0 0.0
        %936 = vmatpush1.msra.mxu0 0.0
        %937 = vmatprep.subr.mxu0 0.0
        %938 = vmatpush1.msra.mxu0 0.0
        %939 = vmatprep.subr.mxu0 0.0
        %940 = vmatpush1.msra.mxu0 0.0
        %941 = vmatprep.subr.mxu0 0.0
        %942 = vmatpush1.msra.mxu0 0.0
        %943 = vmatprep.subr.mxu0 0.0
        %944 = vmatpush1.msra.mxu0 0.0
        %945 = vmatprep.subr.mxu0 0.0
        %946 = vmatpush1.msra.mxu0 0.0
        %947 = vmatprep.subr.mxu0 0.0
        %948 = vmatpush1.msra.mxu0 0.0
        %949 = vmatprep.subr.mxu0 0.0
        %950 = vmatpush1.msra.mxu0 0.0
        %951 = vmatprep.mubr.f32.mxu0 0.0
        %952 = vmatmul.mubr.f32.gmra.mrb[0].mxu0 %v876
        %v953 = vpop.f32.mrb[0].mxu0
        %v954 = vadd.f32 0.0, %v953
        %v955 = vpop.f32.mrb[0].mxu0
        %v956 = vadd.f32 0.0, %v955
        %957 = vmatprep.mubr.f32.mxu0 0.0
        %958 = vmatmul.mubr.f32.gmra.mrb[0].mxu0 %v879
        %v959 = vpop.f32.mrb[0].mxu0
        %v960 = vadd.f32 0.0, %v959
        %v961 = vpop.f32.mrb[0].mxu0
        %v962 = vadd.f32 0.0, %v961
        %963 = vmatprep.mubr.f32.mxu0 0.0
        %964 = vmatmul.mubr.f32.gmra.mrb[0].mxu0 %v882
        %v965 = vpop.f32.mrb[0].mxu0
        %v966 = vadd.f32 0.0, %v965
        %v967 = vpop.f32.mrb[0].mxu0
        %v968 = vadd.f32 0.0, %v967
        %969 = vmatprep.mubr.f32.mxu0 0.0
        %970 = vmatmul.mubr.f32.gmra.mrb[0].mxu0 %v885
        %v971 = vpop.f32.mrb[0].mxu0
        %v972 = vadd.f32 0.0, %v971
        %v973 = vpop.f32.mrb[0].mxu0
        %v974 = vadd.f32 0.0, %v973
        %975 = vdwg.mxu0
        %v976 = vadd.f32 %v854, %v954
        %v977 = vadd.f32 %v855, %v956
        %v978 = vadd.f32 %v856, %v960
        %v979 = vadd.f32 %v857, %v962
        %v980 = vadd.f32 %v858, %v966
        %v981 = vadd.f32 %v859, %v968
        %v982 = vadd.f32 %v860, %v972
        %v983 = vadd.f32 %v861, %v974
        %v984 = vld [vmem:[%s466 + $0x4] sm:$0xff]
        %v985 = vld [vmem:[%s466 + $0xc] sm:$0xff]
        %v986 = vld [vmem:[%s466 + $0x14] sm:$0xff]
        %v987 = vld [vmem:[%s466 + $0x1c] sm:$0xf]
        %s988 = scalar_lea.vmem %s1, 256
        %v989 = vld [vmem:[%s988] sm:$0xff]
        %v990 = vld [vmem:[%s988 + $0x8] sm:$0xff]
        %v991 = vld [vmem:[%s988 + $0x10] sm:$0xff]
        %v992 = vld [vmem:[%s988 + $0x18] sm:$0xff]
        %v993 = vld [vmem:[%s988 + $0x20] sm:$0xff]
        %v994 = vld [vmem:[%s988 + $0x28] sm:$0xff]
        %v995 = vld [vmem:[%s988 + $0x30] sm:$0xff]
        %v996 = vld [vmem:[%s988 + $0x38] sm:$0xff]
        %v998 = vsel %vm537, %v984, 0
        %v1001 = vsel %vm537, %v985, 0
        %v1004 = vsel %vm537, %v986, 0
        %v1007 = vsel %vm537, %v987, 0
        %1009 = vmatprep.subr.mxu0 %v990
        %1010 = vmatpush1.msra.mxu0 %v989
        %1011 = vmatprep.subr.mxu0 %v992
        %1012 = vmatpush1.msra.mxu0 %v991
        %1013 = vmatprep.subr.mxu0 %v994
        %1014 = vmatpush1.msra.mxu0 %v993
        %1015 = vmatprep.subr.mxu0 %v996
        %1016 = vmatpush1.msra.mxu0 %v995
        %1017 = vmatprep.subr.mxu0 0.0
        %1018 = vmatpush1.msra.mxu0 0.0
        %1019 = vmatprep.subr.mxu0 0.0
        %1020 = vmatpush1.msra.mxu0 0.0
        %1021 = vmatprep.subr.mxu0 0.0
        %1022 = vmatpush1.msra.mxu0 0.0
        %1023 = vmatprep.subr.mxu0 0.0
        %1024 = vmatpush1.msra.mxu0 0.0
        %1025 = vmatprep.subr.mxu0 0.0
        %1026 = vmatpush1.msra.mxu0 0.0
        %1027 = vmatprep.subr.mxu0 0.0
        %1028 = vmatpush1.msra.mxu0 0.0
        %1029 = vmatprep.subr.mxu0 0.0
        %1030 = vmatpush1.msra.mxu0 0.0
        %1031 = vmatprep.subr.mxu0 0.0
        %1032 = vmatpush1.msra.mxu0 0.0
        %1033 = vmatprep.subr.mxu0 0.0
        %1034 = vmatpush1.msra.mxu0 0.0
        %1035 = vmatprep.subr.mxu0 0.0
        %1036 = vmatpush1.msra.mxu0 0.0
        %1037 = vmatprep.subr.mxu0 0.0
        %1038 = vmatpush1.msra.mxu0 0.0
        %1039 = vmatprep.subr.mxu0 0.0
        %1040 = vmatpush1.msra.mxu0 0.0
        %1041 = vmatprep.subr.mxu0 0.0
        %1042 = vmatpush1.msra.mxu0 0.0
        %1043 = vmatprep.subr.mxu0 0.0
        %1044 = vmatpush1.msra.mxu0 0.0
        %1045 = vmatprep.subr.mxu0 0.0
        %1046 = vmatpush1.msra.mxu0 0.0
        %1047 = vmatprep.subr.mxu0 0.0
        %1048 = vmatpush1.msra.mxu0 0.0
        %1049 = vmatprep.subr.mxu0 0.0
        %1050 = vmatpush1.msra.mxu0 0.0
        %1051 = vmatprep.subr.mxu0 0.0
        %1052 = vmatpush1.msra.mxu0 0.0
        %1053 = vmatprep.subr.mxu0 0.0
        %1054 = vmatpush1.msra.mxu0 0.0
        %1055 = vmatprep.subr.mxu0 0.0
        %1056 = vmatpush1.msra.mxu0 0.0
        %1057 = vmatprep.subr.mxu0 0.0
        %1058 = vmatpush1.msra.mxu0 0.0
        %1059 = vmatprep.subr.mxu0 0.0
        %1060 = vmatpush1.msra.mxu0 0.0
        %1061 = vmatprep.subr.mxu0 0.0
        %1062 = vmatpush1.msra.mxu0 0.0
        %1063 = vmatprep.subr.mxu0 0.0
        %1064 = vmatpush1.msra.mxu0 0.0
        %1065 = vmatprep.subr.mxu0 0.0
        %1066 = vmatpush1.msra.mxu0 0.0
        %1067 = vmatprep.subr.mxu0 0.0
        %1068 = vmatpush1.msra.mxu0 0.0
        %1069 = vmatprep.subr.mxu0 0.0
        %1070 = vmatpush1.msra.mxu0 0.0
        %1071 = vmatprep.subr.mxu0 0.0
        %1072 = vmatpush1.msra.mxu0 0.0
        %1073 = vmatprep.mubr.f32.mxu0 0.0
        %1074 = vmatmul.mubr.f32.gmra.mrb[0].mxu0 %v998
        %v1075 = vpop.f32.mrb[0].mxu0
        %v1076 = vadd.f32 0.0, %v1075
        %v1077 = vpop.f32.mrb[0].mxu0
        %v1078 = vadd.f32 0.0, %v1077
        %1079 = vmatprep.mubr.f32.mxu0 0.0
        %1080 = vmatmul.mubr.f32.gmra.mrb[0].mxu0 %v1001
        %v1081 = vpop.f32.mrb[0].mxu0
        %v1082 = vadd.f32 0.0, %v1081
        %v1083 = vpop.f32.mrb[0].mxu0
        %v1084 = vadd.f32 0.0, %v1083
        %1085 = vmatprep.mubr.f32.mxu0 0.0
        %1086 = vmatmul.mubr.f32.gmra.mrb[0].mxu0 %v1004
        %v1087 = vpop.f32.mrb[0].mxu0
        %v1088 = vadd.f32 0.0, %v1087
        %v1089 = vpop.f32.mrb[0].mxu0
        %v1090 = vadd.f32 0.0, %v1089
        %1091 = vmatprep.mubr.f32.mxu0 0.0
        %1092 = vmatmul.mubr.f32.gmra.mrb[0].mxu0 %v1007
        %v1093 = vpop.f32.mrb[0].mxu0
        %v1094 = vadd.f32 0.0, %v1093
        %v1095 = vpop.f32.mrb[0].mxu0
        %v1096 = vadd.f32 0.0, %v1095
        %1097 = vdwg.mxu0
        %v1098 = vadd.f32 %v976, %v1076
        %v1099 = vadd.f32 %v977, %v1078
        %v1100 = vadd.f32 %v978, %v1082
        %v1101 = vadd.f32 %v979, %v1084
        %v1102 = vadd.f32 %v980, %v1088
        %v1103 = vadd.f32 %v981, %v1090
        %v1104 = vadd.f32 %v982, %v1094
        %v1105 = vadd.f32 %v983, %v1096
        %s1106 = scalar_lea.vmem %s466, 32 [#allocation4]
        %v1107 = vld [vmem:[%s1106] sm:$0xff]
        %v1108 = vld [vmem:[%s1106 + $0x8] sm:$0xff]
        %v1109 = vld [vmem:[%s1106 + $0x10] sm:$0xff]
        %v1110 = vld [vmem:[%s1106 + $0x18] sm:$0xf]
        %s1111 = scalar_lea.vmem %s1, 320
        %v1112 = vld [vmem:[%s1111] sm:$0xff]
        %v1113 = vld [vmem:[%s1111 + $0x8] sm:$0xff]
        %v1114 = vld [vmem:[%s1111 + $0x10] sm:$0xff]
        %v1115 = vld [vmem:[%s1111 + $0x18] sm:$0xff]
        %v1116 = vld [vmem:[%s1111 + $0x20] sm:$0xff]
        %v1117 = vld [vmem:[%s1111 + $0x28] sm:$0xff]
        %v1118 = vld [vmem:[%s1111 + $0x30] sm:$0xff]
        %v1119 = vld [vmem:[%s1111 + $0x38] sm:$0xff]
        %v1121 = vsel %vm537, %v1107, 0
        %v1124 = vsel %vm537, %v1108, 0
        %v1127 = vsel %vm537, %v1109, 0
        %v1130 = vsel %vm537, %v1110, 0
        %1132 = vmatprep.subr.mxu0 %v1113
        %1133 = vmatpush1.msra.mxu0 %v1112
        %1134 = vmatprep.subr.mxu0 %v1115
        %1135 = vmatpush1.msra.mxu0 %v1114
        %1136 = vmatprep.subr.mxu0 %v1117
        %1137 = vmatpush1.msra.mxu0 %v1116
        %1138 = vmatprep.subr.mxu0 %v1119
        %1139 = vmatpush1.msra.mxu0 %v1118
        %1140 = vmatprep.subr.mxu0 0.0
        %1141 = vmatpush1.msra.mxu0 0.0
        %1142 = vmatprep.subr.mxu0 0.0
        %1143 = vmatpush1.msra.mxu0 0.0
        %1144 = vmatprep.subr.mxu0 0.0
        %1145 = vmatpush1.msra.mxu0 0.0
        %1146 = vmatprep.subr.mxu0 0.0
        %1147 = vmatpush1.msra.mxu0 0.0
        %1148 = vmatprep.subr.mxu0 0.0
        %1149 = vmatpush1.msra.mxu0 0.0
        %1150 = vmatprep.subr.mxu0 0.0
        %1151 = vmatpush1.msra.mxu0 0.0
        %1152 = vmatprep.subr.mxu0 0.0
        %1153 = vmatpush1.msra.mxu0 0.0
        %1154 = vmatprep.subr.mxu0 0.0
        %1155 = vmatpush1.msra.mxu0 0.0
        %1156 = vmatprep.subr.mxu0 0.0
        %1157 = vmatpush1.msra.mxu0 0.0
        %1158 = vmatprep.subr.mxu0 0.0
        %1159 = vmatpush1.msra.mxu0 0.0
        %1160 = vmatprep.subr.mxu0 0.0
        %1161 = vmatpush1.msra.mxu0 0.0
        %1162 = vmatprep.subr.mxu0 0.0
        %1163 = vmatpush1.msra.mxu0 0.0
        %1164 = vmatprep.subr.mxu0 0.0
        %1165 = vmatpush1.msra.mxu0 0.0
        %1166 = vmatprep.subr.mxu0 0.0
        %1167 = vmatpush1.msra.mxu0 0.0
        %1168 = vmatprep.subr.mxu0 0.0
        %1169 = vmatpush1.msra.mxu0 0.0
        %1170 = vmatprep.subr.mxu0 0.0
        %1171 = vmatpush1.msra.mxu0 0.0
        %1172 = vmatprep.subr.mxu0 0.0
        %1173 = vmatpush1.msra.mxu0 0.0
        %1174 = vmatprep.subr.mxu0 0.0
        %1175 = vmatpush1.msra.mxu0 0.0
        %1176 = vmatprep.subr.mxu0 0.0
        %1177 = vmatpush1.msra.mxu0 0.0
        %1178 = vmatprep.subr.mxu0 0.0
        %1179 = vmatpush1.msra.mxu0 0.0
        %1180 = vmatprep.subr.mxu0 0.0
        %1181 = vmatpush1.msra.mxu0 0.0
        %1182 = vmatprep.subr.mxu0 0.0
        %1183 = vmatpush1.msra.mxu0 0.0
        %1184 = vmatprep.subr.mxu0 0.0
        %1185 = vmatpush1.msra.mxu0 0.0
        %1186 = vmatprep.subr.mxu0 0.0
        %1187 = vmatpush1.msra.mxu0 0.0
        %1188 = vmatprep.subr.mxu0 0.0
        %1189 = vmatpush1.msra.mxu0 0.0
        %1190 = vmatprep.subr.mxu0 0.0
        %1191 = vmatpush1.msra.mxu0 0.0
        %1192 = vmatprep.subr.mxu0 0.0
        %1193 = vmatpush1.msra.mxu0 0.0
        %1194 = vmatprep.subr.mxu0 0.0
        %1195 = vmatpush1.msra.mxu0 0.0
        %1196 = vmatprep.mubr.f32.mxu0 0.0
        %1197 = vmatmul.mubr.f32.gmra.mrb[0].mxu0 %v1121
        %v1198 = vpop.f32.mrb[0].mxu0
        %v1199 = vadd.f32 0.0, %v1198
        %v1200 = vpop.f32.mrb[0].mxu0
        %v1201 = vadd.f32 0.0, %v1200
        %1202 = vmatprep.mubr.f32.mxu0 0.0
        %1203 = vmatmul.mubr.f32.gmra.mrb[0].mxu0 %v1124
        %v1204 = vpop.f32.mrb[0].mxu0
        %v1205 = vadd.f32 0.0, %v1204
        %v1206 = vpop.f32.mrb[0].mxu0
        %v1207 = vadd.f32 0.0, %v1206
        %1208 = vmatprep.mubr.f32.mxu0 0.0
        %1209 = vmatmul.mubr.f32.gmra.mrb[0].mxu0 %v1127
        %v1210 = vpop.f32.mrb[0].mxu0
        %v1211 = vadd.f32 0.0, %v1210
        %v1212 = vpop.f32.mrb[0].mxu0
        %v1213 = vadd.f32 0.0, %v1212
        %1214 = vmatprep.mubr.f32.mxu0 0.0
        %1215 = vmatmul.mubr.f32.gmra.mrb[0].mxu0 %v1130
        %v1216 = vpop.f32.mrb[0].mxu0
        %v1217 = vadd.f32 0.0, %v1216
        %v1218 = vpop.f32.mrb[0].mxu0
        %v1219 = vadd.f32 0.0, %v1218
        %1220 = vdwg.mxu0
        %v1221 = vadd.f32 %v1098, %v1199
        %v1222 = vadd.f32 %v1099, %v1201
        %v1223 = vadd.f32 %v1100, %v1205
        %v1224 = vadd.f32 %v1101, %v1207
        %v1225 = vadd.f32 %v1102, %v1211
        %v1226 = vadd.f32 %v1103, %v1213
        %v1227 = vadd.f32 %v1104, %v1217
        %v1228 = vadd.f32 %v1105, %v1219
        %v1229 = vld [vmem:[%s1106 + $0x1] sm:$0xff]
        %v1230 = vld [vmem:[%s1106 + $0x9] sm:$0xff]
        %v1231 = vld [vmem:[%s1106 + $0x11] sm:$0xff]
        %v1232 = vld [vmem:[%s1106 + $0x19] sm:$0xf]
        %s1233 = scalar_lea.vmem %s1, 384
        %v1234 = vld [vmem:[%s1233] sm:$0xff]
        %v1235 = vld [vmem:[%s1233 + $0x8] sm:$0xff]
        %v1236 = vld [vmem:[%s1233 + $0x10] sm:$0xff]
        %v1237 = vld [vmem:[%s1233 + $0x18] sm:$0xff]
        %v1238 = vld [vmem:[%s1233 + $0x20] sm:$0xff]
        %v1239 = vld [vmem:[%s1233 + $0x28] sm:$0xff]
        %v1240 = vld [vmem:[%s1233 + $0x30] sm:$0xff]
        %v1241 = vld [vmem:[%s1233 + $0x38] sm:$0xff]
        %v1243 = vsel %vm537, %v1229, 0
        %v1246 = vsel %vm537, %v1230, 0
        %v1249 = vsel %vm537, %v1231, 0
        %v1252 = vsel %vm537, %v1232, 0
        %1254 = vmatprep.subr.mxu0 %v1235
        %1255 = vmatpush1.msra.mxu0 %v1234
        %1256 = vmatprep.subr.mxu0 %v1237
        %1257 = vmatpush1.msra.mxu0 %v1236
        %1258 = vmatprep.subr.mxu0 %v1239
        %1259 = vmatpush1.msra.mxu0 %v1238
        %1260 = vmatprep.subr.mxu0 %v1241
        %1261 = vmatpush1.msra.mxu0 %v1240
        %1262 = vmatprep.subr.mxu0 0.0
        %1263 = vmatpush1.msra.mxu0 0.0
        %1264 = vmatprep.subr.mxu0 0.0
        %1265 = vmatpush1.msra.mxu0 0.0
        %1266 = vmatprep.subr.mxu0 0.0
        %1267 = vmatpush1.msra.mxu0 0.0
        %1268 = vmatprep.subr.mxu0 0.0
        %1269 = vmatpush1.msra.mxu0 0.0
        %1270 = vmatprep.subr.mxu0 0.0
        %1271 = vmatpush1.msra.mxu0 0.0
        %1272 = vmatprep.subr.mxu0 0.0
        %1273 = vmatpush1.msra.mxu0 0.0
        %1274 = vmatprep.subr.mxu0 0.0
        %1275 = vmatpush1.msra.mxu0 0.0
        %1276 = vmatprep.subr.mxu0 0.0
        %1277 = vmatpush1.msra.mxu0 0.0
        %1278 = vmatprep.subr.mxu0 0.0
        %1279 = vmatpush1.msra.mxu0 0.0
        %1280 = vmatprep.subr.mxu0 0.0
        %1281 = vmatpush1.msra.mxu0 0.0
        %1282 = vmatprep.subr.mxu0 0.0
        %1283 = vmatpush1.msra.mxu0 0.0
        %1284 = vmatprep.subr.mxu0 0.0
        %1285 = vmatpush1.msra.mxu0 0.0
        %1286 = vmatprep.subr.mxu0 0.0
        %1287 = vmatpush1.msra.mxu0 0.0
        %1288 = vmatprep.subr.mxu0 0.0
        %1289 = vmatpush1.msra.mxu0 0.0
        %1290 = vmatprep.subr.mxu0 0.0
        %1291 = vmatpush1.msra.mxu0 0.0
        %1292 = vmatprep.subr.mxu0 0.0
        %1293 = vmatpush1.msra.mxu0 0.0
        %1294 = vmatprep.subr.mxu0 0.0
        %1295 = vmatpush1.msra.mxu0 0.0
        %1296 = vmatprep.subr.mxu0 0.0
        %1297 = vmatpush1.msra.mxu0 0.0
        %1298 = vmatprep.subr.mxu0 0.0
        %1299 = vmatpush1.msra.mxu0 0.0
        %1300 = vmatprep.subr.mxu0 0.0
        %1301 = vmatpush1.msra.mxu0 0.0
        %1302 = vmatprep.subr.mxu0 0.0
        %1303 = vmatpush1.msra.mxu0 0.0
        %1304 = vmatprep.subr.mxu0 0.0
        %1305 = vmatpush1.msra.mxu0 0.0
        %1306 = vmatprep.subr.mxu0 0.0
        %1307 = vmatpush1.msra.mxu0 0.0
        %1308 = vmatprep.subr.mxu0 0.0
        %1309 = vmatpush1.msra.mxu0 0.0
        %1310 = vmatprep.subr.mxu0 0.0
        %1311 = vmatpush1.msra.mxu0 0.0
        %1312 = vmatprep.subr.mxu0 0.0
        %1313 = vmatpush1.msra.mxu0 0.0
        %1314 = vmatprep.subr.mxu0 0.0
        %1315 = vmatpush1.msra.mxu0 0.0
        %1316 = vmatprep.subr.mxu0 0.0
        %1317 = vmatpush1.msra.mxu0 0.0
        %1318 = vmatprep.mubr.f32.mxu0 0.0
        %1319 = vmatmul.mubr.f32.gmra.mrb[0].mxu0 %v1243
        %v1320 = vpop.f32.mrb[0].mxu0
        %v1321 = vadd.f32 0.0, %v1320
        %v1322 = vpop.f32.mrb[0].mxu0
        %v1323 = vadd.f32 0.0, %v1322
        %1324 = vmatprep.mubr.f32.mxu0 0.0
        %1325 = vmatmul.mubr.f32.gmra.mrb[0].mxu0 %v1246
        %v1326 = vpop.f32.mrb[0].mxu0
        %v1327 = vadd.f32 0.0, %v1326
        %v1328 = vpop.f32.mrb[0].mxu0
        %v1329 = vadd.f32 0.0, %v1328
        %1330 = vmatprep.mubr.f32.mxu0 0.0
        %1331 = vmatmul.mubr.f32.gmra.mrb[0].mxu0 %v1249
        %v1332 = vpop.f32.mrb[0].mxu0
        %v1333 = vadd.f32 0.0, %v1332
        %v1334 = vpop.f32.mrb[0].mxu0
        %v1335 = vadd.f32 0.0, %v1334
        %1336 = vmatprep.mubr.f32.mxu0 0.0
        %1337 = vmatmul.mubr.f32.gmra.mrb[0].mxu0 %v1252
        %v1338 = vpop.f32.mrb[0].mxu0
        %v1339 = vadd.f32 0.0, %v1338
        %v1340 = vpop.f32.mrb[0].mxu0
        %v1341 = vadd.f32 0.0, %v1340
        %1342 = vdwg.mxu0
        %v1343 = vadd.f32 %v1221, %v1321
        %v1344 = vadd.f32 %v1222, %v1323
        %v1345 = vadd.f32 %v1223, %v1327
        %v1346 = vadd.f32 %v1224, %v1329
        %v1347 = vadd.f32 %v1225, %v1333
        %v1348 = vadd.f32 %v1226, %v1335
        %v1349 = vadd.f32 %v1227, %v1339
        %v1350 = vadd.f32 %v1228, %v1341
        %v1351 = vld [vmem:[%s1106 + $0x2] sm:$0xff]
        %v1352 = vld [vmem:[%s1106 + $0xa] sm:$0xff]
        %v1353 = vld [vmem:[%s1106 + $0x12] sm:$0xff]
        %v1354 = vld [vmem:[%s1106 + $0x1a] sm:$0xf]
        %s1355 = scalar_lea.vmem %s1, 448
        %v1356 = vld [vmem:[%s1355] sm:$0xff]
        %v1357 = vld [vmem:[%s1355 + $0x8] sm:$0xff]
        %v1358 = vld [vmem:[%s1355 + $0x10] sm:$0xff]
        %v1359 = vld [vmem:[%s1355 + $0x18] sm:$0xff]
        %v1360 = vld [vmem:[%s1355 + $0x20] sm:$0xff]
        %v1361 = vld [vmem:[%s1355 + $0x28] sm:$0xff]
        %v1362 = vld [vmem:[%s1355 + $0x30] sm:$0xff]
        %v1363 = vld [vmem:[%s1355 + $0x38] sm:$0xff]
        %v1365 = vsel %vm537, %v1351, 0
        %v1368 = vsel %vm537, %v1352, 0
        %v1371 = vsel %vm537, %v1353, 0
        %v1374 = vsel %vm537, %v1354, 0
        %1376 = vmatprep.subr.mxu0 %v1357
        %1377 = vmatpush1.msra.mxu0 %v1356
        %1378 = vmatprep.subr.mxu0 %v1359
        %1379 = vmatpush1.msra.mxu0 %v1358
        %1380 = vmatprep.subr.mxu0 %v1361
        %1381 = vmatpush1.msra.mxu0 %v1360
        %1382 = vmatprep.subr.mxu0 %v1363
        %1383 = vmatpush1.msra.mxu0 %v1362
        %1384 = vmatprep.subr.mxu0 0.0
        %1385 = vmatpush1.msra.mxu0 0.0
        %1386 = vmatprep.subr.mxu0 0.0
        %1387 = vmatpush1.msra.mxu0 0.0
        %1388 = vmatprep.subr.mxu0 0.0
        %1389 = vmatpush1.msra.mxu0 0.0
        %1390 = vmatprep.subr.mxu0 0.0
        %1391 = vmatpush1.msra.mxu0 0.0
        %1392 = vmatprep.subr.mxu0 0.0
        %1393 = vmatpush1.msra.mxu0 0.0
        %1394 = vmatprep.subr.mxu0 0.0
        %1395 = vmatpush1.msra.mxu0 0.0
        %1396 = vmatprep.subr.mxu0 0.0
        %1397 = vmatpush1.msra.mxu0 0.0
        %1398 = vmatprep.subr.mxu0 0.0
        %1399 = vmatpush1.msra.mxu0 0.0
        %1400 = vmatprep.subr.mxu0 0.0
        %1401 = vmatpush1.msra.mxu0 0.0
        %1402 = vmatprep.subr.mxu0 0.0
        %1403 = vmatpush1.msra.mxu0 0.0
        %1404 = vmatprep.subr.mxu0 0.0
        %1405 = vmatpush1.msra.mxu0 0.0
        %1406 = vmatprep.subr.mxu0 0.0
        %1407 = vmatpush1.msra.mxu0 0.0
        %1408 = vmatprep.subr.mxu0 0.0
        %1409 = vmatpush1.msra.mxu0 0.0
        %1410 = vmatprep.subr.mxu0 0.0
        %1411 = vmatpush1.msra.mxu0 0.0
        %1412 = vmatprep.subr.mxu0 0.0
        %1413 = vmatpush1.msra.mxu0 0.0
        %1414 = vmatprep.subr.mxu0 0.0
        %1415 = vmatpush1.msra.mxu0 0.0
        %1416 = vmatprep.subr.mxu0 0.0
        %1417 = vmatpush1.msra.mxu0 0.0
        %1418 = vmatprep.subr.mxu0 0.0
        %1419 = vmatpush1.msra.mxu0 0.0
        %1420 = vmatprep.subr.mxu0 0.0
        %1421 = vmatpush1.msra.mxu0 0.0
        %1422 = vmatprep.subr.mxu0 0.0
        %1423 = vmatpush1.msra.mxu0 0.0
        %1424 = vmatprep.subr.mxu0 0.0
        %1425 = vmatpush1.msra.mxu0 0.0
        %1426 = vmatprep.subr.mxu0 0.0
        %1427 = vmatpush1.msra.mxu0 0.0
        %1428 = vmatprep.subr.mxu0 0.0
        %1429 = vmatpush1.msra.mxu0 0.0
        %1430 = vmatprep.subr.mxu0 0.0
        %1431 = vmatpush1.msra.mxu0 0.0
        %1432 = vmatprep.subr.mxu0 0.0
        %1433 = vmatpush1.msra.mxu0 0.0
        %1434 = vmatprep.subr.mxu0 0.0
        %1435 = vmatpush1.msra.mxu0 0.0
        %1436 = vmatprep.subr.mxu0 0.0
        %1437 = vmatpush1.msra.mxu0 0.0
        %1438 = vmatprep.subr.mxu0 0.0
        %1439 = vmatpush1.msra.mxu0 0.0
        %1440 = vmatprep.mubr.f32.mxu0 0.0
        %1441 = vmatmul.mubr.f32.gmra.mrb[0].mxu0 %v1365
        %v1442 = vpop.f32.mrb[0].mxu0
        %v1443 = vadd.f32 0.0, %v1442
        %v1444 = vpop.f32.mrb[0].mxu0
        %v1445 = vadd.f32 0.0, %v1444
        %1446 = vmatprep.mubr.f32.mxu0 0.0
        %1447 = vmatmul.mubr.f32.gmra.mrb[0].mxu0 %v1368
        %v1448 = vpop.f32.mrb[0].mxu0
        %v1449 = vadd.f32 0.0, %v1448
        %v1450 = vpop.f32.mrb[0].mxu0
        %v1451 = vadd.f32 0.0, %v1450
        %1452 = vmatprep.mubr.f32.mxu0 0.0
        %1453 = vmatmul.mubr.f32.gmra.mrb[0].mxu0 %v1371
        %v1454 = vpop.f32.mrb[0].mxu0
        %v1455 = vadd.f32 0.0, %v1454
        %v1456 = vpop.f32.mrb[0].mxu0
        %v1457 = vadd.f32 0.0, %v1456
        %1458 = vmatprep.mubr.f32.mxu0 0.0
        %1459 = vmatmul.mubr.f32.gmra.mrb[0].mxu0 %v1374
        %v1460 = vpop.f32.mrb[0].mxu0
        %v1461 = vadd.f32 0.0, %v1460
        %v1462 = vpop.f32.mrb[0].mxu0
        %v1463 = vadd.f32 0.0, %v1462
        %1464 = vdwg.mxu0
        %v1465 = vadd.f32 %v1343, %v1443
        %v1466 = vadd.f32 %v1344, %v1445
        %v1467 = vadd.f32 %v1345, %v1449
        %v1468 = vadd.f32 %v1346, %v1451
        %v1469 = vadd.f32 %v1347, %v1455
        %v1470 = vadd.f32 %v1348, %v1457
        %v1471 = vadd.f32 %v1349, %v1461
        %v1472 = vadd.f32 %v1350, %v1463
        %v1473 = vld [vmem:[%s1106 + $0x3] sm:$0xff]
        %v1474 = vld [vmem:[%s1106 + $0xb] sm:$0xff]
        %v1475 = vld [vmem:[%s1106 + $0x13] sm:$0xff]
        %v1476 = vld [vmem:[%s1106 + $0x1b] sm:$0xf]
        %s1477 = scalar_lea.vmem %s1, 512
        %v1478 = vld [vmem:[%s1477] sm:$0xff]
        %v1479 = vld [vmem:[%s1477 + $0x8] sm:$0xff]
        %v1480 = vld [vmem:[%s1477 + $0x10] sm:$0xff]
        %v1481 = vld [vmem:[%s1477 + $0x18] sm:$0xff]
        %v1482 = vld [vmem:[%s1477 + $0x20] sm:$0xff]
        %v1483 = vld [vmem:[%s1477 + $0x28] sm:$0xff]
        %v1484 = vld [vmem:[%s1477 + $0x30] sm:$0xff]
        %v1485 = vld [vmem:[%s1477 + $0x38] sm:$0xff]
        %v1487 = vsel %vm537, %v1473, 0
        %v1490 = vsel %vm537, %v1474, 0
        %v1493 = vsel %vm537, %v1475, 0
        %v1496 = vsel %vm537, %v1476, 0
        %1498 = vmatprep.subr.mxu0 %v1479
        %1499 = vmatpush1.msra.mxu0 %v1478
        %1500 = vmatprep.subr.mxu0 %v1481
        %1501 = vmatpush1.msra.mxu0 %v1480
        %1502 = vmatprep.subr.mxu0 %v1483
        %1503 = vmatpush1.msra.mxu0 %v1482
        %1504 = vmatprep.subr.mxu0 %v1485
        %1505 = vmatpush1.msra.mxu0 %v1484
        %1506 = vmatprep.subr.mxu0 0.0
        %1507 = vmatpush1.msra.mxu0 0.0
        %1508 = vmatprep.subr.mxu0 0.0
        %1509 = vmatpush1.msra.mxu0 0.0
        %1510 = vmatprep.subr.mxu0 0.0
        %1511 = vmatpush1.msra.mxu0 0.0
        %1512 = vmatprep.subr.mxu0 0.0
        %1513 = vmatpush1.msra.mxu0 0.0
        %1514 = vmatprep.subr.mxu0 0.0
        %1515 = vmatpush1.msra.mxu0 0.0
        %1516 = vmatprep.subr.mxu0 0.0
        %1517 = vmatpush1.msra.mxu0 0.0
        %1518 = vmatprep.subr.mxu0 0.0
        %1519 = vmatpush1.msra.mxu0 0.0
        %1520 = vmatprep.subr.mxu0 0.0
        %1521 = vmatpush1.msra.mxu0 0.0
        %1522 = vmatprep.subr.mxu0 0.0
        %1523 = vmatpush1.msra.mxu0 0.0
        %1524 = vmatprep.subr.mxu0 0.0
        %1525 = vmatpush1.msra.mxu0 0.0
        %1526 = vmatprep.subr.mxu0 0.0
        %1527 = vmatpush1.msra.mxu0 0.0
        %1528 = vmatprep.subr.mxu0 0.0
        %1529 = vmatpush1.msra.mxu0 0.0
        %1530 = vmatprep.subr.mxu0 0.0
        %1531 = vmatpush1.msra.mxu0 0.0
        %1532 = vmatprep.subr.mxu0 0.0
        %1533 = vmatpush1.msra.mxu0 0.0
        %1534 = vmatprep.subr.mxu0 0.0
        %1535 = vmatpush1.msra.mxu0 0.0
        %1536 = vmatprep.subr.mxu0 0.0
        %1537 = vmatpush1.msra.mxu0 0.0
        %1538 = vmatprep.subr.mxu0 0.0
        %1539 = vmatpush1.msra.mxu0 0.0
        %1540 = vmatprep.subr.mxu0 0.0
        %1541 = vmatpush1.msra.mxu0 0.0
        %1542 = vmatprep.subr.mxu0 0.0
        %1543 = vmatpush1.msra.mxu0 0.0
        %1544 = vmatprep.subr.mxu0 0.0
        %1545 = vmatpush1.msra.mxu0 0.0
        %1546 = vmatprep.subr.mxu0 0.0
        %1547 = vmatpush1.msra.mxu0 0.0
        %1548 = vmatprep.subr.mxu0 0.0
        %1549 = vmatpush1.msra.mxu0 0.0
        %1550 = vmatprep.subr.mxu0 0.0
        %1551 = vmatpush1.msra.mxu0 0.0
        %1552 = vmatprep.subr.mxu0 0.0
        %1553 = vmatpush1.msra.mxu0 0.0
        %1554 = vmatprep.subr.mxu0 0.0
        %1555 = vmatpush1.msra.mxu0 0.0
        %1556 = vmatprep.subr.mxu0 0.0
        %1557 = vmatpush1.msra.mxu0 0.0
        %1558 = vmatprep.subr.mxu0 0.0
        %1559 = vmatpush1.msra.mxu0 0.0
        %1560 = vmatprep.subr.mxu0 0.0
        %1561 = vmatpush1.msra.mxu0 0.0
        %1562 = vmatprep.mubr.f32.mxu0 0.0
        %1563 = vmatmul.mubr.f32.gmra.mrb[0].mxu0 %v1487
        %v1564 = vpop.f32.mrb[0].mxu0
        %v1565 = vadd.f32 0.0, %v1564
        %v1566 = vpop.f32.mrb[0].mxu0
        %v1567 = vadd.f32 0.0, %v1566
        %1568 = vmatprep.mubr.f32.mxu0 0.0
        %1569 = vmatmul.mubr.f32.gmra.mrb[0].mxu0 %v1490
        %v1570 = vpop.f32.mrb[0].mxu0
        %v1571 = vadd.f32 0.0, %v1570
        %v1572 = vpop.f32.mrb[0].mxu0
        %v1573 = vadd.f32 0.0, %v1572
        %1574 = vmatprep.mubr.f32.mxu0 0.0
        %1575 = vmatmul.mubr.f32.gmra.mrb[0].mxu0 %v1493
        %v1576 = vpop.f32.mrb[0].mxu0
        %v1577 = vadd.f32 0.0, %v1576
        %v1578 = vpop.f32.mrb[0].mxu0
        %v1579 = vadd.f32 0.0, %v1578
        %1580 = vmatprep.mubr.f32.mxu0 0.0
        %1581 = vmatmul.mubr.f32.gmra.mrb[0].mxu0 %v1496
        %v1582 = vpop.f32.mrb[0].mxu0
        %v1583 = vadd.f32 0.0, %v1582
        %v1584 = vpop.f32.mrb[0].mxu0
        %v1585 = vadd.f32 0.0, %v1584
        %1586 = vdwg.mxu0
        %v1587 = vadd.f32 %v1465, %v1565
        %v1588 = vadd.f32 %v1466, %v1567
        %v1589 = vadd.f32 %v1467, %v1571
        %v1590 = vadd.f32 %v1468, %v1573
        %v1591 = vadd.f32 %v1469, %v1577
        %v1592 = vadd.f32 %v1470, %v1579
        %v1593 = vadd.f32 %v1471, %v1583
        %v1594 = vadd.f32 %v1472, %v1585
        %v1595 = vld [vmem:[%s1106 + $0x4] sm:$0xff]
        %v1596 = vld [vmem:[%s1106 + $0xc] sm:$0xff]
        %v1597 = vld [vmem:[%s1106 + $0x14] sm:$0xff]
        %v1598 = vld [vmem:[%s1106 + $0x1c] sm:$0xf]
        %s1599 = scalar_lea.vmem %s1, 576
        %v1600 = vld [vmem:[%s1599] sm:$0xff]
        %v1601 = vld [vmem:[%s1599 + $0x8] sm:$0xff]
        %v1602 = vld [vmem:[%s1599 + $0x10] sm:$0xff]
        %v1603 = vld [vmem:[%s1599 + $0x18] sm:$0xff]
        %v1604 = vld [vmem:[%s1599 + $0x20] sm:$0xff]
        %v1605 = vld [vmem:[%s1599 + $0x28] sm:$0xff]
        %v1606 = vld [vmem:[%s1599 + $0x30] sm:$0xff]
        %v1607 = vld [vmem:[%s1599 + $0x38] sm:$0xff]
        %v1609 = vsel %vm537, %v1595, 0
        %v1612 = vsel %vm537, %v1596, 0
        %v1615 = vsel %vm537, %v1597, 0
        %v1618 = vsel %vm537, %v1598, 0
        %1620 = vmatprep.subr.mxu0 %v1601
        %1621 = vmatpush1.msra.mxu0 %v1600
        %1622 = vmatprep.subr.mxu0 %v1603
        %1623 = vmatpush1.msra.mxu0 %v1602
        %1624 = vmatprep.subr.mxu0 %v1605
        %1625 = vmatpush1.msra.mxu0 %v1604
        %1626 = vmatprep.subr.mxu0 %v1607
        %1627 = vmatpush1.msra.mxu0 %v1606
        %1628 = vmatprep.subr.mxu0 0.0
        %1629 = vmatpush1.msra.mxu0 0.0
        %1630 = vmatprep.subr.mxu0 0.0
        %1631 = vmatpush1.msra.mxu0 0.0
        %1632 = vmatprep.subr.mxu0 0.0
        %1633 = vmatpush1.msra.mxu0 0.0
        %1634 = vmatprep.subr.mxu0 0.0
        %1635 = vmatpush1.msra.mxu0 0.0
        %1636 = vmatprep.subr.mxu0 0.0
        %1637 = vmatpush1.msra.mxu0 0.0
        %1638 = vmatprep.subr.mxu0 0.0
        %1639 = vmatpush1.msra.mxu0 0.0
        %1640 = vmatprep.subr.mxu0 0.0
        %1641 = vmatpush1.msra.mxu0 0.0
        %1642 = vmatprep.subr.mxu0 0.0
        %1643 = vmatpush1.msra.mxu0 0.0
        %1644 = vmatprep.subr.mxu0 0.0
        %1645 = vmatpush1.msra.mxu0 0.0
        %1646 = vmatprep.subr.mxu0 0.0
        %1647 = vmatpush1.msra.mxu0 0.0
        %1648 = vmatprep.subr.mxu0 0.0
        %1649 = vmatpush1.msra.mxu0 0.0
        %1650 = vmatprep.subr.mxu0 0.0
        %1651 = vmatpush1.msra.mxu0 0.0
        %1652 = vmatprep.subr.mxu0 0.0
        %1653 = vmatpush1.msra.mxu0 0.0
        %1654 = vmatprep.subr.mxu0 0.0
        %1655 = vmatpush1.msra.mxu0 0.0
        %1656 = vmatprep.subr.mxu0 0.0
        %1657 = vmatpush1.msra.mxu0 0.0
        %1658 = vmatprep.subr.mxu0 0.0
        %1659 = vmatpush1.msra.mxu0 0.0
        %1660 = vmatprep.subr.mxu0 0.0
        %1661 = vmatpush1.msra.mxu0 0.0
        %1662 = vmatprep.subr.mxu0 0.0
        %1663 = vmatpush1.msra.mxu0 0.0
        %1664 = vmatprep.subr.mxu0 0.0
        %1665 = vmatpush1.msra.mxu0 0.0
        %1666 = vmatprep.subr.mxu0 0.0
        %1667 = vmatpush1.msra.mxu0 0.0
        %1668 = vmatprep.subr.mxu0 0.0
        %1669 = vmatpush1.msra.mxu0 0.0
        %1670 = vmatprep.subr.mxu0 0.0
        %1671 = vmatpush1.msra.mxu0 0.0
        %1672 = vmatprep.subr.mxu0 0.0
        %1673 = vmatpush1.msra.mxu0 0.0
        %1674 = vmatprep.subr.mxu0 0.0
        %1675 = vmatpush1.msra.mxu0 0.0
        %1676 = vmatprep.subr.mxu0 0.0
        %1677 = vmatpush1.msra.mxu0 0.0
        %1678 = vmatprep.subr.mxu0 0.0
        %1679 = vmatpush1.msra.mxu0 0.0
        %1680 = vmatprep.subr.mxu0 0.0
        %1681 = vmatpush1.msra.mxu0 0.0
        %1682 = vmatprep.subr.mxu0 0.0
        %1683 = vmatpush1.msra.mxu0 0.0
        %1684 = vmatprep.mubr.f32.mxu0 0.0
        %1685 = vmatmul.mubr.f32.gmra.mrb[0].mxu0 %v1609
        %v1686 = vpop.f32.mrb[0].mxu0
        %v1687 = vadd.f32 0.0, %v1686
        %v1688 = vpop.f32.mrb[0].mxu0
        %v1689 = vadd.f32 0.0, %v1688
        %1690 = vmatprep.mubr.f32.mxu0 0.0
        %1691 = vmatmul.mubr.f32.gmra.mrb[0].mxu0 %v1612
        %v1692 = vpop.f32.mrb[0].mxu0
        %v1693 = vadd.f32 0.0, %v1692
        %v1694 = vpop.f32.mrb[0].mxu0
        %v1695 = vadd.f32 0.0, %v1694
        %1696 = vmatprep.mubr.f32.mxu0 0.0
        %1697 = vmatmul.mubr.f32.gmra.mrb[0].mxu0 %v1615
        %v1698 = vpop.f32.mrb[0].mxu0
        %v1699 = vadd.f32 0.0, %v1698
        %v1700 = vpop.f32.mrb[0].mxu0
        %v1701 = vadd.f32 0.0, %v1700
        %1702 = vmatprep.mubr.f32.mxu0 0.0
        %1703 = vmatmul.mubr.f32.gmra.mrb[0].mxu0 %v1618
        %v1704 = vpop.f32.mrb[0].mxu0
        %v1705 = vadd.f32 0.0, %v1704
        %v1706 = vpop.f32.mrb[0].mxu0
        %v1707 = vadd.f32 0.0, %v1706
        %1708 = vdwg.mxu0
        %v1709 = vadd.f32 %v1587, %v1687
        %v1710 = vadd.f32 %v1588, %v1689
        %v1711 = vadd.f32 %v1589, %v1693
        %v1712 = vadd.f32 %v1590, %v1695
        %v1713 = vadd.f32 %v1591, %v1699
        %v1714 = vadd.f32 %v1592, %v1701
        %v1715 = vadd.f32 %v1593, %v1705
        %v1716 = vadd.f32 %v1594, %v1707
        %s1717 = scalar_lea.vmem %s466, 64 [#allocation4]
        %v1718 = vld [vmem:[%s1717] sm:$0xff]
        %v1719 = vld [vmem:[%s1717 + $0x8] sm:$0xff]
        %v1720 = vld [vmem:[%s1717 + $0x10] sm:$0xff]
        %v1721 = vld [vmem:[%s1717 + $0x18] sm:$0xf]
        %s1722 = scalar_lea.vmem %s1, 640
        %v1723 = vld [vmem:[%s1722] sm:$0xff]
        %v1724 = vld [vmem:[%s1722 + $0x8] sm:$0xff]
        %v1725 = vld [vmem:[%s1722 + $0x10] sm:$0xff]
        %v1726 = vld [vmem:[%s1722 + $0x18] sm:$0xff]
        %v1727 = vld [vmem:[%s1722 + $0x20] sm:$0xff]
        %v1728 = vld [vmem:[%s1722 + $0x28] sm:$0xff]
        %v1729 = vld [vmem:[%s1722 + $0x30] sm:$0xff]
        %v1730 = vld [vmem:[%s1722 + $0x38] sm:$0xff]
        %v1732 = vsel %vm537, %v1718, 0
        %v1735 = vsel %vm537, %v1719, 0
        %v1738 = vsel %vm537, %v1720, 0
        %v1741 = vsel %vm537, %v1721, 0
        %1743 = vmatprep.subr.mxu0 %v1724
        %1744 = vmatpush1.msra.mxu0 %v1723
        %1745 = vmatprep.subr.mxu0 %v1726
        %1746 = vmatpush1.msra.mxu0 %v1725
        %1747 = vmatprep.subr.mxu0 %v1728
        %1748 = vmatpush1.msra.mxu0 %v1727
        %1749 = vmatprep.subr.mxu0 %v1730
        %1750 = vmatpush1.msra.mxu0 %v1729
        %1751 = vmatprep.subr.mxu0 0.0
        %1752 = vmatpush1.msra.mxu0 0.0
        %1753 = vmatprep.subr.mxu0 0.0
        %1754 = vmatpush1.msra.mxu0 0.0
        %1755 = vmatprep.subr.mxu0 0.0
        %1756 = vmatpush1.msra.mxu0 0.0
        %1757 = vmatprep.subr.mxu0 0.0
        %1758 = vmatpush1.msra.mxu0 0.0
        %1759 = vmatprep.subr.mxu0 0.0
        %1760 = vmatpush1.msra.mxu0 0.0
        %1761 = vmatprep.subr.mxu0 0.0
        %1762 = vmatpush1.msra.mxu0 0.0
        %1763 = vmatprep.subr.mxu0 0.0
        %1764 = vmatpush1.msra.mxu0 0.0
        %1765 = vmatprep.subr.mxu0 0.0
        %1766 = vmatpush1.msra.mxu0 0.0
        %1767 = vmatprep.subr.mxu0 0.0
        %1768 = vmatpush1.msra.mxu0 0.0
        %1769 = vmatprep.subr.mxu0 0.0
        %1770 = vmatpush1.msra.mxu0 0.0
        %1771 = vmatprep.subr.mxu0 0.0
        %1772 = vmatpush1.msra.mxu0 0.0
        %1773 = vmatprep.subr.mxu0 0.0
        %1774 = vmatpush1.msra.mxu0 0.0
        %1775 = vmatprep.subr.mxu0 0.0
        %1776 = vmatpush1.msra.mxu0 0.0
        %1777 = vmatprep.subr.mxu0 0.0
        %1778 = vmatpush1.msra.mxu0 0.0
        %1779 = vmatprep.subr.mxu0 0.0
        %1780 = vmatpush1.msra.mxu0 0.0
        %1781 = vmatprep.subr.mxu0 0.0
        %1782 = vmatpush1.msra.mxu0 0.0
        %1783 = vmatprep.subr.mxu0 0.0
        %1784 = vmatpush1.msra.mxu0 0.0
        %1785 = vmatprep.subr.mxu0 0.0
        %1786 = vmatpush1.msra.mxu0 0.0
        %1787 = vmatprep.subr.mxu0 0.0
        %1788 = vmatpush1.msra.mxu0 0.0
        %1789 = vmatprep.subr.mxu0 0.0
        %1790 = vmatpush1.msra.mxu0 0.0
        %1791 = vmatprep.subr.mxu0 0.0
        %1792 = vmatpush1.msra.mxu0 0.0
        %1793 = vmatprep.subr.mxu0 0.0
        %1794 = vmatpush1.msra.mxu0 0.0
        %1795 = vmatprep.subr.mxu0 0.0
        %1796 = vmatpush1.msra.mxu0 0.0
        %1797 = vmatprep.subr.mxu0 0.0
        %1798 = vmatpush1.msra.mxu0 0.0
        %1799 = vmatprep.subr.mxu0 0.0
        %1800 = vmatpush1.msra.mxu0 0.0
        %1801 = vmatprep.subr.mxu0 0.0
        %1802 = vmatpush1.msra.mxu0 0.0
        %1803 = vmatprep.subr.mxu0 0.0
        %1804 = vmatpush1.msra.mxu0 0.0
        %1805 = vmatprep.subr.mxu0 0.0
        %1806 = vmatpush1.msra.mxu0 0.0
        %1807 = vmatprep.mubr.f32.mxu0 0.0
        %1808 = vmatmul.mubr.f32.gmra.mrb[0].mxu0 %v1732
        %v1809 = vpop.f32.mrb[0].mxu0
        %v1810 = vadd.f32 0.0, %v1809
        %v1811 = vpop.f32.mrb[0].mxu0
        %v1812 = vadd.f32 0.0, %v1811
        %1813 = vmatprep.mubr.f32.mxu0 0.0
        %1814 = vmatmul.mubr.f32.gmra.mrb[0].mxu0 %v1735
        %v1815 = vpop.f32.mrb[0].mxu0
        %v1816 = vadd.f32 0.0, %v1815
        %v1817 = vpop.f32.mrb[0].mxu0
        %v1818 = vadd.f32 0.0, %v1817
        %1819 = vmatprep.mubr.f32.mxu0 0.0
        %1820 = vmatmul.mubr.f32.gmra.mrb[0].mxu0 %v1738
        %v1821 = vpop.f32.mrb[0].mxu0
        %v1822 = vadd.f32 0.0, %v1821
        %v1823 = vpop.f32.mrb[0].mxu0
        %v1824 = vadd.f32 0.0, %v1823
        %1825 = vmatprep.mubr.f32.mxu0 0.0
        %1826 = vmatmul.mubr.f32.gmra.mrb[0].mxu0 %v1741
        %v1827 = vpop.f32.mrb[0].mxu0
        %v1828 = vadd.f32 0.0, %v1827
        %v1829 = vpop.f32.mrb[0].mxu0
        %v1830 = vadd.f32 0.0, %v1829
        %1831 = vdwg.mxu0
        %v1832 = vadd.f32 %v1709, %v1810
        %v1833 = vadd.f32 %v1710, %v1812
        %v1834 = vadd.f32 %v1711, %v1816
        %v1835 = vadd.f32 %v1712, %v1818
        %v1836 = vadd.f32 %v1713, %v1822
        %v1837 = vadd.f32 %v1714, %v1824
        %v1838 = vadd.f32 %v1715, %v1828
        %v1839 = vadd.f32 %v1716, %v1830
        %v1840 = vld [vmem:[%s1717 + $0x1] sm:$0xff]
        %v1841 = vld [vmem:[%s1717 + $0x9] sm:$0xff]
        %v1842 = vld [vmem:[%s1717 + $0x11] sm:$0xff]
        %v1843 = vld [vmem:[%s1717 + $0x19] sm:$0xf]
        %s1844 = scalar_lea.vmem %s1, 704
        %v1845 = vld [vmem:[%s1844] sm:$0xff]
        %v1846 = vld [vmem:[%s1844 + $0x8] sm:$0xff]
        %v1847 = vld [vmem:[%s1844 + $0x10] sm:$0xff]
        %v1848 = vld [vmem:[%s1844 + $0x18] sm:$0xff]
        %v1849 = vld [vmem:[%s1844 + $0x20] sm:$0xff]
        %v1850 = vld [vmem:[%s1844 + $0x28] sm:$0xff]
        %v1851 = vld [vmem:[%s1844 + $0x30] sm:$0xff]
        %v1852 = vld [vmem:[%s1844 + $0x38] sm:$0xff]
        %v1854 = vsel %vm537, %v1840, 0
        %v1857 = vsel %vm537, %v1841, 0
        %v1860 = vsel %vm537, %v1842, 0
        %v1863 = vsel %vm537, %v1843, 0
        %1865 = vmatprep.subr.mxu0 %v1846
        %1866 = vmatpush1.msra.mxu0 %v1845
        %1867 = vmatprep.subr.mxu0 %v1848
        %1868 = vmatpush1.msra.mxu0 %v1847
        %1869 = vmatprep.subr.mxu0 %v1850
        %1870 = vmatpush1.msra.mxu0 %v1849
        %1871 = vmatprep.subr.mxu0 %v1852
        %1872 = vmatpush1.msra.mxu0 %v1851
        %1873 = vmatprep.subr.mxu0 0.0
        %1874 = vmatpush1.msra.mxu0 0.0
        %1875 = vmatprep.subr.mxu0 0.0
        %1876 = vmatpush1.msra.mxu0 0.0
        %1877 = vmatprep.subr.mxu0 0.0
        %1878 = vmatpush1.msra.mxu0 0.0
        %1879 = vmatprep.subr.mxu0 0.0
        %1880 = vmatpush1.msra.mxu0 0.0
        %1881 = vmatprep.subr.mxu0 0.0
        %1882 = vmatpush1.msra.mxu0 0.0
        %1883 = vmatprep.subr.mxu0 0.0
        %1884 = vmatpush1.msra.mxu0 0.0
        %1885 = vmatprep.subr.mxu0 0.0
        %1886 = vmatpush1.msra.mxu0 0.0
        %1887 = vmatprep.subr.mxu0 0.0
        %1888 = vmatpush1.msra.mxu0 0.0
        %1889 = vmatprep.subr.mxu0 0.0
        %1890 = vmatpush1.msra.mxu0 0.0
        %1891 = vmatprep.subr.mxu0 0.0
        %1892 = vmatpush1.msra.mxu0 0.0
        %1893 = vmatprep.subr.mxu0 0.0
        %1894 = vmatpush1.msra.mxu0 0.0
        %1895 = vmatprep.subr.mxu0 0.0
        %1896 = vmatpush1.msra.mxu0 0.0
        %1897 = vmatprep.subr.mxu0 0.0
        %1898 = vmatpush1.msra.mxu0 0.0
        %1899 = vmatprep.subr.mxu0 0.0
        %1900 = vmatpush1.msra.mxu0 0.0
        %1901 = vmatprep.subr.mxu0 0.0
        %1902 = vmatpush1.msra.mxu0 0.0
        %1903 = vmatprep.subr.mxu0 0.0
        %1904 = vmatpush1.msra.mxu0 0.0
        %1905 = vmatprep.subr.mxu0 0.0
        %1906 = vmatpush1.msra.mxu0 0.0
        %1907 = vmatprep.subr.mxu0 0.0
        %1908 = vmatpush1.msra.mxu0 0.0
        %1909 = vmatprep.subr.mxu0 0.0
        %1910 = vmatpush1.msra.mxu0 0.0
        %1911 = vmatprep.subr.mxu0 0.0
        %1912 = vmatpush1.msra.mxu0 0.0
        %1913 = vmatprep.subr.mxu0 0.0
        %1914 = vmatpush1.msra.mxu0 0.0
        %1915 = vmatprep.subr.mxu0 0.0
        %1916 = vmatpush1.msra.mxu0 0.0
        %1917 = vmatprep.subr.mxu0 0.0
        %1918 = vmatpush1.msra.mxu0 0.0
        %1919 = vmatprep.subr.mxu0 0.0
        %1920 = vmatpush1.msra.mxu0 0.0
        %1921 = vmatprep.subr.mxu0 0.0
        %1922 = vmatpush1.msra.mxu0 0.0
        %1923 = vmatprep.subr.mxu0 0.0
        %1924 = vmatpush1.msra.mxu0 0.0
        %1925 = vmatprep.subr.mxu0 0.0
        %1926 = vmatpush1.msra.mxu0 0.0
        %1927 = vmatprep.subr.mxu0 0.0
        %1928 = vmatpush1.msra.mxu0 0.0
        %1929 = vmatprep.mubr.f32.mxu0 0.0
        %1930 = vmatmul.mubr.f32.gmra.mrb[0].mxu0 %v1854
        %v1931 = vpop.f32.mrb[0].mxu0
        %v1932 = vadd.f32 0.0, %v1931
        %v1933 = vpop.f32.mrb[0].mxu0
        %v1934 = vadd.f32 0.0, %v1933
        %1935 = vmatprep.mubr.f32.mxu0 0.0
        %1936 = vmatmul.mubr.f32.gmra.mrb[0].mxu0 %v1857
        %v1937 = vpop.f32.mrb[0].mxu0
        %v1938 = vadd.f32 0.0, %v1937
        %v1939 = vpop.f32.mrb[0].mxu0
        %v1940 = vadd.f32 0.0, %v1939
        %1941 = vmatprep.mubr.f32.mxu0 0.0
        %1942 = vmatmul.mubr.f32.gmra.mrb[0].mxu0 %v1860
        %v1943 = vpop.f32.mrb[0].mxu0
        %v1944 = vadd.f32 0.0, %v1943
        %v1945 = vpop.f32.mrb[0].mxu0
        %v1946 = vadd.f32 0.0, %v1945
        %1947 = vmatprep.mubr.f32.mxu0 0.0
        %1948 = vmatmul.mubr.f32.gmra.mrb[0].mxu0 %v1863
        %v1949 = vpop.f32.mrb[0].mxu0
        %v1950 = vadd.f32 0.0, %v1949
        %v1951 = vpop.f32.mrb[0].mxu0
        %v1952 = vadd.f32 0.0, %v1951
        %1953 = vdwg.mxu0
        %v1954 = vadd.f32 %v1832, %v1932
        %v1955 = vadd.f32 %v1833, %v1934
        %v1956 = vadd.f32 %v1834, %v1938
        %v1957 = vadd.f32 %v1835, %v1940
        %v1958 = vadd.f32 %v1836, %v1944
        %v1959 = vadd.f32 %v1837, %v1946
        %v1960 = vadd.f32 %v1838, %v1950
        %v1961 = vadd.f32 %v1839, %v1952
        %v1962 = vld [vmem:[%s1717 + $0x2] sm:$0xff]
        %v1963 = vld [vmem:[%s1717 + $0xa] sm:$0xff]
        %v1964 = vld [vmem:[%s1717 + $0x12] sm:$0xff]
        %v1965 = vld [vmem:[%s1717 + $0x1a] sm:$0xf]
        %s1966 = scalar_lea.vmem %s1, 768
        %v1967 = vld [vmem:[%s1966] sm:$0xff]
        %v1968 = vld [vmem:[%s1966 + $0x8] sm:$0xff]
        %v1969 = vld [vmem:[%s1966 + $0x10] sm:$0xff]
        %v1970 = vld [vmem:[%s1966 + $0x18] sm:$0xff]
        %v1971 = vld [vmem:[%s1966 + $0x20] sm:$0xff]
        %v1972 = vld [vmem:[%s1966 + $0x28] sm:$0xff]
        %v1973 = vld [vmem:[%s1966 + $0x30] sm:$0xff]
        %v1974 = vld [vmem:[%s1966 + $0x38] sm:$0xff]
        %v1976 = vsel %vm537, %v1962, 0
        %v1979 = vsel %vm537, %v1963, 0
        %v1982 = vsel %vm537, %v1964, 0
        %v1985 = vsel %vm537, %v1965, 0
        %1987 = vmatprep.subr.mxu0 %v1968
        %1988 = vmatpush1.msra.mxu0 %v1967
        %1989 = vmatprep.subr.mxu0 %v1970
        %1990 = vmatpush1.msra.mxu0 %v1969
        %1991 = vmatprep.subr.mxu0 %v1972
        %1992 = vmatpush1.msra.mxu0 %v1971
        %1993 = vmatprep.subr.mxu0 %v1974
        %1994 = vmatpush1.msra.mxu0 %v1973
        %1995 = vmatprep.subr.mxu0 0.0
        %1996 = vmatpush1.msra.mxu0 0.0
        %1997 = vmatprep.subr.mxu0 0.0
        %1998 = vmatpush1.msra.mxu0 0.0
        %1999 = vmatprep.subr.mxu0 0.0
        %2000 = vmatpush1.msra.mxu0 0.0
        %2001 = vmatprep.subr.mxu0 0.0
        %2002 = vmatpush1.msra.mxu0 0.0
        %2003 = vmatprep.subr.mxu0 0.0
        %2004 = vmatpush1.msra.mxu0 0.0
        %2005 = vmatprep.subr.mxu0 0.0
        %2006 = vmatpush1.msra.mxu0 0.0
        %2007 = vmatprep.subr.mxu0 0.0
        %2008 = vmatpush1.msra.mxu0 0.0
        %2009 = vmatprep.subr.mxu0 0.0
        %2010 = vmatpush1.msra.mxu0 0.0
        %2011 = vmatprep.subr.mxu0 0.0
        %2012 = vmatpush1.msra.mxu0 0.0
        %2013 = vmatprep.subr.mxu0 0.0
        %2014 = vmatpush1.msra.mxu0 0.0
        %2015 = vmatprep.subr.mxu0 0.0
        %2016 = vmatpush1.msra.mxu0 0.0
        %2017 = vmatprep.subr.mxu0 0.0
        %2018 = vmatpush1.msra.mxu0 0.0
        %2019 = vmatprep.subr.mxu0 0.0
        %2020 = vmatpush1.msra.mxu0 0.0
        %2021 = vmatprep.subr.mxu0 0.0
        %2022 = vmatpush1.msra.mxu0 0.0
        %2023 = vmatprep.subr.mxu0 0.0
        %2024 = vmatpush1.msra.mxu0 0.0
        %2025 = vmatprep.subr.mxu0 0.0
        %2026 = vmatpush1.msra.mxu0 0.0
        %2027 = vmatprep.subr.mxu0 0.0
        %2028 = vmatpush1.msra.mxu0 0.0
        %2029 = vmatprep.subr.mxu0 0.0
        %2030 = vmatpush1.msra.mxu0 0.0
        %2031 = vmatprep.subr.mxu0 0.0
        %2032 = vmatpush1.msra.mxu0 0.0
        %2033 = vmatprep.subr.mxu0 0.0
        %2034 = vmatpush1.msra.mxu0 0.0
        %2035 = vmatprep.subr.mxu0 0.0
        %2036 = vmatpush1.msra.mxu0 0.0
        %2037 = vmatprep.subr.mxu0 0.0
        %2038 = vmatpush1.msra.mxu0 0.0
        %2039 = vmatprep.subr.mxu0 0.0
        %2040 = vmatpush1.msra.mxu0 0.0
        %2041 = vmatprep.subr.mxu0 0.0
        %2042 = vmatpush1.msra.mxu0 0.0
        %2043 = vmatprep.subr.mxu0 0.0
        %2044 = vmatpush1.msra.mxu0 0.0
        %2045 = vmatprep.subr.mxu0 0.0
        %2046 = vmatpush1.msra.mxu0 0.0
        %2047 = vmatprep.subr.mxu0 0.0
        %2048 = vmatpush1.msra.mxu0 0.0
        %2049 = vmatprep.subr.mxu0 0.0
        %2050 = vmatpush1.msra.mxu0 0.0
        %2051 = vmatprep.mubr.f32.mxu0 0.0
        %2052 = vmatmul.mubr.f32.gmra.mrb[0].mxu0 %v1976
        %v2053 = vpop.f32.mrb[0].mxu0
        %v2054 = vadd.f32 0.0, %v2053
        %v2055 = vpop.f32.mrb[0].mxu0
        %v2056 = vadd.f32 0.0, %v2055
        %2057 = vmatprep.mubr.f32.mxu0 0.0
        %2058 = vmatmul.mubr.f32.gmra.mrb[0].mxu0 %v1979
        %v2059 = vpop.f32.mrb[0].mxu0
        %v2060 = vadd.f32 0.0, %v2059
        %v2061 = vpop.f32.mrb[0].mxu0
        %v2062 = vadd.f32 0.0, %v2061
        %2063 = vmatprep.mubr.f32.mxu0 0.0
        %2064 = vmatmul.mubr.f32.gmra.mrb[0].mxu0 %v1982
        %v2065 = vpop.f32.mrb[0].mxu0
        %v2066 = vadd.f32 0.0, %v2065
        %v2067 = vpop.f32.mrb[0].mxu0
        %v2068 = vadd.f32 0.0, %v2067
        %2069 = vmatprep.mubr.f32.mxu0 0.0
        %2070 = vmatmul.mubr.f32.gmra.mrb[0].mxu0 %v1985
        %v2071 = vpop.f32.mrb[0].mxu0
        %v2072 = vadd.f32 0.0, %v2071
        %v2073 = vpop.f32.mrb[0].mxu0
        %v2074 = vadd.f32 0.0, %v2073
        %2075 = vdwg.mxu0
        %v2076 = vadd.f32 %v1954, %v2054
        %v2077 = vadd.f32 %v1955, %v2056
        %v2078 = vadd.f32 %v1956, %v2060
        %v2079 = vadd.f32 %v1957, %v2062
        %v2080 = vadd.f32 %v1958, %v2066
        %v2081 = vadd.f32 %v1959, %v2068
        %v2082 = vadd.f32 %v1960, %v2072
        %v2083 = vadd.f32 %v1961, %v2074
        %v2084 = vld [vmem:[%s1717 + $0x3] sm:$0xff]
        %v2085 = vld [vmem:[%s1717 + $0xb] sm:$0xff]
        %v2086 = vld [vmem:[%s1717 + $0x13] sm:$0xff]
        %v2087 = vld [vmem:[%s1717 + $0x1b] sm:$0xf]
        %s2088 = scalar_lea.vmem %s1, 832
        %v2089 = vld [vmem:[%s2088] sm:$0xff]
        %v2090 = vld [vmem:[%s2088 + $0x8] sm:$0xff]
        %v2091 = vld [vmem:[%s2088 + $0x10] sm:$0xff]
        %v2092 = vld [vmem:[%s2088 + $0x18] sm:$0xff]
        %v2093 = vld [vmem:[%s2088 + $0x20] sm:$0xff]
        %v2094 = vld [vmem:[%s2088 + $0x28] sm:$0xff]
        %v2095 = vld [vmem:[%s2088 + $0x30] sm:$0xff]
        %v2096 = vld [vmem:[%s2088 + $0x38] sm:$0xff]
        %v2098 = vsel %vm537, %v2084, 0
        %v2101 = vsel %vm537, %v2085, 0
        %v2104 = vsel %vm537, %v2086, 0
        %v2107 = vsel %vm537, %v2087, 0
        %2109 = vmatprep.subr.mxu0 %v2090
        %2110 = vmatpush1.msra.mxu0 %v2089
        %2111 = vmatprep.subr.mxu0 %v2092
        %2112 = vmatpush1.msra.mxu0 %v2091
        %2113 = vmatprep.subr.mxu0 %v2094
        %2114 = vmatpush1.msra.mxu0 %v2093
        %2115 = vmatprep.subr.mxu0 %v2096
        %2116 = vmatpush1.msra.mxu0 %v2095
        %2117 = vmatprep.subr.mxu0 0.0
        %2118 = vmatpush1.msra.mxu0 0.0
        %2119 = vmatprep.subr.mxu0 0.0
        %2120 = vmatpush1.msra.mxu0 0.0
        %2121 = vmatprep.subr.mxu0 0.0
        %2122 = vmatpush1.msra.mxu0 0.0
        %2123 = vmatprep.subr.mxu0 0.0
        %2124 = vmatpush1.msra.mxu0 0.0
        %2125 = vmatprep.subr.mxu0 0.0
        %2126 = vmatpush1.msra.mxu0 0.0
        %2127 = vmatprep.subr.mxu0 0.0
        %2128 = vmatpush1.msra.mxu0 0.0
        %2129 = vmatprep.subr.mxu0 0.0
        %2130 = vmatpush1.msra.mxu0 0.0
        %2131 = vmatprep.subr.mxu0 0.0
        %2132 = vmatpush1.msra.mxu0 0.0
        %2133 = vmatprep.subr.mxu0 0.0
        %2134 = vmatpush1.msra.mxu0 0.0
        %2135 = vmatprep.subr.mxu0 0.0
        %2136 = vmatpush1.msra.mxu0 0.0
        %2137 = vmatprep.subr.mxu0 0.0
        %2138 = vmatpush1.msra.mxu0 0.0
        %2139 = vmatprep.subr.mxu0 0.0
        %2140 = vmatpush1.msra.mxu0 0.0
        %2141 = vmatprep.subr.mxu0 0.0
        %2142 = vmatpush1.msra.mxu0 0.0
        %2143 = vmatprep.subr.mxu0 0.0
        %2144 = vmatpush1.msra.mxu0 0.0
        %2145 = vmatprep.subr.mxu0 0.0
        %2146 = vmatpush1.msra.mxu0 0.0
        %2147 = vmatprep.subr.mxu0 0.0
        %2148 = vmatpush1.msra.mxu0 0.0
        %2149 = vmatprep.subr.mxu0 0.0
        %2150 = vmatpush1.msra.mxu0 0.0
        %2151 = vmatprep.subr.mxu0 0.0
        %2152 = vmatpush1.msra.mxu0 0.0
        %2153 = vmatprep.subr.mxu0 0.0
        %2154 = vmatpush1.msra.mxu0 0.0
        %2155 = vmatprep.subr.mxu0 0.0
        %2156 = vmatpush1.msra.mxu0 0.0
        %2157 = vmatprep.subr.mxu0 0.0
        %2158 = vmatpush1.msra.mxu0 0.0
        %2159 = vmatprep.subr.mxu0 0.0
        %2160 = vmatpush1.msra.mxu0 0.0
        %2161 = vmatprep.subr.mxu0 0.0
        %2162 = vmatpush1.msra.mxu0 0.0
        %2163 = vmatprep.subr.mxu0 0.0
        %2164 = vmatpush1.msra.mxu0 0.0
        %2165 = vmatprep.subr.mxu0 0.0
        %2166 = vmatpush1.msra.mxu0 0.0
        %2167 = vmatprep.subr.mxu0 0.0
        %2168 = vmatpush1.msra.mxu0 0.0
        %2169 = vmatprep.subr.mxu0 0.0
        %2170 = vmatpush1.msra.mxu0 0.0
        %2171 = vmatprep.subr.mxu0 0.0
        %2172 = vmatpush1.msra.mxu0 0.0
        %2173 = vmatprep.mubr.f32.mxu0 0.0
        %2174 = vmatmul.mubr.f32.gmra.mrb[0].mxu0 %v2098
        %v2175 = vpop.f32.mrb[0].mxu0
        %v2176 = vadd.f32 0.0, %v2175
        %v2177 = vpop.f32.mrb[0].mxu0
        %v2178 = vadd.f32 0.0, %v2177
        %2179 = vmatprep.mubr.f32.mxu0 0.0
        %2180 = vmatmul.mubr.f32.gmra.mrb[0].mxu0 %v2101
        %v2181 = vpop.f32.mrb[0].mxu0
        %v2182 = vadd.f32 0.0, %v2181
        %v2183 = vpop.f32.mrb[0].mxu0
        %v2184 = vadd.f32 0.0, %v2183
        %2185 = vmatprep.mubr.f32.mxu0 0.0
        %2186 = vmatmul.mubr.f32.gmra.mrb[0].mxu0 %v2104
        %v2187 = vpop.f32.mrb[0].mxu0
        %v2188 = vadd.f32 0.0, %v2187
        %v2189 = vpop.f32.mrb[0].mxu0
        %v2190 = vadd.f32 0.0, %v2189
        %2191 = vmatprep.mubr.f32.mxu0 0.0
        %2192 = vmatmul.mubr.f32.gmra.mrb[0].mxu0 %v2107
        %v2193 = vpop.f32.mrb[0].mxu0
        %v2194 = vadd.f32 0.0, %v2193
        %v2195 = vpop.f32.mrb[0].mxu0
        %v2196 = vadd.f32 0.0, %v2195
        %2197 = vdwg.mxu0
        %v2198 = vadd.f32 %v2076, %v2176
        %v2199 = vadd.f32 %v2077, %v2178
        %v2200 = vadd.f32 %v2078, %v2182
        %v2201 = vadd.f32 %v2079, %v2184
        %v2202 = vadd.f32 %v2080, %v2188
        %v2203 = vadd.f32 %v2081, %v2190
        %v2204 = vadd.f32 %v2082, %v2194
        %v2205 = vadd.f32 %v2083, %v2196
        %v2206 = vld [vmem:[%s1717 + $0x4] sm:$0xff]
        %v2207 = vld [vmem:[%s1717 + $0xc] sm:$0xff]
        %v2208 = vld [vmem:[%s1717 + $0x14] sm:$0xff]
        %v2209 = vld [vmem:[%s1717 + $0x1c] sm:$0xf]
        %s2210 = scalar_lea.vmem %s1, 896
        %v2211 = vld [vmem:[%s2210] sm:$0xff]
        %v2212 = vld [vmem:[%s2210 + $0x8] sm:$0xff]
        %v2213 = vld [vmem:[%s2210 + $0x10] sm:$0xff]
        %v2214 = vld [vmem:[%s2210 + $0x18] sm:$0xff]
        %v2215 = vld [vmem:[%s2210 + $0x20] sm:$0xff]
        %v2216 = vld [vmem:[%s2210 + $0x28] sm:$0xff]
        %v2217 = vld [vmem:[%s2210 + $0x30] sm:$0xff]
        %v2218 = vld [vmem:[%s2210 + $0x38] sm:$0xff]
        %v2220 = vsel %vm537, %v2206, 0
        %v2223 = vsel %vm537, %v2207, 0
        %v2226 = vsel %vm537, %v2208, 0
        %v2229 = vsel %vm537, %v2209, 0
        %2231 = vmatprep.subr.mxu0 %v2212
        %2232 = vmatpush1.msra.mxu0 %v2211
        %2233 = vmatprep.subr.mxu0 %v2214
        %2234 = vmatpush1.msra.mxu0 %v2213
        %2235 = vmatprep.subr.mxu0 %v2216
        %2236 = vmatpush1.msra.mxu0 %v2215
        %2237 = vmatprep.subr.mxu0 %v2218
        %2238 = vmatpush1.msra.mxu0 %v2217
        %2239 = vmatprep.subr.mxu0 0.0
        %2240 = vmatpush1.msra.mxu0 0.0
        %2241 = vmatprep.subr.mxu0 0.0
        %2242 = vmatpush1.msra.mxu0 0.0
        %2243 = vmatprep.subr.mxu0 0.0
        %2244 = vmatpush1.msra.mxu0 0.0
        %2245 = vmatprep.subr.mxu0 0.0
        %2246 = vmatpush1.msra.mxu0 0.0
        %2247 = vmatprep.subr.mxu0 0.0
        %2248 = vmatpush1.msra.mxu0 0.0
        %2249 = vmatprep.subr.mxu0 0.0
        %2250 = vmatpush1.msra.mxu0 0.0
        %2251 = vmatprep.subr.mxu0 0.0
        %2252 = vmatpush1.msra.mxu0 0.0
        %2253 = vmatprep.subr.mxu0 0.0
        %2254 = vmatpush1.msra.mxu0 0.0
        %2255 = vmatprep.subr.mxu0 0.0
        %2256 = vmatpush1.msra.mxu0 0.0
        %2257 = vmatprep.subr.mxu0 0.0
        %2258 = vmatpush1.msra.mxu0 0.0
        %2259 = vmatprep.subr.mxu0 0.0
        %2260 = vmatpush1.msra.mxu0 0.0
        %2261 = vmatprep.subr.mxu0 0.0
        %2262 = vmatpush1.msra.mxu0 0.0
        %2263 = vmatprep.subr.mxu0 0.0
        %2264 = vmatpush1.msra.mxu0 0.0
        %2265 = vmatprep.subr.mxu0 0.0
        %2266 = vmatpush1.msra.mxu0 0.0
        %2267 = vmatprep.subr.mxu0 0.0
        %2268 = vmatpush1.msra.mxu0 0.0
        %2269 = vmatprep.subr.mxu0 0.0
        %2270 = vmatpush1.msra.mxu0 0.0
        %2271 = vmatprep.subr.mxu0 0.0
        %2272 = vmatpush1.msra.mxu0 0.0
        %2273 = vmatprep.subr.mxu0 0.0
        %2274 = vmatpush1.msra.mxu0 0.0
        %2275 = vmatprep.subr.mxu0 0.0
        %2276 = vmatpush1.msra.mxu0 0.0
        %2277 = vmatprep.subr.mxu0 0.0
        %2278 = vmatpush1.msra.mxu0 0.0
        %2279 = vmatprep.subr.mxu0 0.0
        %2280 = vmatpush1.msra.mxu0 0.0
        %2281 = vmatprep.subr.mxu0 0.0
        %2282 = vmatpush1.msra.mxu0 0.0
        %2283 = vmatprep.subr.mxu0 0.0
        %2284 = vmatpush1.msra.mxu0 0.0
        %2285 = vmatprep.subr.mxu0 0.0
        %2286 = vmatpush1.msra.mxu0 0.0
        %2287 = vmatprep.subr.mxu0 0.0
        %2288 = vmatpush1.msra.mxu0 0.0
        %2289 = vmatprep.subr.mxu0 0.0
        %2290 = vmatpush1.msra.mxu0 0.0
        %2291 = vmatprep.subr.mxu0 0.0
        %2292 = vmatpush1.msra.mxu0 0.0
        %2293 = vmatprep.subr.mxu0 0.0
        %2294 = vmatpush1.msra.mxu0 0.0
        %2295 = vmatprep.mubr.f32.mxu0 0.0
        %2296 = vmatmul.mubr.f32.gmra.mrb[0].mxu0 %v2220
        %v2297 = vpop.f32.mrb[0].mxu0
        %v2298 = vadd.f32 0.0, %v2297
        %v2299 = vpop.f32.mrb[0].mxu0
        %v2300 = vadd.f32 0.0, %v2299
        %2301 = vmatprep.mubr.f32.mxu0 0.0
        %2302 = vmatmul.mubr.f32.gmra.mrb[0].mxu0 %v2223
        %v2303 = vpop.f32.mrb[0].mxu0
        %v2304 = vadd.f32 0.0, %v2303
        %v2305 = vpop.f32.mrb[0].mxu0
        %v2306 = vadd.f32 0.0, %v2305
        %2307 = vmatprep.mubr.f32.mxu0 0.0
        %2308 = vmatmul.mubr.f32.gmra.mrb[0].mxu0 %v2226
        %v2309 = vpop.f32.mrb[0].mxu0
        %v2310 = vadd.f32 0.0, %v2309
        %v2311 = vpop.f32.mrb[0].mxu0
        %v2312 = vadd.f32 0.0, %v2311
        %2313 = vmatprep.mubr.f32.mxu0 0.0
        %2314 = vmatmul.mubr.f32.gmra.mrb[0].mxu0 %v2229
        %v2315 = vpop.f32.mrb[0].mxu0
        %v2316 = vadd.f32 0.0, %v2315
        %v2317 = vpop.f32.mrb[0].mxu0
        %v2318 = vadd.f32 0.0, %v2317
        %2319 = vdwg.mxu0
        %v2320 = vadd.f32 %v2198, %v2298
        %v2321 = vadd.f32 %v2199, %v2300
        %v2322 = vadd.f32 %v2200, %v2304
        %v2323 = vadd.f32 %v2201, %v2306
        %v2324 = vadd.f32 %v2202, %v2310
        %v2325 = vadd.f32 %v2203, %v2312
        %v2326 = vadd.f32 %v2204, %v2316
        %v2327 = vadd.f32 %v2205, %v2318
        %v2328 = vld [vmem:[%s2] sm:$0x3]
        %v2330 = vlaneseq
        %v2331 = vshrl.u32 %v2330, 7
        %v2332 = vsub.s32 0, %v2331
        %v2333 = vrot.slane %v2328, %v2332
        %v2334 = vlaneseq
        %v2335 = vshrl.u32 %v2334, 7
        %v2336 = vsub.s32 1, %v2335
        %v2337 = vrot.slane %v2328, %v2336
        %v2340 = vadd.f32 %v2320, %v2333
        %v2341 = vadd.f32 %v2321, %v2337
        %v2342 = vadd.f32 %v2322, %v2333
        %v2343 = vadd.f32 %v2323, %v2337
        %v2344 = vadd.f32 %v2324, %v2333
        %v2345 = vadd.f32 %v2325, %v2337
        %v2346 = vadd.f32 %v2326, %v2333
        %v2347 = vadd.f32 %v2327, %v2337
        %v2348 = vmax.f32 %v2340, 0.0
        %v2349 = vmax.f32 %v2341, 0.0
        %v2350 = vmax.f32 %v2342, 0.0
        %v2351 = vmax.f32 %v2343, 0.0
        %v2352 = vmax.f32 %v2344, 0.0
        %v2353 = vmax.f32 %v2345, 0.0
        %v2354 = vmax.f32 %v2346, 0.0
        %v2355 = vmax.f32 %v2347, 0.0
        %v2356 = vld [vmem:[%s3] sm:$0xff]
        %v2357 = vld [vmem:[%s3 + $0x8] sm:$0x3f]
        %vm2358 = vcmask 228352
        %v2360 = vsel %vm2358, %v2356, 0
        %v2363 = vsel %vm2358, %v2357, 0
        %vm2365 = vcmask 1043456
        %v2367 = vsel %vm2365, %v2354, 0
        %v2370 = vsel %vm2365, %v2355, 0
        %2372 = vmatprep.subr.mxu0 %v2349
        %2373 = vmatpush1.msra.mxu0 %v2348
        %2374 = vmatprep.subr.mxu0 %v2351
        %2375 = vmatpush1.msra.mxu0 %v2350
        %2376 = vmatprep.subr.mxu0 %v2353
        %2377 = vmatpush1.msra.mxu0 %v2352
        %2378 = vmatprep.subr.mxu0 %v2370
        %2379 = vmatpush1.msra.mxu0 %v2367
        %2380 = vmatprep.subr.mxu0 0.0
        %2381 = vmatpush1.msra.mxu0 0.0
        %2382 = vmatprep.subr.mxu0 0.0
        %2383 = vmatpush1.msra.mxu0 0.0
        %2384 = vmatprep.subr.mxu0 0.0
        %2385 = vmatpush1.msra.mxu0 0.0
        %2386 = vmatprep.subr.mxu0 0.0
        %2387 = vmatpush1.msra.mxu0 0.0
        %2388 = vmatprep.subr.mxu0 0.0
        %2389 = vmatpush1.msra.mxu0 0.0
        %2390 = vmatprep.subr.mxu0 0.0
        %2391 = vmatpush1.msra.mxu0 0.0
        %2392 = vmatprep.subr.mxu0 0.0
        %2393 = vmatpush1.msra.mxu0 0.0
        %2394 = vmatprep.subr.mxu0 0.0
        %2395 = vmatpush1.msra.mxu0 0.0
        %2396 = vmatprep.subr.mxu0 0.0
        %2397 = vmatpush1.msra.mxu0 0.0
        %2398 = vmatprep.subr.mxu0 0.0
        %2399 = vmatpush1.msra.mxu0 0.0
        %2400 = vmatprep.subr.mxu0 0.0
        %2401 = vmatpush1.msra.mxu0 0.0
        %2402 = vmatprep.subr.mxu0 0.0
        %2403 = vmatpush1.msra.mxu0 0.0
        %2404 = vmatprep.subr.mxu0 0.0
        %2405 = vmatpush1.msra.mxu0 0.0
        %2406 = vmatprep.subr.mxu0 0.0
        %2407 = vmatpush1.msra.mxu0 0.0
        %2408 = vmatprep.subr.mxu0 0.0
        %2409 = vmatpush1.msra.mxu0 0.0
        %2410 = vmatprep.subr.mxu0 0.0
        %2411 = vmatpush1.msra.mxu0 0.0
        %2412 = vmatprep.subr.mxu0 0.0
        %2413 = vmatpush1.msra.mxu0 0.0
        %2414 = vmatprep.subr.mxu0 0.0
        %2415 = vmatpush1.msra.mxu0 0.0
        %2416 = vmatprep.subr.mxu0 0.0
        %2417 = vmatpush1.msra.mxu0 0.0
        %2418 = vmatprep.subr.mxu0 0.0
        %2419 = vmatpush1.msra.mxu0 0.0
        %2420 = vmatprep.subr.mxu0 0.0
        %2421 = vmatpush1.msra.mxu0 0.0
        %2422 = vmatprep.subr.mxu0 0.0
        %2423 = vmatpush1.msra.mxu0 0.0
        %2424 = vmatprep.subr.mxu0 0.0
        %2425 = vmatpush1.msra.mxu0 0.0
        %2426 = vmatprep.subr.mxu0 0.0
        %2427 = vmatpush1.msra.mxu0 0.0
        %2428 = vmatprep.subr.mxu0 0.0
        %2429 = vmatpush1.msra.mxu0 0.0
        %2430 = vmatprep.subr.mxu0 0.0
        %2431 = vmatpush1.msra.mxu0 0.0
        %2432 = vmatprep.subr.mxu0 0.0
        %2433 = vmatpush1.msra.mxu0 0.0
        %2434 = vmatprep.subr.mxu0 0.0
        %2435 = vmatpush1.msra.mxu0 0.0
        %2436 = vmatprep.mubr.f32.mxu0 0.0
        %2437 = vmatmul.mubr.f32.gmra.mrb[0].mxu0 %v2360
        %v2438 = vpop.f32.mrb[0].mxu0
        %v2439 = vadd.f32 0.0, %v2438
        %v2440 = vpop.f32.mrb[0].mxu0
        %v2441 = vadd.f32 0.0, %v2440
        %2442 = vmatprep.mubr.f32.mxu0 0.0
        %2443 = vmatmul.mubr.f32.gmra.mrb[0].mxu0 %v2363
        %v2444 = vpop.f32.mrb[0].mxu0
        %v2445 = vadd.f32 0.0, %v2444
        %v2446 = vpop.f32.mrb[0].mxu0
        %v2447 = vadd.f32 0.0, %v2446
        %2448 = vdwg.mxu0
        %s2449 = scalar_lea.vmem %s3, 16
        %v2450 = vld [vmem:[%s2449] sm:$0xff]
        %v2451 = vld [vmem:[%s2449 + $0x8] sm:$0x3f]
        %v2453 = vsel %vm2358, %v2450, 0
        %v2456 = vsel %vm2358, %v2451, 0
        %2458 = vmatprep.subr.mxu0 %v2349
        %2459 = vmatpush1.msra.mxu0 %v2348
        %2460 = vmatprep.subr.mxu0 %v2351
        %2461 = vmatpush1.msra.mxu0 %v2350
        %2462 = vmatprep.subr.mxu0 %v2353
        %2463 = vmatpush1.msra.mxu0 %v2352
        %2464 = vmatprep.subr.mxu0 %v2370
        %2465 = vmatpush1.msra.mxu0 %v2367
        %2466 = vmatprep.subr.mxu0 0.0
        %2467 = vmatpush1.msra.mxu0 0.0
        %2468 = vmatprep.subr.mxu0 0.0
        %2469 = vmatpush1.msra.mxu0 0.0
        %2470 = vmatprep.subr.mxu0 0.0
        %2471 = vmatpush1.msra.mxu0 0.0
        %2472 = vmatprep.subr.mxu0 0.0
        %2473 = vmatpush1.msra.mxu0 0.0
        %2474 = vmatprep.subr.mxu0 0.0
        %2475 = vmatpush1.msra.mxu0 0.0
        %2476 = vmatprep.subr.mxu0 0.0
        %2477 = vmatpush1.msra.mxu0 0.0
        %2478 = vmatprep.subr.mxu0 0.0
        %2479 = vmatpush1.msra.mxu0 0.0
        %2480 = vmatprep.subr.mxu0 0.0
        %2481 = vmatpush1.msra.mxu0 0.0
        %2482 = vmatprep.subr.mxu0 0.0
        %2483 = vmatpush1.msra.mxu0 0.0
        %2484 = vmatprep.subr.mxu0 0.0
        %2485 = vmatpush1.msra.mxu0 0.0
        %2486 = vmatprep.subr.mxu0 0.0
        %2487 = vmatpush1.msra.mxu0 0.0
        %2488 = vmatprep.subr.mxu0 0.0
        %2489 = vmatpush1.msra.mxu0 0.0
        %2490 = vmatprep.subr.mxu0 0.0
        %2491 = vmatpush1.msra.mxu0 0.0
        %2492 = vmatprep.subr.mxu0 0.0
        %2493 = vmatpush1.msra.mxu0 0.0
        %2494 = vmatprep.subr.mxu0 0.0
        %2495 = vmatpush1.msra.mxu0 0.0
        %2496 = vmatprep.subr.mxu0 0.0
        %2497 = vmatpush1.msra.mxu0 0.0
        %2498 = vmatprep.subr.mxu0 0.0
        %2499 = vmatpush1.msra.mxu0 0.0
        %2500 = vmatprep.subr.mxu0 0.0
        %2501 = vmatpush1.msra.mxu0 0.0
        %2502 = vmatprep.subr.mxu0 0.0
        %2503 = vmatpush1.msra.mxu0 0.0
        %2504 = vmatprep.subr.mxu0 0.0
        %2505 = vmatpush1.msra.mxu0 0.0
        %2506 = vmatprep.subr.mxu0 0.0
        %2507 = vmatpush1.msra.mxu0 0.0
        %2508 = vmatprep.subr.mxu0 0.0
        %2509 = vmatpush1.msra.mxu0 0.0
        %2510 = vmatprep.subr.mxu0 0.0
        %2511 = vmatpush1.msra.mxu0 0.0
        %2512 = vmatprep.subr.mxu0 0.0
        %2513 = vmatpush1.msra.mxu0 0.0
        %2514 = vmatprep.subr.mxu0 0.0
        %2515 = vmatpush1.msra.mxu0 0.0
        %2516 = vmatprep.subr.mxu0 0.0
        %2517 = vmatpush1.msra.mxu0 0.0
        %2518 = vmatprep.subr.mxu0 0.0
        %2519 = vmatpush1.msra.mxu0 0.0
        %2520 = vmatprep.subr.mxu0 0.0
        %2521 = vmatpush1.msra.mxu0 0.0
        %2522 = vmatprep.mubr.f32.mxu0 0.0
        %2523 = vmatmul.mubr.f32.gmra.mrb[0].mxu0 %v2453
        %v2524 = vpop.f32.mrb[0].mxu0
        %v2525 = vadd.f32 0.0, %v2524
        %v2526 = vpop.f32.mrb[0].mxu0
        %v2527 = vadd.f32 0.0, %v2526
        %2528 = vmatprep.mubr.f32.mxu0 0.0
        %2529 = vmatmul.mubr.f32.gmra.mrb[0].mxu0 %v2456
        %v2530 = vpop.f32.mrb[0].mxu0
        %v2531 = vadd.f32 0.0, %v2530
        %v2532 = vpop.f32.mrb[0].mxu0
        %v2533 = vadd.f32 0.0, %v2532
        %2534 = vdwg.mxu0
        %v2535 = vld [vmem:[%s4] sm:$0xff]
        %v2536 = vld [vmem:[%s4 + $0x8] sm:$0xff]
        %v2537 = vld [vmem:[%s4 + $0x10] sm:$0xff]
        %v2538 = vld [vmem:[%s4 + $0x18] sm:$0xff]
        %v2539 = vld [vmem:[%s4 + $0x20] sm:$0xff]
        %v2540 = vld [vmem:[%s4 + $0x28] sm:$0xff]
        %v2541 = vld [vmem:[%s4 + $0x30] sm:$0xff]
        %v2542 = vld [vmem:[%s4 + $0x38] sm:$0xff]
        %v2543 = vld [vmem:[%s4 + $0x40] sm:$0xff]
        %v2544 = vld [vmem:[%s4 + $0x48] sm:$0xff]
        %v2545 = vld [vmem:[%s4 + $0x50] sm:$0xff]
        %v2546 = vld [vmem:[%s4 + $0x58] sm:$0xff]
        %v2547 = vld [vmem:[%s4 + $0x60] sm:$0xff]
        %v2548 = vld [vmem:[%s4 + $0x68] sm:$0xff]
        %v2549 = vld [vmem:[%s4 + $0x70] sm:$0xff]
        %v2550 = vld [vmem:[%s4 + $0x78] sm:$0xff]
        %v2551 = vld [vmem:[%s4 + $0x80] sm:$0xff]
        %v2552 = vld [vmem:[%s4 + $0x88] sm:$0xff]
        %v2553 = vld [vmem:[%s4 + $0x90] sm:$0xff]
        %v2554 = vld [vmem:[%s4 + $0x98] sm:$0xff]
        %v2555 = vld [vmem:[%s4 + $0xa0] sm:$0xff]
        %vm2556 = vcmask 326656
        %v2558 = vsel %vm2556, %v2441, 0
        %v2561 = vsel %vm2556, %v2447, 0
        %2563 = vmatprep.subr.mxu0 0.0
        %2564 = vmatpush1.msra.mxu0 %v2535
        %2565 = vmatprep.subr.mxu0 0.0
        %2566 = vmatpush1.msra.mxu0 %v2536
        %2567 = vmatprep.subr.mxu0 0.0
        %2568 = vmatpush1.msra.mxu0 %v2537
        %2569 = vmatprep.subr.mxu0 0.0
        %2570 = vmatpush1.msra.mxu0 %v2538
        %2571 = vmatprep.subr.mxu0 0.0
        %2572 = vmatpush1.msra.mxu0 %v2539
        %2573 = vmatprep.subr.mxu0 0.0
        %2574 = vmatpush1.msra.mxu0 %v2540
        %2575 = vmatprep.subr.mxu0 0.0
        %2576 = vmatpush1.msra.mxu0 %v2541
        %2577 = vmatprep.subr.mxu0 0.0
        %2578 = vmatpush1.msra.mxu0 %v2542
        %2579 = vmatprep.subr.mxu0 0.0
        %2580 = vmatpush1.msra.mxu0 %v2543
        %2581 = vmatprep.subr.mxu0 0.0
        %2582 = vmatpush1.msra.mxu0 %v2544
        %2583 = vmatprep.subr.mxu0 0.0
        %2584 = vmatpush1.msra.mxu0 %v2545
        %2585 = vmatprep.subr.mxu0 0.0
        %2586 = vmatpush1.msra.mxu0 %v2546
        %2587 = vmatprep.subr.mxu0 0.0
        %2588 = vmatpush1.msra.mxu0 %v2547
        %2589 = vmatprep.subr.mxu0 0.0
        %2590 = vmatpush1.msra.mxu0 %v2548
        %2591 = vmatprep.subr.mxu0 0.0
        %2592 = vmatpush1.msra.mxu0 %v2549
        %2593 = vmatprep.subr.mxu0 0.0
        %2594 = vmatpush1.msra.mxu0 %v2550
        %2595 = vmatprep.subr.mxu0 0.0
        %2596 = vmatpush1.msra.mxu0 %v2551
        %2597 = vmatprep.subr.mxu0 0.0
        %2598 = vmatpush1.msra.mxu0 %v2552
        %2599 = vmatprep.subr.mxu0 0.0
        %2600 = vmatpush1.msra.mxu0 %v2553
        %2601 = vmatprep.subr.mxu0 0.0
        %2602 = vmatpush1.msra.mxu0 %v2554
        %2603 = vmatprep.subr.mxu0 0.0
        %2604 = vmatpush1.msra.mxu0 %v2555
        %2605 = vmatprep.subr.mxu0 0.0
        %2606 = vmatpush1.msra.mxu0 0.0
        %2607 = vmatprep.subr.mxu0 0.0
        %2608 = vmatpush1.msra.mxu0 0.0
        %2609 = vmatprep.subr.mxu0 0.0
        %2610 = vmatpush1.msra.mxu0 0.0
        %2611 = vmatprep.subr.mxu0 0.0
        %2612 = vmatpush1.msra.mxu0 0.0
        %2613 = vmatprep.subr.mxu0 0.0
        %2614 = vmatpush1.msra.mxu0 0.0
        %2615 = vmatprep.subr.mxu0 0.0
        %2616 = vmatpush1.msra.mxu0 0.0
        %2617 = vmatprep.subr.mxu0 0.0
        %2618 = vmatpush1.msra.mxu0 0.0
        %2619 = vmatprep.subr.mxu0 0.0
        %2620 = vmatpush1.msra.mxu0 0.0
        %2621 = vmatprep.subr.mxu0 0.0
        %2622 = vmatpush1.msra.mxu0 0.0
        %2623 = vmatprep.subr.mxu0 0.0
        %2624 = vmatpush1.msra.mxu0 0.0
        %2625 = vmatprep.subr.mxu0 0.0
        %2626 = vmatpush1.msra.mxu0 0.0
        %2627 = vmatprep.mubr.f32.mxu0 %v2558
        %2628 = vmatmul.mubr.f32.gmra.mrb[0].mxu0 %v2439
        %v2629 = vpop.f32.mrb[0].mxu0
        %v2630 = vadd.f32 0.0, %v2629
        %v2631 = vpop.f32.mrb[0].mxu0
        %2632 = vmatprep.mubr.f32.mxu0 %v2561
        %2633 = vmatmul.mubr.f32.gmra.mrb[0].mxu0 %v2445
        %v2634 = vpop.f32.mrb[0].mxu0
        %v2635 = vadd.f32 0.0, %v2634
        %v2636 = vpop.f32.mrb[0].mxu0
        %2637 = vdwg.mxu0
        %s2638 = scalar_lea.vmem %s4, 168
        %v2639 = vld [vmem:[%s2638] sm:$0xff]
        %v2640 = vld [vmem:[%s2638 + $0x8] sm:$0xff]
        %v2641 = vld [vmem:[%s2638 + $0x10] sm:$0xff]
        %v2642 = vld [vmem:[%s2638 + $0x18] sm:$0xff]
        %v2643 = vld [vmem:[%s2638 + $0x20] sm:$0xff]
        %v2644 = vld [vmem:[%s2638 + $0x28] sm:$0xff]
        %v2645 = vld [vmem:[%s2638 + $0x30] sm:$0xff]
        %v2646 = vld [vmem:[%s2638 + $0x38] sm:$0xff]
        %v2647 = vld [vmem:[%s2638 + $0x40] sm:$0xff]
        %v2648 = vld [vmem:[%s2638 + $0x48] sm:$0xff]
        %v2649 = vld [vmem:[%s2638 + $0x50] sm:$0xff]
        %v2650 = vld [vmem:[%s2638 + $0x58] sm:$0xff]
        %v2651 = vld [vmem:[%s2638 + $0x60] sm:$0xff]
        %v2652 = vld [vmem:[%s2638 + $0x68] sm:$0xff]
        %v2653 = vld [vmem:[%s2638 + $0x70] sm:$0xff]
        %v2654 = vld [vmem:[%s2638 + $0x78] sm:$0xff]
        %v2655 = vld [vmem:[%s2638 + $0x80] sm:$0xff]
        %v2656 = vld [vmem:[%s2638 + $0x88] sm:$0xff]
        %v2657 = vld [vmem:[%s2638 + $0x90] sm:$0xff]
        %v2658 = vld [vmem:[%s2638 + $0x98] sm:$0xff]
        %v2659 = vld [vmem:[%s2638 + $0xa0] sm:$0xff]
        %2660 = vmatprep.subr.mxu0 0.0
        %2661 = vmatpush1.msra.mxu0 %v2639
        %2662 = vmatprep.subr.mxu0 0.0
        %2663 = vmatpush1.msra.mxu0 %v2640
        %2664 = vmatprep.subr.mxu0 0.0
        %2665 = vmatpush1.msra.mxu0 %v2641
        %2666 = vmatprep.subr.mxu0 0.0
        %2667 = vmatpush1.msra.mxu0 %v2642
        %2668 = vmatprep.subr.mxu0 0.0
        %2669 = vmatpush1.msra.mxu0 %v2643
        %2670 = vmatprep.subr.mxu0 0.0
        %2671 = vmatpush1.msra.mxu0 %v2644
        %2672 = vmatprep.subr.mxu0 0.0
        %2673 = vmatpush1.msra.mxu0 %v2645
        %2674 = vmatprep.subr.mxu0 0.0
        %2675 = vmatpush1.msra.mxu0 %v2646
        %2676 = vmatprep.subr.mxu0 0.0
        %2677 = vmatpush1.msra.mxu0 %v2647
        %2678 = vmatprep.subr.mxu0 0.0
        %2679 = vmatpush1.msra.mxu0 %v2648
        %2680 = vmatprep.subr.mxu0 0.0
        %2681 = vmatpush1.msra.mxu0 %v2649
        %2682 = vmatprep.subr.mxu0 0.0
        %2683 = vmatpush1.msra.mxu0 %v2650
        %2684 = vmatprep.subr.mxu0 0.0
        %2685 = vmatpush1.msra.mxu0 %v2651
        %2686 = vmatprep.subr.mxu0 0.0
        %2687 = vmatpush1.msra.mxu0 %v2652
        %2688 = vmatprep.subr.mxu0 0.0
        %2689 = vmatpush1.msra.mxu0 %v2653
        %2690 = vmatprep.subr.mxu0 0.0
        %2691 = vmatpush1.msra.mxu0 %v2654
        %2692 = vmatprep.subr.mxu0 0.0
        %2693 = vmatpush1.msra.mxu0 %v2655
        %2694 = vmatprep.subr.mxu0 0.0
        %2695 = vmatpush1.msra.mxu0 %v2656
        %2696 = vmatprep.subr.mxu0 0.0
        %2697 = vmatpush1.msra.mxu0 %v2657
        %2698 = vmatprep.subr.mxu0 0.0
        %2699 = vmatpush1.msra.mxu0 %v2658
        %2700 = vmatprep.subr.mxu0 0.0
        %2701 = vmatpush1.msra.mxu0 %v2659
        %2702 = vmatprep.subr.mxu0 0.0
        %2703 = vmatpush1.msra.mxu0 0.0
        %2704 = vmatprep.subr.mxu0 0.0
        %2705 = vmatpush1.msra.mxu0 0.0
        %2706 = vmatprep.subr.mxu0 0.0
        %2707 = vmatpush1.msra.mxu0 0.0
        %2708 = vmatprep.subr.mxu0 0.0
        %2709 = vmatpush1.msra.mxu0 0.0
        %2710 = vmatprep.subr.mxu0 0.0
        %2711 = vmatpush1.msra.mxu0 0.0
        %2712 = vmatprep.subr.mxu0 0.0
        %2713 = vmatpush1.msra.mxu0 0.0
        %2714 = vmatprep.subr.mxu0 0.0
        %2715 = vmatpush1.msra.mxu0 0.0
        %2716 = vmatprep.subr.mxu0 0.0
        %2717 = vmatpush1.msra.mxu0 0.0
        %2718 = vmatprep.subr.mxu0 0.0
        %2719 = vmatpush1.msra.mxu0 0.0
        %2720 = vmatprep.subr.mxu0 0.0
        %2721 = vmatpush1.msra.mxu0 0.0
        %2722 = vmatprep.subr.mxu0 0.0
        %2723 = vmatpush1.msra.mxu0 0.0
        %2724 = vmatprep.mubr.f32.mxu0 %v2558
        %2725 = vmatmul.mubr.f32.gmra.mrb[0].mxu0 %v2439
        %v2726 = vpop.f32.mrb[0].mxu0
        %v2727 = vadd.f32 0.0, %v2726
        %v2728 = vpop.f32.mrb[0].mxu0
        %2729 = vmatprep.mubr.f32.mxu0 %v2561
        %2730 = vmatmul.mubr.f32.gmra.mrb[0].mxu0 %v2445
        %v2731 = vpop.f32.mrb[0].mxu0
        %v2732 = vadd.f32 0.0, %v2731
        %v2733 = vpop.f32.mrb[0].mxu0
        %2734 = vdwg.mxu0
        %v2735 = vmax.f32 %v2630, %v2727
        %v2736 = vmax.f32 %v2635, %v2732
        %v2738 = vsel %vm2556, %v2527, 0
        %v2741 = vsel %vm2556, %v2533, 0
        %2743 = vmatprep.subr.mxu0 0.0
        %2744 = vmatpush1.msra.mxu0 %v2535
        %2745 = vmatprep.subr.mxu0 0.0
        %2746 = vmatpush1.msra.mxu0 %v2536
        %2747 = vmatprep.subr.mxu0 0.0
        %2748 = vmatpush1.msra.mxu0 %v2537
        %2749 = vmatprep.subr.mxu0 0.0
        %2750 = vmatpush1.msra.mxu0 %v2538
        %2751 = vmatprep.subr.mxu0 0.0
        %2752 = vmatpush1.msra.mxu0 %v2539
        %2753 = vmatprep.subr.mxu0 0.0
        %2754 = vmatpush1.msra.mxu0 %v2540
        %2755 = vmatprep.subr.mxu0 0.0
        %2756 = vmatpush1.msra.mxu0 %v2541
        %2757 = vmatprep.subr.mxu0 0.0
        %2758 = vmatpush1.msra.mxu0 %v2542
        %2759 = vmatprep.subr.mxu0 0.0
        %2760 = vmatpush1.msra.mxu0 %v2543
        %2761 = vmatprep.subr.mxu0 0.0
        %2762 = vmatpush1.msra.mxu0 %v2544
        %2763 = vmatprep.subr.mxu0 0.0
        %2764 = vmatpush1.msra.mxu0 %v2545
        %2765 = vmatprep.subr.mxu0 0.0
        %2766 = vmatpush1.msra.mxu0 %v2546
        %2767 = vmatprep.subr.mxu0 0.0
        %2768 = vmatpush1.msra.mxu0 %v2547
        %2769 = vmatprep.subr.mxu0 0.0
        %2770 = vmatpush1.msra.mxu0 %v2548
        %2771 = vmatprep.subr.mxu0 0.0
        %2772 = vmatpush1.msra.mxu0 %v2549
        %2773 = vmatprep.subr.mxu0 0.0
        %2774 = vmatpush1.msra.mxu0 %v2550
        %2775 = vmatprep.subr.mxu0 0.0
        %2776 = vmatpush1.msra.mxu0 %v2551
        %2777 = vmatprep.subr.mxu0 0.0
        %2778 = vmatpush1.msra.mxu0 %v2552
        %2779 = vmatprep.subr.mxu0 0.0
        %2780 = vmatpush1.msra.mxu0 %v2553
        %2781 = vmatprep.subr.mxu0 0.0
        %2782 = vmatpush1.msra.mxu0 %v2554
        %2783 = vmatprep.subr.mxu0 0.0
        %2784 = vmatpush1.msra.mxu0 %v2555
        %2785 = vmatprep.subr.mxu0 0.0
        %2786 = vmatpush1.msra.mxu0 0.0
        %2787 = vmatprep.subr.mxu0 0.0
        %2788 = vmatpush1.msra.mxu0 0.0
        %2789 = vmatprep.subr.mxu0 0.0
        %2790 = vmatpush1.msra.mxu0 0.0
        %2791 = vmatprep.subr.mxu0 0.0
        %2792 = vmatpush1.msra.mxu0 0.0
        %2793 = vmatprep.subr.mxu0 0.0
        %2794 = vmatpush1.msra.mxu0 0.0
        %2795 = vmatprep.subr.mxu0 0.0
        %2796 = vmatpush1.msra.mxu0 0.0
        %2797 = vmatprep.subr.mxu0 0.0
        %2798 = vmatpush1.msra.mxu0 0.0
        %2799 = vmatprep.subr.mxu0 0.0
        %2800 = vmatpush1.msra.mxu0 0.0
        %2801 = vmatprep.subr.mxu0 0.0
        %2802 = vmatpush1.msra.mxu0 0.0
        %2803 = vmatprep.subr.mxu0 0.0
        %2804 = vmatpush1.msra.mxu0 0.0
        %2805 = vmatprep.subr.mxu0 0.0
        %2806 = vmatpush1.msra.mxu0 0.0
        %2807 = vmatprep.mubr.f32.mxu0 %v2738
        %2808 = vmatmul.mubr.f32.gmra.mrb[0].mxu0 %v2525
        %v2809 = vpop.f32.mrb[0].mxu0
        %v2810 = vadd.f32 0.0, %v2809
        %v2811 = vpop.f32.mrb[0].mxu0
        %2812 = vmatprep.mubr.f32.mxu0 %v2741
        %2813 = vmatmul.mubr.f32.gmra.mrb[0].mxu0 %v2531
        %v2814 = vpop.f32.mrb[0].mxu0
        %v2815 = vadd.f32 0.0, %v2814
        %v2816 = vpop.f32.mrb[0].mxu0
        %2817 = vdwg.mxu0
        %2818 = vmatprep.subr.mxu0 0.0
        %2819 = vmatpush1.msra.mxu0 %v2639
        %2820 = vmatprep.subr.mxu0 0.0
        %2821 = vmatpush1.msra.mxu0 %v2640
        %2822 = vmatprep.subr.mxu0 0.0
        %2823 = vmatpush1.msra.mxu0 %v2641
        %2824 = vmatprep.subr.mxu0 0.0
        %2825 = vmatpush1.msra.mxu0 %v2642
        %2826 = vmatprep.subr.mxu0 0.0
        %2827 = vmatpush1.msra.mxu0 %v2643
        %2828 = vmatprep.subr.mxu0 0.0
        %2829 = vmatpush1.msra.mxu0 %v2644
        %2830 = vmatprep.subr.mxu0 0.0
        %2831 = vmatpush1.msra.mxu0 %v2645
        %2832 = vmatprep.subr.mxu0 0.0
        %2833 = vmatpush1.msra.mxu0 %v2646
        %2834 = vmatprep.subr.mxu0 0.0
        %2835 = vmatpush1.msra.mxu0 %v2647
        %2836 = vmatprep.subr.mxu0 0.0
        %2837 = vmatpush1.msra.mxu0 %v2648
        %2838 = vmatprep.subr.mxu0 0.0
        %2839 = vmatpush1.msra.mxu0 %v2649
        %2840 = vmatprep.subr.mxu0 0.0
        %2841 = vmatpush1.msra.mxu0 %v2650
        %2842 = vmatprep.subr.mxu0 0.0
        %2843 = vmatpush1.msra.mxu0 %v2651
        %2844 = vmatprep.subr.mxu0 0.0
        %2845 = vmatpush1.msra.mxu0 %v2652
        %2846 = vmatprep.subr.mxu0 0.0
        %2847 = vmatpush1.msra.mxu0 %v2653
        %2848 = vmatprep.subr.mxu0 0.0
        %2849 = vmatpush1.msra.mxu0 %v2654
        %2850 = vmatprep.subr.mxu0 0.0
        %2851 = vmatpush1.msra.mxu0 %v2655
        %2852 = vmatprep.subr.mxu0 0.0
        %2853 = vmatpush1.msra.mxu0 %v2656
        %2854 = vmatprep.subr.mxu0 0.0
        %2855 = vmatpush1.msra.mxu0 %v2657
        %2856 = vmatprep.subr.mxu0 0.0
        %2857 = vmatpush1.msra.mxu0 %v2658
        %2858 = vmatprep.subr.mxu0 0.0
        %2859 = vmatpush1.msra.mxu0 %v2659
        %2860 = vmatprep.subr.mxu0 0.0
        %2861 = vmatpush1.msra.mxu0 0.0
        %2862 = vmatprep.subr.mxu0 0.0
        %2863 = vmatpush1.msra.mxu0 0.0
        %2864 = vmatprep.subr.mxu0 0.0
        %2865 = vmatpush1.msra.mxu0 0.0
        %2866 = vmatprep.subr.mxu0 0.0
        %2867 = vmatpush1.msra.mxu0 0.0
        %2868 = vmatprep.subr.mxu0 0.0
        %2869 = vmatpush1.msra.mxu0 0.0
        %2870 = vmatprep.subr.mxu0 0.0
        %2871 = vmatpush1.msra.mxu0 0.0
        %2872 = vmatprep.subr.mxu0 0.0
        %2873 = vmatpush1.msra.mxu0 0.0
        %2874 = vmatprep.subr.mxu0 0.0
        %2875 = vmatpush1.msra.mxu0 0.0
        %2876 = vmatprep.subr.mxu0 0.0
        %2877 = vmatpush1.msra.mxu0 0.0
        %2878 = vmatprep.subr.mxu0 0.0
        %2879 = vmatpush1.msra.mxu0 0.0
        %2880 = vmatprep.subr.mxu0 0.0
        %2881 = vmatpush1.msra.mxu0 0.0
        %2882 = vmatprep.mubr.f32.mxu0 %v2738
        %2883 = vmatmul.mubr.f32.gmra.mrb[0].mxu0 %v2525
        %v2884 = vpop.f32.mrb[0].mxu0
        %v2885 = vadd.f32 0.0, %v2884
        %v2886 = vpop.f32.mrb[0].mxu0
        %2887 = vmatprep.mubr.f32.mxu0 %v2741
        %2888 = vmatmul.mubr.f32.gmra.mrb[0].mxu0 %v2531
        %v2889 = vpop.f32.mrb[0].mxu0
        %v2890 = vadd.f32 0.0, %v2889
        %v2891 = vpop.f32.mrb[0].mxu0
        %2892 = vdwg.mxu0
        %v2893 = vmax.f32 %v2810, %v2885
        %v2894 = vmax.f32 %v2815, %v2890
        %v2895 = vmax.f32 %v2735, %v2893
        %v2896 = vmax.f32 %v2736, %v2894
        %vm2897 = vcmask 687104
        %2898 = vst.msk [vmem:[#allocation2] sm:$0xff] %vm2897, %v2895
        %vm2899 = vcmask 685056
        %2900 = vst.msk [vmem:[#allocation2 + $0x8] sm:$0x3f] %vm2899, %v2896
        %v2901 = vld [vmem:[#allocation2] sm:$0xff]
        %v2902 = vld [vmem:[#allocation2 + $0x8] sm:$0x3]
        %v2903 = vld [vmem:[%s5] sm:$0xff]
        %v2904 = vld [vmem:[%s5 + $0x8] sm:$0xff]
        %v2905 = vld [vmem:[%s5 + $0x10] sm:$0xff]
        %v2906 = vld [vmem:[%s5 + $0x18] sm:$0xff]
        %v2907 = vld [vmem:[%s5 + $0x20] sm:$0xff]
        %v2908 = vld [vmem:[%s5 + $0x28] sm:$0xff]
        %v2909 = vld [vmem:[%s5 + $0x30] sm:$0xff]
        %v2910 = vld [vmem:[%s5 + $0x38] sm:$0xff]
        %v2911 = vld [vmem:[%s5 + $0x40] sm:$0xff]
        %v2912 = vld [vmem:[%s5 + $0x48] sm:$0xff]
        %v2913 = vld [vmem:[%s5 + $0x50] sm:$0xff]
        %v2914 = vld [vmem:[%s5 + $0x58] sm:$0xff]
        %v2915 = vld [vmem:[%s5 + $0x60] sm:$0xff]
        %v2916 = vld [vmem:[%s5 + $0x68] sm:$0xff]
        %v2917 = vld [vmem:[%s5 + $0x70] sm:$0xff]
        %v2918 = vld [vmem:[%s5 + $0x78] sm:$0xff]
        %v2919 = vld [vmem:[%s5 + $0x80] sm:$0xff]
        %v2920 = vld [vmem:[%s5 + $0x88] sm:$0xff]
        %v2921 = vld [vmem:[%s5 + $0x90] sm:$0xff]
        %v2922 = vld [vmem:[%s5 + $0x98] sm:$0xff]
        %v2923 = vld [vmem:[%s5 + $0xa0] sm:$0xf]
        %v2924 = vld [vmem:[%s5 + $0xa8] sm:$0xf]
        %v2925 = vld [vmem:[#allocation2 + $0x1] sm:$0xff]
        %v2926 = vld [vmem:[#allocation2 + $0x9] sm:$0x3]
        %s2927 = scalar_lea.vmem %s5, 176
        %v2928 = vld [vmem:[%s2927] sm:$0xff]
        %v2929 = vld [vmem:[%s2927 + $0x8] sm:$0xff]
        %v2930 = vld [vmem:[%s2927 + $0x10] sm:$0xff]
        %v2931 = vld [vmem:[%s2927 + $0x18] sm:$0xff]
        %v2932 = vld [vmem:[%s2927 + $0x20] sm:$0xff]
        %v2933 = vld [vmem:[%s2927 + $0x28] sm:$0xff]
        %v2934 = vld [vmem:[%s2927 + $0x30] sm:$0xff]
        %v2935 = vld [vmem:[%s2927 + $0x38] sm:$0xff]
        %v2936 = vld [vmem:[%s2927 + $0x40] sm:$0xff]
        %v2937 = vld [vmem:[%s2927 + $0x48] sm:$0xff]
        %v2938 = vld [vmem:[%s2927 + $0x50] sm:$0xff]
        %v2939 = vld [vmem:[%s2927 + $0x58] sm:$0xff]
        %v2940 = vld [vmem:[%s2927 + $0x60] sm:$0xff]
        %v2941 = vld [vmem:[%s2927 + $0x68] sm:$0xff]
        %v2942 = vld [vmem:[%s2927 + $0x70] sm:$0xff]
        %v2943 = vld [vmem:[%s2927 + $0x78] sm:$0xff]
        %v2944 = vld [vmem:[%s2927 + $0x80] sm:$0xff]
        %v2945 = vld [vmem:[%s2927 + $0x88] sm:$0xff]
        %v2946 = vld [vmem:[%s2927 + $0x90] sm:$0xff]
        %v2947 = vld [vmem:[%s2927 + $0x98] sm:$0xff]
        %v2948 = vld [vmem:[%s2927 + $0xa0] sm:$0xf]
        %v2949 = vld [vmem:[%s2927 + $0xa8] sm:$0xf]
        %v2951 = vsel %vm2897, %v2925, 0
        %v2954 = vsel %vm2897, %v2926, 0
        %v2957 = vsel %vm2365, %v2948, 0
        %v2960 = vsel %vm2365, %v2949, 0
        %2962 = vmatprep.subr.mxu0 %v2929
        %2963 = vmatpush1.msra.mxu0 %v2928
        %2964 = vmatprep.subr.mxu0 %v2931
        %2965 = vmatpush1.msra.mxu0 %v2930
        %2966 = vmatprep.subr.mxu0 %v2933
        %2967 = vmatpush1.msra.mxu0 %v2932
        %2968 = vmatprep.subr.mxu0 %v2935
        %2969 = vmatpush1.msra.mxu0 %v2934
        %2970 = vmatprep.subr.mxu0 %v2937
        %2971 = vmatpush1.msra.mxu0 %v2936
        %2972 = vmatprep.subr.mxu0 %v2939
        %2973 = vmatpush1.msra.mxu0 %v2938
        %2974 = vmatprep.subr.mxu0 %v2941
        %2975 = vmatpush1.msra.mxu0 %v2940
        %2976 = vmatprep.subr.mxu0 %v2943
        %2977 = vmatpush1.msra.mxu0 %v2942
        %2978 = vmatprep.subr.mxu0 %v2945
        %2979 = vmatpush1.msra.mxu0 %v2944
        %2980 = vmatprep.subr.mxu0 %v2947
        %2981 = vmatpush1.msra.mxu0 %v2946
        %2982 = vmatprep.subr.mxu0 %v2960
        %2983 = vmatpush1.msra.mxu0 %v2957
        %2984 = vmatprep.subr.mxu0 0.0
        %2985 = vmatpush1.msra.mxu0 0.0
        %2986 = vmatprep.subr.mxu0 0.0
        %2987 = vmatpush1.msra.mxu0 0.0
        %2988 = vmatprep.subr.mxu0 0.0
        %2989 = vmatpush1.msra.mxu0 0.0
        %2990 = vmatprep.subr.mxu0 0.0
        %2991 = vmatpush1.msra.mxu0 0.0
        %2992 = vmatprep.subr.mxu0 0.0
        %2993 = vmatpush1.msra.mxu0 0.0
        %2994 = vmatprep.subr.mxu0 0.0
        %2995 = vmatpush1.msra.mxu0 0.0
        %2996 = vmatprep.subr.mxu0 0.0
        %2997 = vmatpush1.msra.mxu0 0.0
        %2998 = vmatprep.subr.mxu0 0.0
        %2999 = vmatpush1.msra.mxu0 0.0
        %3000 = vmatprep.subr.mxu0 0.0
        %3001 = vmatpush1.msra.mxu0 0.0
        %3002 = vmatprep.subr.mxu0 0.0
        %3003 = vmatpush1.msra.mxu0 0.0
        %3004 = vmatprep.subr.mxu0 0.0
        %3005 = vmatpush1.msra.mxu0 0.0
        %3006 = vmatprep.subr.mxu0 0.0
        %3007 = vmatpush1.msra.mxu0 0.0
        %3008 = vmatprep.subr.mxu0 0.0
        %3009 = vmatpush1.msra.mxu0 0.0
        %3010 = vmatprep.subr.mxu0 0.0
        %3011 = vmatpush1.msra.mxu0 0.0
        %3012 = vmatprep.subr.mxu0 0.0
        %3013 = vmatpush1.msra.mxu0 0.0
        %3014 = vmatprep.subr.mxu0 0.0
        %3015 = vmatpush1.msra.mxu0 0.0
        %3016 = vmatprep.subr.mxu0 0.0
        %3017 = vmatpush1.msra.mxu0 0.0
        %3018 = vmatprep.subr.mxu0 0.0
        %3019 = vmatpush1.msra.mxu0 0.0
        %3020 = vmatprep.subr.mxu0 0.0
        %3021 = vmatpush1.msra.mxu0 0.0
        %3022 = vmatprep.subr.mxu0 0.0
        %3023 = vmatpush1.msra.mxu0 0.0
        %3024 = vmatprep.subr.mxu0 0.0
        %3025 = vmatpush1.msra.mxu0 0.0
        %3026 = vmatprep.mubr.f32.mxu0 0.0
        %3027 = vmatmul.mubr.f32.gmra.mrb[0].mxu0 %v2951
        %v3028 = vpop.f32.mrb[0].mxu0
        %v3029 = vadd.f32 0.0, %v3028
        %v3030 = vpop.f32.mrb[0].mxu0
        %v3031 = vadd.f32 0.0, %v3030
        %3032 = vmatprep.mubr.f32.mxu0 0.0
        %3033 = vmatmul.mubr.f32.gmra.mrb[0].mxu0 %v2954
        %v3034 = vpop.f32.mrb[0].mxu0
        %v3035 = vadd.f32 0.0, %v3034
        %v3036 = vpop.f32.mrb[0].mxu0
        %v3037 = vadd.f32 0.0, %v3036
        %3038 = vdwg.mxu0
        %v3040 = vsel %vm2897, %v2901, 0
        %v3043 = vsel %vm2897, %v2902, 0
        %v3046 = vsel %vm2365, %v2923, 0
        %v3049 = vsel %vm2365, %v2924, 0
        %3051 = vmatprep.subr.mxu0 %v2904
        %3052 = vmatpush1.msra.mxu0 %v2903
        %3053 = vmatprep.subr.mxu0 %v2906
        %3054 = vmatpush1.msra.mxu0 %v2905
        %3055 = vmatprep.subr.mxu0 %v2908
        %3056 = vmatpush1.msra.mxu0 %v2907
        %3057 = vmatprep.subr.mxu0 %v2910
        %3058 = vmatpush1.msra.mxu0 %v2909
        %3059 = vmatprep.subr.mxu0 %v2912
        %3060 = vmatpush1.msra.mxu0 %v2911
        %3061 = vmatprep.subr.mxu0 %v2914
        %3062 = vmatpush1.msra.mxu0 %v2913
        %3063 = vmatprep.subr.mxu0 %v2916
        %3064 = vmatpush1.msra.mxu0 %v2915
        %3065 = vmatprep.subr.mxu0 %v2918
        %3066 = vmatpush1.msra.mxu0 %v2917
        %3067 = vmatprep.subr.mxu0 %v2920
        %3068 = vmatpush1.msra.mxu0 %v2919
        %3069 = vmatprep.subr.mxu0 %v2922
        %3070 = vmatpush1.msra.mxu0 %v2921
        %3071 = vmatprep.subr.mxu0 %v3049
        %3072 = vmatpush1.msra.mxu0 %v3046
        %3073 = vmatprep.subr.mxu0 0.0
        %3074 = vmatpush1.msra.mxu0 0.0
        %3075 = vmatprep.subr.mxu0 0.0
        %3076 = vmatpush1.msra.mxu0 0.0
        %3077 = vmatprep.subr.mxu0 0.0
        %3078 = vmatpush1.msra.mxu0 0.0
        %3079 = vmatprep.subr.mxu0 0.0
        %3080 = vmatpush1.msra.mxu0 0.0
        %3081 = vmatprep.subr.mxu0 0.0
        %3082 = vmatpush1.msra.mxu0 0.0
        %3083 = vmatprep.subr.mxu0 0.0
        %3084 = vmatpush1.msra.mxu0 0.0
        %3085 = vmatprep.subr.mxu0 0.0
        %3086 = vmatpush1.msra.mxu0 0.0
        %3087 = vmatprep.subr.mxu0 0.0
        %3088 = vmatpush1.msra.mxu0 0.0
        %3089 = vmatprep.subr.mxu0 0.0
        %3090 = vmatpush1.msra.mxu0 0.0
        %3091 = vmatprep.subr.mxu0 0.0
        %3092 = vmatpush1.msra.mxu0 0.0
        %3093 = vmatprep.subr.mxu0 0.0
        %3094 = vmatpush1.msra.mxu0 0.0
        %3095 = vmatprep.subr.mxu0 0.0
        %3096 = vmatpush1.msra.mxu0 0.0
        %3097 = vmatprep.subr.mxu0 0.0
        %3098 = vmatpush1.msra.mxu0 0.0
        %3099 = vmatprep.subr.mxu0 0.0
        %3100 = vmatpush1.msra.mxu0 0.0
        %3101 = vmatprep.subr.mxu0 0.0
        %3102 = vmatpush1.msra.mxu0 0.0
        %3103 = vmatprep.subr.mxu0 0.0
        %3104 = vmatpush1.msra.mxu0 0.0
        %3105 = vmatprep.subr.mxu0 0.0
        %3106 = vmatpush1.msra.mxu0 0.0
        %3107 = vmatprep.subr.mxu0 0.0
        %3108 = vmatpush1.msra.mxu0 0.0
        %3109 = vmatprep.subr.mxu0 0.0
        %3110 = vmatpush1.msra.mxu0 0.0
        %3111 = vmatprep.subr.mxu0 0.0
        %3112 = vmatpush1.msra.mxu0 0.0
        %3113 = vmatprep.subr.mxu0 0.0
        %3114 = vmatpush1.msra.mxu0 0.0
        %3115 = vmatprep.mubr.f32.mxu0 0.0
        %3116 = vmatmul.mubr.f32.gmra.mrb[0].mxu0 %v3040
        %v3117 = vpop.f32.mrb[0].mxu0
        %v3118 = vadd.f32 %v3029, %v3117
        %v3119 = vpop.f32.mrb[0].mxu0
        %v3120 = vadd.f32 %v3031, %v3119
        %3121 = vmatprep.mubr.f32.mxu0 0.0
        %3122 = vmatmul.mubr.f32.gmra.mrb[0].mxu0 %v3043
        %v3123 = vpop.f32.mrb[0].mxu0
        %v3124 = vadd.f32 %v3035, %v3123
        %v3125 = vpop.f32.mrb[0].mxu0
        %v3126 = vadd.f32 %v3037, %v3125
        %3127 = vdwg.mxu0
        %v3128 = vld [vmem:[#allocation2 + $0x2] sm:$0xff]
        %v3129 = vld [vmem:[#allocation2 + $0xa] sm:$0x3]
        %s3130 = scalar_lea.vmem %s5, 352
        %v3131 = vld [vmem:[%s3130] sm:$0xff]
        %v3132 = vld [vmem:[%s3130 + $0x8] sm:$0xff]
        %v3133 = vld [vmem:[%s3130 + $0x10] sm:$0xff]
        %v3134 = vld [vmem:[%s3130 + $0x18] sm:$0xff]
        %v3135 = vld [vmem:[%s3130 + $0x20] sm:$0xff]
        %v3136 = vld [vmem:[%s3130 + $0x28] sm:$0xff]
        %v3137 = vld [vmem:[%s3130 + $0x30] sm:$0xff]
        %v3138 = vld [vmem:[%s3130 + $0x38] sm:$0xff]
        %v3139 = vld [vmem:[%s3130 + $0x40] sm:$0xff]
        %v3140 = vld [vmem:[%s3130 + $0x48] sm:$0xff]
        %v3141 = vld [vmem:[%s3130 + $0x50] sm:$0xff]
        %v3142 = vld [vmem:[%s3130 + $0x58] sm:$0xff]
        %v3143 = vld [vmem:[%s3130 + $0x60] sm:$0xff]
        %v3144 = vld [vmem:[%s3130 + $0x68] sm:$0xff]
        %v3145 = vld [vmem:[%s3130 + $0x70] sm:$0xff]
        %v3146 = vld [vmem:[%s3130 + $0x78] sm:$0xff]
        %v3147 = vld [vmem:[%s3130 + $0x80] sm:$0xff]
        %v3148 = vld [vmem:[%s3130 + $0x88] sm:$0xff]
        %v3149 = vld [vmem:[%s3130 + $0x90] sm:$0xff]
        %v3150 = vld [vmem:[%s3130 + $0x98] sm:$0xff]
        %v3151 = vld [vmem:[%s3130 + $0xa0] sm:$0xf]
        %v3152 = vld [vmem:[%s3130 + $0xa8] sm:$0xf]
        %v3154 = vsel %vm2897, %v3128, 0
        %v3157 = vsel %vm2897, %v3129, 0
        %v3160 = vsel %vm2365, %v3151, 0
        %v3163 = vsel %vm2365, %v3152, 0
        %3165 = vmatprep.subr.mxu0 %v3132
        %3166 = vmatpush1.msra.mxu0 %v3131
        %3167 = vmatprep.subr.mxu0 %v3134
        %3168 = vmatpush1.msra.mxu0 %v3133
        %3169 = vmatprep.subr.mxu0 %v3136
        %3170 = vmatpush1.msra.mxu0 %v3135
        %3171 = vmatprep.subr.mxu0 %v3138
        %3172 = vmatpush1.msra.mxu0 %v3137
        %3173 = vmatprep.subr.mxu0 %v3140
        %3174 = vmatpush1.msra.mxu0 %v3139
        %3175 = vmatprep.subr.mxu0 %v3142
        %3176 = vmatpush1.msra.mxu0 %v3141
        %3177 = vmatprep.subr.mxu0 %v3144
        %3178 = vmatpush1.msra.mxu0 %v3143
        %3179 = vmatprep.subr.mxu0 %v3146
        %3180 = vmatpush1.msra.mxu0 %v3145
        %3181 = vmatprep.subr.mxu0 %v3148
        %3182 = vmatpush1.msra.mxu0 %v3147
        %3183 = vmatprep.subr.mxu0 %v3150
        %3184 = vmatpush1.msra.mxu0 %v3149
        %3185 = vmatprep.subr.mxu0 %v3163
        %3186 = vmatpush1.msra.mxu0 %v3160
        %3187 = vmatprep.subr.mxu0 0.0
        %3188 = vmatpush1.msra.mxu0 0.0
        %3189 = vmatprep.subr.mxu0 0.0
        %3190 = vmatpush1.msra.mxu0 0.0
        %3191 = vmatprep.subr.mxu0 0.0
        %3192 = vmatpush1.msra.mxu0 0.0
        %3193 = vmatprep.subr.mxu0 0.0
        %3194 = vmatpush1.msra.mxu0 0.0
        %3195 = vmatprep.subr.mxu0 0.0
        %3196 = vmatpush1.msra.mxu0 0.0
        %3197 = vmatprep.subr.mxu0 0.0
        %3198 = vmatpush1.msra.mxu0 0.0
        %3199 = vmatprep.subr.mxu0 0.0
        %3200 = vmatpush1.msra.mxu0 0.0
        %3201 = vmatprep.subr.mxu0 0.0
        %3202 = vmatpush1.msra.mxu0 0.0
        %3203 = vmatprep.subr.mxu0 0.0
        %3204 = vmatpush1.msra.mxu0 0.0
        %3205 = vmatprep.subr.mxu0 0.0
        %3206 = vmatpush1.msra.mxu0 0.0
        %3207 = vmatprep.subr.mxu0 0.0
        %3208 = vmatpush1.msra.mxu0 0.0
        %3209 = vmatprep.subr.mxu0 0.0
        %3210 = vmatpush1.msra.mxu0 0.0
        %3211 = vmatprep.subr.mxu0 0.0
        %3212 = vmatpush1.msra.mxu0 0.0
        %3213 = vmatprep.subr.mxu0 0.0
        %3214 = vmatpush1.msra.mxu0 0.0
        %3215 = vmatprep.subr.mxu0 0.0
        %3216 = vmatpush1.msra.mxu0 0.0
        %3217 = vmatprep.subr.mxu0 0.0
        %3218 = vmatpush1.msra.mxu0 0.0
        %3219 = vmatprep.subr.mxu0 0.0
        %3220 = vmatpush1.msra.mxu0 0.0
        %3221 = vmatprep.subr.mxu0 0.0
        %3222 = vmatpush1.msra.mxu0 0.0
        %3223 = vmatprep.subr.mxu0 0.0
        %3224 = vmatpush1.msra.mxu0 0.0
        %3225 = vmatprep.subr.mxu0 0.0
        %3226 = vmatpush1.msra.mxu0 0.0
        %3227 = vmatprep.subr.mxu0 0.0
        %3228 = vmatpush1.msra.mxu0 0.0
        %3229 = vmatprep.mubr.f32.mxu0 0.0
        %3230 = vmatmul.mubr.f32.gmra.mrb[0].mxu0 %v3154
        %v3231 = vpop.f32.mrb[0].mxu0
        %v3232 = vadd.f32 0.0, %v3231
        %v3233 = vpop.f32.mrb[0].mxu0
        %v3234 = vadd.f32 0.0, %v3233
        %3235 = vmatprep.mubr.f32.mxu0 0.0
        %3236 = vmatmul.mubr.f32.gmra.mrb[0].mxu0 %v3157
        %v3237 = vpop.f32.mrb[0].mxu0
        %v3238 = vadd.f32 0.0, %v3237
        %v3239 = vpop.f32.mrb[0].mxu0
        %v3240 = vadd.f32 0.0, %v3239
        %3241 = vdwg.mxu0
        %v3242 = vadd.f32 %v3118, %v3232
        %v3243 = vadd.f32 %v3120, %v3234
        %v3244 = vadd.f32 %v3124, %v3238
        %v3245 = vadd.f32 %v3126, %v3240
        %v3246 = vld [vmem:[#allocation2 + $0x3] sm:$0xff]
        %v3247 = vld [vmem:[#allocation2 + $0xb] sm:$0x3]
        %s3248 = scalar_lea.vmem %s5, 528
        %v3249 = vld [vmem:[%s3248] sm:$0xff]
        %v3250 = vld [vmem:[%s3248 + $0x8] sm:$0xff]
        %v3251 = vld [vmem:[%s3248 + $0x10] sm:$0xff]
        %v3252 = vld [vmem:[%s3248 + $0x18] sm:$0xff]
        %v3253 = vld [vmem:[%s3248 + $0x20] sm:$0xff]
        %v3254 = vld [vmem:[%s3248 + $0x28] sm:$0xff]
        %v3255 = vld [vmem:[%s3248 + $0x30] sm:$0xff]
        %v3256 = vld [vmem:[%s3248 + $0x38] sm:$0xff]
        %v3257 = vld [vmem:[%s3248 + $0x40] sm:$0xff]
        %v3258 = vld [vmem:[%s3248 + $0x48] sm:$0xff]
        %v3259 = vld [vmem:[%s3248 + $0x50] sm:$0xff]
        %v3260 = vld [vmem:[%s3248 + $0x58] sm:$0xff]
        %v3261 = vld [vmem:[%s3248 + $0x60] sm:$0xff]
        %v3262 = vld [vmem:[%s3248 + $0x68] sm:$0xff]
        %v3263 = vld [vmem:[%s3248 + $0x70] sm:$0xff]
        %v3264 = vld [vmem:[%s3248 + $0x78] sm:$0xff]
        %v3265 = vld [vmem:[%s3248 + $0x80] sm:$0xff]
        %v3266 = vld [vmem:[%s3248 + $0x88] sm:$0xff]
        %v3267 = vld [vmem:[%s3248 + $0x90] sm:$0xff]
        %v3268 = vld [vmem:[%s3248 + $0x98] sm:$0xff]
        %v3269 = vld [vmem:[%s3248 + $0xa0] sm:$0xf]
        %v3270 = vld [vmem:[%s3248 + $0xa8] sm:$0xf]
        %v3272 = vsel %vm2897, %v3246, 0
        %v3275 = vsel %vm2897, %v3247, 0
        %v3278 = vsel %vm2365, %v3269, 0
        %v3281 = vsel %vm2365, %v3270, 0
        %3283 = vmatprep.subr.mxu0 %v3250
        %3284 = vmatpush1.msra.mxu0 %v3249
        %3285 = vmatprep.subr.mxu0 %v3252
        %3286 = vmatpush1.msra.mxu0 %v3251
        %3287 = vmatprep.subr.mxu0 %v3254
        %3288 = vmatpush1.msra.mxu0 %v3253
        %3289 = vmatprep.subr.mxu0 %v3256
        %3290 = vmatpush1.msra.mxu0 %v3255
        %3291 = vmatprep.subr.mxu0 %v3258
        %3292 = vmatpush1.msra.mxu0 %v3257
        %3293 = vmatprep.subr.mxu0 %v3260
        %3294 = vmatpush1.msra.mxu0 %v3259
        %3295 = vmatprep.subr.mxu0 %v3262
        %3296 = vmatpush1.msra.mxu0 %v3261
        %3297 = vmatprep.subr.mxu0 %v3264
        %3298 = vmatpush1.msra.mxu0 %v3263
        %3299 = vmatprep.subr.mxu0 %v3266
        %3300 = vmatpush1.msra.mxu0 %v3265
        %3301 = vmatprep.subr.mxu0 %v3268
        %3302 = vmatpush1.msra.mxu0 %v3267
        %3303 = vmatprep.subr.mxu0 %v3281
        %3304 = vmatpush1.msra.mxu0 %v3278
        %3305 = vmatprep.subr.mxu0 0.0
        %3306 = vmatpush1.msra.mxu0 0.0
        %3307 = vmatprep.subr.mxu0 0.0
        %3308 = vmatpush1.msra.mxu0 0.0
        %3309 = vmatprep.subr.mxu0 0.0
        %3310 = vmatpush1.msra.mxu0 0.0
        %3311 = vmatprep.subr.mxu0 0.0
        %3312 = vmatpush1.msra.mxu0 0.0
        %3313 = vmatprep.subr.mxu0 0.0
        %3314 = vmatpush1.msra.mxu0 0.0
        %3315 = vmatprep.subr.mxu0 0.0
        %3316 = vmatpush1.msra.mxu0 0.0
        %3317 = vmatprep.subr.mxu0 0.0
        %3318 = vmatpush1.msra.mxu0 0.0
        %3319 = vmatprep.subr.mxu0 0.0
        %3320 = vmatpush1.msra.mxu0 0.0
        %3321 = vmatprep.subr.mxu0 0.0
        %3322 = vmatpush1.msra.mxu0 0.0
        %3323 = vmatprep.subr.mxu0 0.0
        %3324 = vmatpush1.msra.mxu0 0.0
        %3325 = vmatprep.subr.mxu0 0.0
        %3326 = vmatpush1.msra.mxu0 0.0
        %3327 = vmatprep.subr.mxu0 0.0
        %3328 = vmatpush1.msra.mxu0 0.0
        %3329 = vmatprep.subr.mxu0 0.0
        %3330 = vmatpush1.msra.mxu0 0.0
        %3331 = vmatprep.subr.mxu0 0.0
        %3332 = vmatpush1.msra.mxu0 0.0
        %3333 = vmatprep.subr.mxu0 0.0
        %3334 = vmatpush1.msra.mxu0 0.0
        %3335 = vmatprep.subr.mxu0 0.0
        %3336 = vmatpush1.msra.mxu0 0.0
        %3337 = vmatprep.subr.mxu0 0.0
        %3338 = vmatpush1.msra.mxu0 0.0
        %3339 = vmatprep.subr.mxu0 0.0
        %3340 = vmatpush1.msra.mxu0 0.0
        %3341 = vmatprep.subr.mxu0 0.0
        %3342 = vmatpush1.msra.mxu0 0.0
        %3343 = vmatprep.subr.mxu0 0.0
        %3344 = vmatpush1.msra.mxu0 0.0
        %3345 = vmatprep.subr.mxu0 0.0
        %3346 = vmatpush1.msra.mxu0 0.0
        %3347 = vmatprep.mubr.f32.mxu0 0.0
        %3348 = vmatmul.mubr.f32.gmra.mrb[0].mxu0 %v3272
        %v3349 = vpop.f32.mrb[0].mxu0
        %v3350 = vadd.f32 0.0, %v3349
        %v3351 = vpop.f32.mrb[0].mxu0
        %v3352 = vadd.f32 0.0, %v3351
        %3353 = vmatprep.mubr.f32.mxu0 0.0
        %3354 = vmatmul.mubr.f32.gmra.mrb[0].mxu0 %v3275
        %v3355 = vpop.f32.mrb[0].mxu0
        %v3356 = vadd.f32 0.0, %v3355
        %v3357 = vpop.f32.mrb[0].mxu0
        %v3358 = vadd.f32 0.0, %v3357
        %3359 = vdwg.mxu0
        %v3360 = vadd.f32 %v3242, %v3350
        %v3361 = vadd.f32 %v3243, %v3352
        %v3362 = vadd.f32 %v3244, %v3356
        %v3363 = vadd.f32 %v3245, %v3358
        %v3364 = vld [vmem:[#allocation2 + $0x4] sm:$0xff]
        %v3365 = vld [vmem:[#allocation2 + $0xc] sm:$0x3]
        %s3366 = scalar_lea.vmem %s5, 704
        %v3367 = vld [vmem:[%s3366] sm:$0xff]
        %v3368 = vld [vmem:[%s3366 + $0x8] sm:$0xff]
        %v3369 = vld [vmem:[%s3366 + $0x10] sm:$0xff]
        %v3370 = vld [vmem:[%s3366 + $0x18] sm:$0xff]
        %v3371 = vld [vmem:[%s3366 + $0x20] sm:$0xff]
        %v3372 = vld [vmem:[%s3366 + $0x28] sm:$0xff]
        %v3373 = vld [vmem:[%s3366 + $0x30] sm:$0xff]
        %v3374 = vld [vmem:[%s3366 + $0x38] sm:$0xff]
        %v3375 = vld [vmem:[%s3366 + $0x40] sm:$0xff]
        %v3376 = vld [vmem:[%s3366 + $0x48] sm:$0xff]
        %v3377 = vld [vmem:[%s3366 + $0x50] sm:$0xff]
        %v3378 = vld [vmem:[%s3366 + $0x58] sm:$0xff]
        %v3379 = vld [vmem:[%s3366 + $0x60] sm:$0xff]
        %v3380 = vld [vmem:[%s3366 + $0x68] sm:$0xff]
        %v3381 = vld [vmem:[%s3366 + $0x70] sm:$0xff]
        %v3382 = vld [vmem:[%s3366 + $0x78] sm:$0xff]
        %v3383 = vld [vmem:[%s3366 + $0x80] sm:$0xff]
        %v3384 = vld [vmem:[%s3366 + $0x88] sm:$0xff]
        %v3385 = vld [vmem:[%s3366 + $0x90] sm:$0xff]
        %v3386 = vld [vmem:[%s3366 + $0x98] sm:$0xff]
        %v3387 = vld [vmem:[%s3366 + $0xa0] sm:$0xf]
        %v3388 = vld [vmem:[%s3366 + $0xa8] sm:$0xf]
        %v3390 = vsel %vm2897, %v3364, 0
        %v3393 = vsel %vm2897, %v3365, 0
        %v3396 = vsel %vm2365, %v3387, 0
        %v3399 = vsel %vm2365, %v3388, 0
        %3401 = vmatprep.subr.mxu0 %v3368
        %3402 = vmatpush1.msra.mxu0 %v3367
        %3403 = vmatprep.subr.mxu0 %v3370
        %3404 = vmatpush1.msra.mxu0 %v3369
        %3405 = vmatprep.subr.mxu0 %v3372
        %3406 = vmatpush1.msra.mxu0 %v3371
        %3407 = vmatprep.subr.mxu0 %v3374
        %3408 = vmatpush1.msra.mxu0 %v3373
        %3409 = vmatprep.subr.mxu0 %v3376
        %3410 = vmatpush1.msra.mxu0 %v3375
        %3411 = vmatprep.subr.mxu0 %v3378
        %3412 = vmatpush1.msra.mxu0 %v3377
        %3413 = vmatprep.subr.mxu0 %v3380
        %3414 = vmatpush1.msra.mxu0 %v3379
        %3415 = vmatprep.subr.mxu0 %v3382
        %3416 = vmatpush1.msra.mxu0 %v3381
        %3417 = vmatprep.subr.mxu0 %v3384
        %3418 = vmatpush1.msra.mxu0 %v3383
        %3419 = vmatprep.subr.mxu0 %v3386
        %3420 = vmatpush1.msra.mxu0 %v3385
        %3421 = vmatprep.subr.mxu0 %v3399
        %3422 = vmatpush1.msra.mxu0 %v3396
        %3423 = vmatprep.subr.mxu0 0.0
        %3424 = vmatpush1.msra.mxu0 0.0
        %3425 = vmatprep.subr.mxu0 0.0
        %3426 = vmatpush1.msra.mxu0 0.0
        %3427 = vmatprep.subr.mxu0 0.0
        %3428 = vmatpush1.msra.mxu0 0.0
        %3429 = vmatprep.subr.mxu0 0.0
        %3430 = vmatpush1.msra.mxu0 0.0
        %3431 = vmatprep.subr.mxu0 0.0
        %3432 = vmatpush1.msra.mxu0 0.0
        %3433 = vmatprep.subr.mxu0 0.0
        %3434 = vmatpush1.msra.mxu0 0.0
        %3435 = vmatprep.subr.mxu0 0.0
        %3436 = vmatpush1.msra.mxu0 0.0
        %3437 = vmatprep.subr.mxu0 0.0
        %3438 = vmatpush1.msra.mxu0 0.0
        %3439 = vmatprep.subr.mxu0 0.0
        %3440 = vmatpush1.msra.mxu0 0.0
        %3441 = vmatprep.subr.mxu0 0.0
        %3442 = vmatpush1.msra.mxu0 0.0
        %3443 = vmatprep.subr.mxu0 0.0
        %3444 = vmatpush1.msra.mxu0 0.0
        %3445 = vmatprep.subr.mxu0 0.0
        %3446 = vmatpush1.msra.mxu0 0.0
        %3447 = vmatprep.subr.mxu0 0.0
        %3448 = vmatpush1.msra.mxu0 0.0
        %3449 = vmatprep.subr.mxu0 0.0
        %3450 = vmatpush1.msra.mxu0 0.0
        %3451 = vmatprep.subr.mxu0 0.0
        %3452 = vmatpush1.msra.mxu0 0.0
        %3453 = vmatprep.subr.mxu0 0.0
        %3454 = vmatpush1.msra.mxu0 0.0
        %3455 = vmatprep.subr.mxu0 0.0
        %3456 = vmatpush1.msra.mxu0 0.0
        %3457 = vmatprep.subr.mxu0 0.0
        %3458 = vmatpush1.msra.mxu0 0.0
        %3459 = vmatprep.subr.mxu0 0.0
        %3460 = vmatpush1.msra.mxu0 0.0
        %3461 = vmatprep.subr.mxu0 0.0
        %3462 = vmatpush1.msra.mxu0 0.0
        %3463 = vmatprep.subr.mxu0 0.0
        %3464 = vmatpush1.msra.mxu0 0.0
        %3465 = vmatprep.mubr.f32.mxu0 0.0
        %3466 = vmatmul.mubr.f32.gmra.mrb[0].mxu0 %v3390
        %v3467 = vpop.f32.mrb[0].mxu0
        %v3468 = vadd.f32 0.0, %v3467
        %v3469 = vpop.f32.mrb[0].mxu0
        %v3470 = vadd.f32 0.0, %v3469
        %3471 = vmatprep.mubr.f32.mxu0 0.0
        %3472 = vmatmul.mubr.f32.gmra.mrb[0].mxu0 %v3393
        %v3473 = vpop.f32.mrb[0].mxu0
        %v3474 = vadd.f32 0.0, %v3473
        %v3475 = vpop.f32.mrb[0].mxu0
        %v3476 = vadd.f32 0.0, %v3475
        %3477 = vdwg.mxu0
        %v3478 = vadd.f32 %v3360, %v3468
        %v3479 = vadd.f32 %v3361, %v3470
        %v3480 = vadd.f32 %v3362, %v3474
        %v3481 = vadd.f32 %v3363, %v3476
        %v3482 = vld [vmem:[%s6] sm:$0x3]
        %v3484 = vlaneseq
        %v3485 = vshrl.u32 %v3484, 7
        %v3486 = vsub.s32 0, %v3485
        %v3487 = vrot.slane %v3482, %v3486
        %v3488 = vlaneseq
        %v3489 = vshrl.u32 %v3488, 7
        %v3490 = vsub.s32 1, %v3489
        %v3491 = vrot.slane %v3482, %v3490
        %v3494 = vadd.f32 %v3478, %v3487
        %v3495 = vadd.f32 %v3479, %v3491
        %v3496 = vadd.f32 %v3480, %v3487
        %v3497 = vadd.f32 %v3481, %v3491
        %v3498 = vmax.f32 %v3494, 0.0
        %v3499 = vmax.f32 %v3495, 0.0
        %v3500 = vmax.f32 %v3496, 0.0
        %v3501 = vmax.f32 %v3497, 0.0
        %v3502 = vld [vmem:[%s7] sm:$0x1f]
        %vm3503 = vcmask 80896
        %v3505 = vsel %vm3503, %v3502, 0
        %vm3507 = vcmask 1041408
        %v3509 = vsel %vm3507, %v3500, 0
        %v3512 = vsel %vm3507, %v3501, 0
        %3514 = vmatprep.subr.mxu0 %v3499
        %3515 = vmatpush1.msra.mxu0 %v3498
        %3516 = vmatprep.subr.mxu0 %v3512
        %3517 = vmatpush1.msra.mxu0 %v3509
        %3518 = vmatprep.subr.mxu0 0.0
        %3519 = vmatpush1.msra.mxu0 0.0
        %3520 = vmatprep.subr.mxu0 0.0
        %3521 = vmatpush1.msra.mxu0 0.0
        %3522 = vmatprep.subr.mxu0 0.0
        %3523 = vmatpush1.msra.mxu0 0.0
        %3524 = vmatprep.subr.mxu0 0.0
        %3525 = vmatpush1.msra.mxu0 0.0
        %3526 = vmatprep.subr.mxu0 0.0
        %3527 = vmatpush1.msra.mxu0 0.0
        %3528 = vmatprep.subr.mxu0 0.0
        %3529 = vmatpush1.msra.mxu0 0.0
        %3530 = vmatprep.subr.mxu0 0.0
        %3531 = vmatpush1.msra.mxu0 0.0
        %3532 = vmatprep.subr.mxu0 0.0
        %3533 = vmatpush1.msra.mxu0 0.0
        %3534 = vmatprep.subr.mxu0 0.0
        %3535 = vmatpush1.msra.mxu0 0.0
        %3536 = vmatprep.subr.mxu0 0.0
        %3537 = vmatpush1.msra.mxu0 0.0
        %3538 = vmatprep.subr.mxu0 0.0
        %3539 = vmatpush1.msra.mxu0 0.0
        %3540 = vmatprep.subr.mxu0 0.0
        %3541 = vmatpush1.msra.mxu0 0.0
        %3542 = vmatprep.subr.mxu0 0.0
        %3543 = vmatpush1.msra.mxu0 0.0
        %3544 = vmatprep.subr.mxu0 0.0
        %3545 = vmatpush1.msra.mxu0 0.0
        %3546 = vmatprep.subr.mxu0 0.0
        %3547 = vmatpush1.msra.mxu0 0.0
        %3548 = vmatprep.subr.mxu0 0.0
        %3549 = vmatpush1.msra.mxu0 0.0
        %3550 = vmatprep.subr.mxu0 0.0
        %3551 = vmatpush1.msra.mxu0 0.0
        %3552 = vmatprep.subr.mxu0 0.0
        %3553 = vmatpush1.msra.mxu0 0.0
        %3554 = vmatprep.subr.mxu0 0.0
        %3555 = vmatpush1.msra.mxu0 0.0
        %3556 = vmatprep.subr.mxu0 0.0
        %3557 = vmatpush1.msra.mxu0 0.0
        %3558 = vmatprep.subr.mxu0 0.0
        %3559 = vmatpush1.msra.mxu0 0.0
        %3560 = vmatprep.subr.mxu0 0.0
        %3561 = vmatpush1.msra.mxu0 0.0
        %3562 = vmatprep.subr.mxu0 0.0
        %3563 = vmatpush1.msra.mxu0 0.0
        %3564 = vmatprep.subr.mxu0 0.0
        %3565 = vmatpush1.msra.mxu0 0.0
        %3566 = vmatprep.subr.mxu0 0.0
        %3567 = vmatpush1.msra.mxu0 0.0
        %3568 = vmatprep.subr.mxu0 0.0
        %3569 = vmatpush1.msra.mxu0 0.0
        %3570 = vmatprep.subr.mxu0 0.0
        %3571 = vmatpush1.msra.mxu0 0.0
        %3572 = vmatprep.subr.mxu0 0.0
        %3573 = vmatpush1.msra.mxu0 0.0
        %3574 = vmatprep.subr.mxu0 0.0
        %3575 = vmatpush1.msra.mxu0 0.0
        %3576 = vmatprep.subr.mxu0 0.0
        %3577 = vmatpush1.msra.mxu0 0.0
        %3578 = vmatprep.mubr.f32.mxu0 0.0
        %3579 = vmatmul.mubr.f32.gmra.mrb[0].mxu0 %v3505
        %v3580 = vpop.f32.mrb[0].mxu0
        %v3581 = vadd.f32 0.0, %v3580
        %v3582 = vpop.f32.mrb[0].mxu0
        %v3583 = vadd.f32 0.0, %v3582
        %3584 = vdwg.mxu0
        %s3585 = scalar_lea.vmem %s7, 8
        %v3586 = vld [vmem:[%s3585] sm:$0x1f]
        %v3588 = vsel %vm3503, %v3586, 0
        %3590 = vmatprep.subr.mxu0 %v3499
        %3591 = vmatpush1.msra.mxu0 %v3498
        %3592 = vmatprep.subr.mxu0 %v3512
        %3593 = vmatpush1.msra.mxu0 %v3509
        %3594 = vmatprep.subr.mxu0 0.0
        %3595 = vmatpush1.msra.mxu0 0.0
        %3596 = vmatprep.subr.mxu0 0.0
        %3597 = vmatpush1.msra.mxu0 0.0
        %3598 = vmatprep.subr.mxu0 0.0
        %3599 = vmatpush1.msra.mxu0 0.0
        %3600 = vmatprep.subr.mxu0 0.0
        %3601 = vmatpush1.msra.mxu0 0.0
        %3602 = vmatprep.subr.mxu0 0.0
        %3603 = vmatpush1.msra.mxu0 0.0
        %3604 = vmatprep.subr.mxu0 0.0
        %3605 = vmatpush1.msra.mxu0 0.0
        %3606 = vmatprep.subr.mxu0 0.0
        %3607 = vmatpush1.msra.mxu0 0.0
        %3608 = vmatprep.subr.mxu0 0.0
        %3609 = vmatpush1.msra.mxu0 0.0
        %3610 = vmatprep.subr.mxu0 0.0
        %3611 = vmatpush1.msra.mxu0 0.0
        %3612 = vmatprep.subr.mxu0 0.0
        %3613 = vmatpush1.msra.mxu0 0.0
        %3614 = vmatprep.subr.mxu0 0.0
        %3615 = vmatpush1.msra.mxu0 0.0
        %3616 = vmatprep.subr.mxu0 0.0
        %3617 = vmatpush1.msra.mxu0 0.0
        %3618 = vmatprep.subr.mxu0 0.0
        %3619 = vmatpush1.msra.mxu0 0.0
        %3620 = vmatprep.subr.mxu0 0.0
        %3621 = vmatpush1.msra.mxu0 0.0
        %3622 = vmatprep.subr.mxu0 0.0
        %3623 = vmatpush1.msra.mxu0 0.0
        %3624 = vmatprep.subr.mxu0 0.0
        %3625 = vmatpush1.msra.mxu0 0.0
        %3626 = vmatprep.subr.mxu0 0.0
        %3627 = vmatpush1.msra.mxu0 0.0
        %3628 = vmatprep.subr.mxu0 0.0
        %3629 = vmatpush1.msra.mxu0 0.0
        %3630 = vmatprep.subr.mxu0 0.0
        %3631 = vmatpush1.msra.mxu0 0.0
        %3632 = vmatprep.subr.mxu0 0.0
        %3633 = vmatpush1.msra.mxu0 0.0
        %3634 = vmatprep.subr.mxu0 0.0
        %3635 = vmatpush1.msra.mxu0 0.0
        %3636 = vmatprep.subr.mxu0 0.0
        %3637 = vmatpush1.msra.mxu0 0.0
        %3638 = vmatprep.subr.mxu0 0.0
        %3639 = vmatpush1.msra.mxu0 0.0
        %3640 = vmatprep.subr.mxu0 0.0
        %3641 = vmatpush1.msra.mxu0 0.0
        %3642 = vmatprep.subr.mxu0 0.0
        %3643 = vmatpush1.msra.mxu0 0.0
        %3644 = vmatprep.subr.mxu0 0.0
        %3645 = vmatpush1.msra.mxu0 0.0
        %3646 = vmatprep.subr.mxu0 0.0
        %3647 = vmatpush1.msra.mxu0 0.0
        %3648 = vmatprep.subr.mxu0 0.0
        %3649 = vmatpush1.msra.mxu0 0.0
        %3650 = vmatprep.subr.mxu0 0.0
        %3651 = vmatpush1.msra.mxu0 0.0
        %3652 = vmatprep.subr.mxu0 0.0
        %3653 = vmatpush1.msra.mxu0 0.0
        %3654 = vmatprep.mubr.f32.mxu0 0.0
        %3655 = vmatmul.mubr.f32.gmra.mrb[0].mxu0 %v3588
        %v3656 = vpop.f32.mrb[0].mxu0
        %v3657 = vadd.f32 0.0, %v3656
        %v3658 = vpop.f32.mrb[0].mxu0
        %v3659 = vadd.f32 0.0, %v3658
        %3660 = vdwg.mxu0
        %v3661 = vld [vmem:[%s8] sm:$0xff]
        %v3662 = vld [vmem:[%s8 + $0x8] sm:$0xff]
        %v3663 = vld [vmem:[%s8 + $0x10] sm:$0xff]
        %v3664 = vld [vmem:[%s8 + $0x18] sm:$0xff]
        %v3665 = vld [vmem:[%s8 + $0x20] sm:$0xff]
        %v3666 = vld [vmem:[%s8 + $0x28] sm:$0xff]
        %v3667 = vld [vmem:[%s8 + $0x30] sm:$0xff]
        %v3668 = vld [vmem:[%s8 + $0x38] sm:$0xff]
        %v3669 = vld [vmem:[%s8 + $0x40] sm:$0xff]
        %v3670 = vld [vmem:[%s8 + $0x48] sm:$0xff]
        %v3671 = vld [vmem:[%s8 + $0x50] sm:$0xff]
        %v3672 = vld [vmem:[%s8 + $0x58] sm:$0xff]
        %v3673 = vld [vmem:[%s8 + $0x60] sm:$0xff]
        %v3674 = vld [vmem:[%s8 + $0x68] sm:$0xff]
        %v3675 = vld [vmem:[%s8 + $0x70] sm:$0xff]
        %v3676 = vld [vmem:[%s8 + $0x78] sm:$0xff]
        %v3677 = vld [vmem:[%s8 + $0x80] sm:$0xff]
        %v3678 = vld [vmem:[%s8 + $0x88] sm:$0xff]
        %v3679 = vld [vmem:[%s8 + $0x90] sm:$0xff]
        %v3680 = vld [vmem:[%s8 + $0x98] sm:$0xff]
        %v3682 = vsel %vm537, %v3583, 0
        %3684 = vmatprep.subr.mxu0 0.0
        %3685 = vmatpush1.msra.mxu0 %v3661
        %3686 = vmatprep.subr.mxu0 0.0
        %3687 = vmatpush1.msra.mxu0 %v3662
        %3688 = vmatprep.subr.mxu0 0.0
        %3689 = vmatpush1.msra.mxu0 %v3663
        %3690 = vmatprep.subr.mxu0 0.0
        %3691 = vmatpush1.msra.mxu0 %v3664
        %3692 = vmatprep.subr.mxu0 0.0
        %3693 = vmatpush1.msra.mxu0 %v3665
        %3694 = vmatprep.subr.mxu0 0.0
        %3695 = vmatpush1.msra.mxu0 %v3666
        %3696 = vmatprep.subr.mxu0 0.0
        %3697 = vmatpush1.msra.mxu0 %v3667
        %3698 = vmatprep.subr.mxu0 0.0
        %3699 = vmatpush1.msra.mxu0 %v3668
        %3700 = vmatprep.subr.mxu0 0.0
        %3701 = vmatpush1.msra.mxu0 %v3669
        %3702 = vmatprep.subr.mxu0 0.0
        %3703 = vmatpush1.msra.mxu0 %v3670
        %3704 = vmatprep.subr.mxu0 0.0
        %3705 = vmatpush1.msra.mxu0 %v3671
        %3706 = vmatprep.subr.mxu0 0.0
        %3707 = vmatpush1.msra.mxu0 %v3672
        %3708 = vmatprep.subr.mxu0 0.0
        %3709 = vmatpush1.msra.mxu0 %v3673
        %3710 = vmatprep.subr.mxu0 0.0
        %3711 = vmatpush1.msra.mxu0 %v3674
        %3712 = vmatprep.subr.mxu0 0.0
        %3713 = vmatpush1.msra.mxu0 %v3675
        %3714 = vmatprep.subr.mxu0 0.0
        %3715 = vmatpush1.msra.mxu0 %v3676
        %3716 = vmatprep.subr.mxu0 0.0
        %3717 = vmatpush1.msra.mxu0 %v3677
        %3718 = vmatprep.subr.mxu0 0.0
        %3719 = vmatpush1.msra.mxu0 %v3678
        %3720 = vmatprep.subr.mxu0 0.0
        %3721 = vmatpush1.msra.mxu0 %v3679
        %3722 = vmatprep.subr.mxu0 0.0
        %3723 = vmatpush1.msra.mxu0 %v3680
        %3724 = vmatprep.subr.mxu0 0.0
        %3725 = vmatpush1.msra.mxu0 0.0
        %3726 = vmatprep.subr.mxu0 0.0
        %3727 = vmatpush1.msra.mxu0 0.0
        %3728 = vmatprep.subr.mxu0 0.0
        %3729 = vmatpush1.msra.mxu0 0.0
        %3730 = vmatprep.subr.mxu0 0.0
        %3731 = vmatpush1.msra.mxu0 0.0
        %3732 = vmatprep.subr.mxu0 0.0
        %3733 = vmatpush1.msra.mxu0 0.0
        %3734 = vmatprep.subr.mxu0 0.0
        %3735 = vmatpush1.msra.mxu0 0.0
        %3736 = vmatprep.subr.mxu0 0.0
        %3737 = vmatpush1.msra.mxu0 0.0
        %3738 = vmatprep.subr.mxu0 0.0
        %3739 = vmatpush1.msra.mxu0 0.0
        %3740 = vmatprep.subr.mxu0 0.0
        %3741 = vmatpush1.msra.mxu0 0.0
        %3742 = vmatprep.subr.mxu0 0.0
        %3743 = vmatpush1.msra.mxu0 0.0
        %3744 = vmatprep.subr.mxu0 0.0
        %3745 = vmatpush1.msra.mxu0 0.0
        %3746 = vmatprep.subr.mxu0 0.0
        %3747 = vmatpush1.msra.mxu0 0.0
        %3748 = vmatprep.mubr.f32.mxu0 %v3682
        %3749 = vmatmul.mubr.f32.gmra.mrb[0].mxu0 %v3581
        %v3750 = vpop.f32.mrb[0].mxu0
        %v3751 = vadd.f32 0.0, %v3750
        %v3752 = vpop.f32.mrb[0].mxu0
        %3753 = vdwg.mxu0
        %s3754 = scalar_lea.vmem %s8, 160
        %v3755 = vld [vmem:[%s3754] sm:$0xff]
        %v3756 = vld [vmem:[%s3754 + $0x8] sm:$0xff]
        %v3757 = vld [vmem:[%s3754 + $0x10] sm:$0xff]
        %v3758 = vld [vmem:[%s3754 + $0x18] sm:$0xff]
        %v3759 = vld [vmem:[%s3754 + $0x20] sm:$0xff]
        %v3760 = vld [vmem:[%s3754 + $0x28] sm:$0xff]
        %v3761 = vld [vmem:[%s3754 + $0x30] sm:$0xff]
        %v3762 = vld [vmem:[%s3754 + $0x38] sm:$0xff]
        %v3763 = vld [vmem:[%s3754 + $0x40] sm:$0xff]
        %v3764 = vld [vmem:[%s3754 + $0x48] sm:$0xff]
        %v3765 = vld [vmem:[%s3754 + $0x50] sm:$0xff]
        %v3766 = vld [vmem:[%s3754 + $0x58] sm:$0xff]
        %v3767 = vld [vmem:[%s3754 + $0x60] sm:$0xff]
        %v3768 = vld [vmem:[%s3754 + $0x68] sm:$0xff]
        %v3769 = vld [vmem:[%s3754 + $0x70] sm:$0xff]
        %v3770 = vld [vmem:[%s3754 + $0x78] sm:$0xff]
        %v3771 = vld [vmem:[%s3754 + $0x80] sm:$0xff]
        %v3772 = vld [vmem:[%s3754 + $0x88] sm:$0xff]
        %v3773 = vld [vmem:[%s3754 + $0x90] sm:$0xff]
        %v3774 = vld [vmem:[%s3754 + $0x98] sm:$0xff]
        %3775 = vmatprep.subr.mxu0 0.0
        %3776 = vmatpush1.msra.mxu0 %v3755
        %3777 = vmatprep.subr.mxu0 0.0
        %3778 = vmatpush1.msra.mxu0 %v3756
        %3779 = vmatprep.subr.mxu0 0.0
        %3780 = vmatpush1.msra.mxu0 %v3757
        %3781 = vmatprep.subr.mxu0 0.0
        %3782 = vmatpush1.msra.mxu0 %v3758
        %3783 = vmatprep.subr.mxu0 0.0
        %3784 = vmatpush1.msra.mxu0 %v3759
        %3785 = vmatprep.subr.mxu0 0.0
        %3786 = vmatpush1.msra.mxu0 %v3760
        %3787 = vmatprep.subr.mxu0 0.0
        %3788 = vmatpush1.msra.mxu0 %v3761
        %3789 = vmatprep.subr.mxu0 0.0
        %3790 = vmatpush1.msra.mxu0 %v3762
        %3791 = vmatprep.subr.mxu0 0.0
        %3792 = vmatpush1.msra.mxu0 %v3763
        %3793 = vmatprep.subr.mxu0 0.0
        %3794 = vmatpush1.msra.mxu0 %v3764
        %3795 = vmatprep.subr.mxu0 0.0
        %3796 = vmatpush1.msra.mxu0 %v3765
        %3797 = vmatprep.subr.mxu0 0.0
        %3798 = vmatpush1.msra.mxu0 %v3766
        %3799 = vmatprep.subr.mxu0 0.0
        %3800 = vmatpush1.msra.mxu0 %v3767
        %3801 = vmatprep.subr.mxu0 0.0
        %3802 = vmatpush1.msra.mxu0 %v3768
        %3803 = vmatprep.subr.mxu0 0.0
        %3804 = vmatpush1.msra.mxu0 %v3769
        %3805 = vmatprep.subr.mxu0 0.0
        %3806 = vmatpush1.msra.mxu0 %v3770
        %3807 = vmatprep.subr.mxu0 0.0
        %3808 = vmatpush1.msra.mxu0 %v3771
        %3809 = vmatprep.subr.mxu0 0.0
        %3810 = vmatpush1.msra.mxu0 %v3772
        %3811 = vmatprep.subr.mxu0 0.0
        %3812 = vmatpush1.msra.mxu0 %v3773
        %3813 = vmatprep.subr.mxu0 0.0
        %3814 = vmatpush1.msra.mxu0 %v3774
        %3815 = vmatprep.subr.mxu0 0.0
        %3816 = vmatpush1.msra.mxu0 0.0
        %3817 = vmatprep.subr.mxu0 0.0
        %3818 = vmatpush1.msra.mxu0 0.0
        %3819 = vmatprep.subr.mxu0 0.0
        %3820 = vmatpush1.msra.mxu0 0.0
        %3821 = vmatprep.subr.mxu0 0.0
        %3822 = vmatpush1.msra.mxu0 0.0
        %3823 = vmatprep.subr.mxu0 0.0
        %3824 = vmatpush1.msra.mxu0 0.0
        %3825 = vmatprep.subr.mxu0 0.0
        %3826 = vmatpush1.msra.mxu0 0.0
        %3827 = vmatprep.subr.mxu0 0.0
        %3828 = vmatpush1.msra.mxu0 0.0
        %3829 = vmatprep.subr.mxu0 0.0
        %3830 = vmatpush1.msra.mxu0 0.0
        %3831 = vmatprep.subr.mxu0 0.0
        %3832 = vmatpush1.msra.mxu0 0.0
        %3833 = vmatprep.subr.mxu0 0.0
        %3834 = vmatpush1.msra.mxu0 0.0
        %3835 = vmatprep.subr.mxu0 0.0
        %3836 = vmatpush1.msra.mxu0 0.0
        %3837 = vmatprep.subr.mxu0 0.0
        %3838 = vmatpush1.msra.mxu0 0.0
        %3839 = vmatprep.mubr.f32.mxu0 %v3682
        %3840 = vmatmul.mubr.f32.gmra.mrb[0].mxu0 %v3581
        %v3841 = vpop.f32.mrb[0].mxu0
        %v3842 = vadd.f32 0.0, %v3841
        %v3843 = vpop.f32.mrb[0].mxu0
        %3844 = vdwg.mxu0
        %v3845 = vmax.f32 %v3751, %v3842
        %v3847 = vsel %vm537, %v3659, 0
        %3849 = vmatprep.subr.mxu0 0.0
        %3850 = vmatpush1.msra.mxu0 %v3661
        %3851 = vmatprep.subr.mxu0 0.0
        %3852 = vmatpush1.msra.mxu0 %v3662
        %3853 = vmatprep.subr.mxu0 0.0
        %3854 = vmatpush1.msra.mxu0 %v3663
        %3855 = vmatprep.subr.mxu0 0.0
        %3856 = vmatpush1.msra.mxu0 %v3664
        %3857 = vmatprep.subr.mxu0 0.0
        %3858 = vmatpush1.msra.mxu0 %v3665
        %3859 = vmatprep.subr.mxu0 0.0
        %3860 = vmatpush1.msra.mxu0 %v3666
        %3861 = vmatprep.subr.mxu0 0.0
        %3862 = vmatpush1.msra.mxu0 %v3667
        %3863 = vmatprep.subr.mxu0 0.0
        %3864 = vmatpush1.msra.mxu0 %v3668
        %3865 = vmatprep.subr.mxu0 0.0
        %3866 = vmatpush1.msra.mxu0 %v3669
        %3867 = vmatprep.subr.mxu0 0.0
        %3868 = vmatpush1.msra.mxu0 %v3670
        %3869 = vmatprep.subr.mxu0 0.0
        %3870 = vmatpush1.msra.mxu0 %v3671
        %3871 = vmatprep.subr.mxu0 0.0
        %3872 = vmatpush1.msra.mxu0 %v3672
        %3873 = vmatprep.subr.mxu0 0.0
        %3874 = vmatpush1.msra.mxu0 %v3673
        %3875 = vmatprep.subr.mxu0 0.0
        %3876 = vmatpush1.msra.mxu0 %v3674
        %3877 = vmatprep.subr.mxu0 0.0
        %3878 = vmatpush1.msra.mxu0 %v3675
        %3879 = vmatprep.subr.mxu0 0.0
        %3880 = vmatpush1.msra.mxu0 %v3676
        %3881 = vmatprep.subr.mxu0 0.0
        %3882 = vmatpush1.msra.mxu0 %v3677
        %3883 = vmatprep.subr.mxu0 0.0
        %3884 = vmatpush1.msra.mxu0 %v3678
        %3885 = vmatprep.subr.mxu0 0.0
        %3886 = vmatpush1.msra.mxu0 %v3679
        %3887 = vmatprep.subr.mxu0 0.0
        %3888 = vmatpush1.msra.mxu0 %v3680
        %3889 = vmatprep.subr.mxu0 0.0
        %3890 = vmatpush1.msra.mxu0 0.0
        %3891 = vmatprep.subr.mxu0 0.0
        %3892 = vmatpush1.msra.mxu0 0.0
        %3893 = vmatprep.subr.mxu0 0.0
        %3894 = vmatpush1.msra.mxu0 0.0
        %3895 = vmatprep.subr.mxu0 0.0
        %3896 = vmatpush1.msra.mxu0 0.0
        %3897 = vmatprep.subr.mxu0 0.0
        %3898 = vmatpush1.msra.mxu0 0.0
        %3899 = vmatprep.subr.mxu0 0.0
        %3900 = vmatpush1.msra.mxu0 0.0
        %3901 = vmatprep.subr.mxu0 0.0
        %3902 = vmatpush1.msra.mxu0 0.0
        %3903 = vmatprep.subr.mxu0 0.0
        %3904 = vmatpush1.msra.mxu0 0.0
        %3905 = vmatprep.subr.mxu0 0.0
        %3906 = vmatpush1.msra.mxu0 0.0
        %3907 = vmatprep.subr.mxu0 0.0
        %3908 = vmatpush1.msra.mxu0 0.0
        %3909 = vmatprep.subr.mxu0 0.0
        %3910 = vmatpush1.msra.mxu0 0.0
        %3911 = vmatprep.subr.mxu0 0.0
        %3912 = vmatpush1.msra.mxu0 0.0
        %3913 = vmatprep.mubr.f32.mxu0 %v3847
        %3914 = vmatmul.mubr.f32.gmra.mrb[0].mxu0 %v3657
        %v3915 = vpop.f32.mrb[0].mxu0
        %v3916 = vadd.f32 0.0, %v3915
        %v3917 = vpop.f32.mrb[0].mxu0
        %3918 = vdwg.mxu0
        %3919 = vmatprep.subr.mxu0 0.0
        %3920 = vmatpush1.msra.mxu0 %v3755
        %3921 = vmatprep.subr.mxu0 0.0
        %3922 = vmatpush1.msra.mxu0 %v3756
        %3923 = vmatprep.subr.mxu0 0.0
        %3924 = vmatpush1.msra.mxu0 %v3757
        %3925 = vmatprep.subr.mxu0 0.0
        %3926 = vmatpush1.msra.mxu0 %v3758
        %3927 = vmatprep.subr.mxu0 0.0
        %3928 = vmatpush1.msra.mxu0 %v3759
        %3929 = vmatprep.subr.mxu0 0.0
        %3930 = vmatpush1.msra.mxu0 %v3760
        %3931 = vmatprep.subr.mxu0 0.0
        %3932 = vmatpush1.msra.mxu0 %v3761
        %3933 = vmatprep.subr.mxu0 0.0
        %3934 = vmatpush1.msra.mxu0 %v3762
        %3935 = vmatprep.subr.mxu0 0.0
        %3936 = vmatpush1.msra.mxu0 %v3763
        %3937 = vmatprep.subr.mxu0 0.0
        %3938 = vmatpush1.msra.mxu0 %v3764
        %3939 = vmatprep.subr.mxu0 0.0
        %3940 = vmatpush1.msra.mxu0 %v3765
        %3941 = vmatprep.subr.mxu0 0.0
        %3942 = vmatpush1.msra.mxu0 %v3766
        %3943 = vmatprep.subr.mxu0 0.0
        %3944 = vmatpush1.msra.mxu0 %v3767
        %3945 = vmatprep.subr.mxu0 0.0
        %3946 = vmatpush1.msra.mxu0 %v3768
        %3947 = vmatprep.subr.mxu0 0.0
        %3948 = vmatpush1.msra.mxu0 %v3769
        %3949 = vmatprep.subr.mxu0 0.0
        %3950 = vmatpush1.msra.mxu0 %v3770
        %3951 = vmatprep.subr.mxu0 0.0
        %3952 = vmatpush1.msra.mxu0 %v3771
        %3953 = vmatprep.subr.mxu0 0.0
        %3954 = vmatpush1.msra.mxu0 %v3772
        %3955 = vmatprep.subr.mxu0 0.0
        %3956 = vmatpush1.msra.mxu0 %v3773
        %3957 = vmatprep.subr.mxu0 0.0
        %3958 = vmatpush1.msra.mxu0 %v3774
        %3959 = vmatprep.subr.mxu0 0.0
        %3960 = vmatpush1.msra.mxu0 0.0
        %3961 = vmatprep.subr.mxu0 0.0
        %3962 = vmatpush1.msra.mxu0 0.0
        %3963 = vmatprep.subr.mxu0 0.0
        %3964 = vmatpush1.msra.mxu0 0.0
        %3965 = vmatprep.subr.mxu0 0.0
        %3966 = vmatpush1.msra.mxu0 0.0
        %3967 = vmatprep.subr.mxu0 0.0
        %3968 = vmatpush1.msra.mxu0 0.0
        %3969 = vmatprep.subr.mxu0 0.0
        %3970 = vmatpush1.msra.mxu0 0.0
        %3971 = vmatprep.subr.mxu0 0.0
        %3972 = vmatpush1.msra.mxu0 0.0
        %3973 = vmatprep.subr.mxu0 0.0
        %3974 = vmatpush1.msra.mxu0 0.0
        %3975 = vmatprep.subr.mxu0 0.0
        %3976 = vmatpush1.msra.mxu0 0.0
        %3977 = vmatprep.subr.mxu0 0.0
        %3978 = vmatpush1.msra.mxu0 0.0
        %3979 = vmatprep.subr.mxu0 0.0
        %3980 = vmatpush1.msra.mxu0 0.0
        %3981 = vmatprep.subr.mxu0 0.0
        %3982 = vmatpush1.msra.mxu0 0.0
        %3983 = vmatprep.mubr.f32.mxu0 %v3847
        %3984 = vmatmul.mubr.f32.gmra.mrb[0].mxu0 %v3657
        %v3985 = vpop.f32.mrb[0].mxu0
        %v3986 = vadd.f32 0.0, %v3985
        %v3987 = vpop.f32.mrb[0].mxu0
        %3988 = vdwg.mxu0
        %v3989 = vmax.f32 %v3916, %v3986
        %v3990 = vmax.f32 %v3845, %v3989
        %vm3991 = vcmask 651264
        %3992 = vst.msk [vmem:[#allocation3] sm:$0x1f] %vm3991, %v3990
        %v3993 = vld [vmem:[%s10] sm:$0x1]
        %v3994 = vld [vmem:[#allocation3] sm:$0x1]
        %v3995 = vld [vmem:[%s9] sm:$0xff]
        %v3996 = vld [vmem:[%s9 + $0x8] sm:$0xff]
        %v3997 = vld [vmem:[%s9 + $0x10] sm:$0xff]
        %v3998 = vld [vmem:[%s9 + $0x18] sm:$0xff]
        %v3999 = vld [vmem:[%s9 + $0x20] sm:$0xff]
        %v4000 = vld [vmem:[%s9 + $0x28] sm:$0xff]
        %v4001 = vld [vmem:[%s9 + $0x30] sm:$0xff]
        %v4002 = vld [vmem:[%s9 + $0x38] sm:$0xff]
        %v4003 = vld [vmem:[%s9 + $0x40] sm:$0xff]
        %v4004 = vld [vmem:[%s9 + $0x48] sm:$0xff]
        %vm4005 = vcmask 654336
        %v4007 = vsel %vm4005, %v3994, 0
        %4009 = vmatprep.subr.mxu0 0.0
        %4010 = vmatpush1.msra.mxu0 %v3995
        %4011 = vmatprep.subr.mxu0 0.0
        %4012 = vmatpush1.msra.mxu0 %v3996
        %4013 = vmatprep.subr.mxu0 0.0
        %4014 = vmatpush1.msra.mxu0 %v3997
        %4015 = vmatprep.subr.mxu0 0.0
        %4016 = vmatpush1.msra.mxu0 %v3998
        %4017 = vmatprep.subr.mxu0 0.0
        %4018 = vmatpush1.msra.mxu0 %v3999
        %4019 = vmatprep.subr.mxu0 0.0
        %4020 = vmatpush1.msra.mxu0 %v4000
        %4021 = vmatprep.subr.mxu0 0.0
        %4022 = vmatpush1.msra.mxu0 %v4001
        %4023 = vmatprep.subr.mxu0 0.0
        %4024 = vmatpush1.msra.mxu0 %v4002
        %4025 = vmatprep.subr.mxu0 0.0
        %4026 = vmatpush1.msra.mxu0 %v4003
        %4027 = vmatprep.subr.mxu0 0.0
        %4028 = vmatpush1.msra.mxu0 %v4004
        %4029 = vmatprep.subr.mxu0 0.0
        %4030 = vmatpush1.msra.mxu0 0.0
        %4031 = vmatprep.subr.mxu0 0.0
        %4032 = vmatpush1.msra.mxu0 0.0
        %4033 = vmatprep.subr.mxu0 0.0
        %4034 = vmatpush1.msra.mxu0 0.0
        %4035 = vmatprep.subr.mxu0 0.0
        %4036 = vmatpush1.msra.mxu0 0.0
        %4037 = vmatprep.subr.mxu0 0.0
        %4038 = vmatpush1.msra.mxu0 0.0
        %4039 = vmatprep.subr.mxu0 0.0
        %4040 = vmatpush1.msra.mxu0 0.0
        %4041 = vmatprep.subr.mxu0 0.0
        %4042 = vmatpush1.msra.mxu0 0.0
        %4043 = vmatprep.subr.mxu0 0.0
        %4044 = vmatpush1.msra.mxu0 0.0
        %4045 = vmatprep.subr.mxu0 0.0
        %4046 = vmatpush1.msra.mxu0 0.0
        %4047 = vmatprep.subr.mxu0 0.0
        %4048 = vmatpush1.msra.mxu0 0.0
        %4049 = vmatprep.subr.mxu0 0.0
        %4050 = vmatpush1.msra.mxu0 0.0
        %4051 = vmatprep.subr.mxu0 0.0
        %4052 = vmatpush1.msra.mxu0 0.0
        %4053 = vmatprep.subr.mxu0 0.0
        %4054 = vmatpush1.msra.mxu0 0.0
        %4055 = vmatprep.subr.mxu0 0.0
        %4056 = vmatpush1.msra.mxu0 0.0
        %4057 = vmatprep.subr.mxu0 0.0
        %4058 = vmatpush1.msra.mxu0 0.0
        %4059 = vmatprep.subr.mxu0 0.0
        %4060 = vmatpush1.msra.mxu0 0.0
        %4061 = vmatprep.subr.mxu0 0.0
        %4062 = vmatpush1.msra.mxu0 0.0
        %4063 = vmatprep.subr.mxu0 0.0
        %4064 = vmatpush1.msra.mxu0 0.0
        %4065 = vmatprep.subr.mxu0 0.0
        %4066 = vmatpush1.msra.mxu0 0.0
        %4067 = vmatprep.subr.mxu0 0.0
        %4068 = vmatpush1.msra.mxu0 0.0
        %4069 = vmatprep.subr.mxu0 0.0
        %4070 = vmatpush1.msra.mxu0 0.0
        %4071 = vmatprep.subr.mxu0 0.0
        %4072 = vmatpush1.msra.mxu0 0.0
        %4073 = vmatprep.mubr.f32.mxu0 0.0
        %4074 = vmatmul.mubr.f32.gmra.mrb[0].mxu0 %v4007
        %v4075 = vpop.f32.mrb[0].mxu0
        %v4076 = vadd.f32 0.0, %v4075
        %v4077 = vpop.f32.mrb[0].mxu0
        %4078 = vdwg.mxu0
        %v4079 = vadd.f32 %v3993, %v4076
        %v4080 = vld [vmem:[#allocation3 + $0x1] sm:$0x1]
        %s4081 = scalar_lea.vmem %s9, 80
        %v4082 = vld [vmem:[%s4081] sm:$0xff]
        %v4083 = vld [vmem:[%s4081 + $0x8] sm:$0xff]
        %v4084 = vld [vmem:[%s4081 + $0x10] sm:$0xff]
        %v4085 = vld [vmem:[%s4081 + $0x18] sm:$0xff]
        %v4086 = vld [vmem:[%s4081 + $0x20] sm:$0xff]
        %v4087 = vld [vmem:[%s4081 + $0x28] sm:$0xff]
        %v4088 = vld [vmem:[%s4081 + $0x30] sm:$0xff]
        %v4089 = vld [vmem:[%s4081 + $0x38] sm:$0xff]
        %v4090 = vld [vmem:[%s4081 + $0x40] sm:$0xff]
        %v4091 = vld [vmem:[%s4081 + $0x48] sm:$0xff]
        %v4093 = vsel %vm4005, %v4080, 0
        %4095 = vmatprep.subr.mxu0 0.0
        %4096 = vmatpush1.msra.mxu0 %v4082
        %4097 = vmatprep.subr.mxu0 0.0
        %4098 = vmatpush1.msra.mxu0 %v4083
        %4099 = vmatprep.subr.mxu0 0.0
        %4100 = vmatpush1.msra.mxu0 %v4084
        %4101 = vmatprep.subr.mxu0 0.0
        %4102 = vmatpush1.msra.mxu0 %v4085
        %4103 = vmatprep.subr.mxu0 0.0
        %4104 = vmatpush1.msra.mxu0 %v4086
        %4105 = vmatprep.subr.mxu0 0.0
        %4106 = vmatpush1.msra.mxu0 %v4087
        %4107 = vmatprep.subr.mxu0 0.0
        %4108 = vmatpush1.msra.mxu0 %v4088
        %4109 = vmatprep.subr.mxu0 0.0
        %4110 = vmatpush1.msra.mxu0 %v4089
        %4111 = vmatprep.subr.mxu0 0.0
        %4112 = vmatpush1.msra.mxu0 %v4090
        %4113 = vmatprep.subr.mxu0 0.0
        %4114 = vmatpush1.msra.mxu0 %v4091
        %4115 = vmatprep.subr.mxu0 0.0
        %4116 = vmatpush1.msra.mxu0 0.0
        %4117 = vmatprep.subr.mxu0 0.0
        %4118 = vmatpush1.msra.mxu0 0.0
        %4119 = vmatprep.subr.mxu0 0.0
        %4120 = vmatpush1.msra.mxu0 0.0
        %4121 = vmatprep.subr.mxu0 0.0
        %4122 = vmatpush1.msra.mxu0 0.0
        %4123 = vmatprep.subr.mxu0 0.0
        %4124 = vmatpush1.msra.mxu0 0.0
        %4125 = vmatprep.subr.mxu0 0.0
        %4126 = vmatpush1.msra.mxu0 0.0
        %4127 = vmatprep.subr.mxu0 0.0
        %4128 = vmatpush1.msra.mxu0 0.0
        %4129 = vmatprep.subr.mxu0 0.0
        %4130 = vmatpush1.msra.mxu0 0.0
        %4131 = vmatprep.subr.mxu0 0.0
        %4132 = vmatpush1.msra.mxu0 0.0
        %4133 = vmatprep.subr.mxu0 0.0
        %4134 = vmatpush1.msra.mxu0 0.0
        %4135 = vmatprep.subr.mxu0 0.0
        %4136 = vmatpush1.msra.mxu0 0.0
        %4137 = vmatprep.subr.mxu0 0.0
        %4138 = vmatpush1.msra.mxu0 0.0
        %4139 = vmatprep.subr.mxu0 0.0
        %4140 = vmatpush1.msra.mxu0 0.0
        %4141 = vmatprep.subr.mxu0 0.0
        %4142 = vmatpush1.msra.mxu0 0.0
        %4143 = vmatprep.subr.mxu0 0.0
        %4144 = vmatpush1.msra.mxu0 0.0
        %4145 = vmatprep.subr.mxu0 0.0
        %4146 = vmatpush1.msra.mxu0 0.0
        %4147 = vmatprep.subr.mxu0 0.0
        %4148 = vmatpush1.msra.mxu0 0.0
        %4149 = vmatprep.subr.mxu0 0.0
        %4150 = vmatpush1.msra.mxu0 0.0
        %4151 = vmatprep.subr.mxu0 0.0
        %4152 = vmatpush1.msra.mxu0 0.0
        %4153 = vmatprep.subr.mxu0 0.0
        %4154 = vmatpush1.msra.mxu0 0.0
        %4155 = vmatprep.subr.mxu0 0.0
        %4156 = vmatpush1.msra.mxu0 0.0
        %4157 = vmatprep.subr.mxu0 0.0
        %4158 = vmatpush1.msra.mxu0 0.0
        %4159 = vmatprep.mubr.f32.mxu0 0.0
        %4160 = vmatmul.mubr.f32.gmra.mrb[0].mxu0 %v4093
        %v4161 = vpop.f32.mrb[0].mxu0
        %v4162 = vadd.f32 0.0, %v4161
        %v4163 = vpop.f32.mrb[0].mxu0
        %4164 = vdwg.mxu0
        %v4165 = vadd.f32 %v4079, %v4162
        %v4166 = vld [vmem:[#allocation3 + $0x2] sm:$0x1]
        %s4167 = scalar_lea.vmem %s9, 160
        %v4168 = vld [vmem:[%s4167] sm:$0xff]
        %v4169 = vld [vmem:[%s4167 + $0x8] sm:$0xff]
        %v4170 = vld [vmem:[%s4167 + $0x10] sm:$0xff]
        %v4171 = vld [vmem:[%s4167 + $0x18] sm:$0xff]
        %v4172 = vld [vmem:[%s4167 + $0x20] sm:$0xff]
        %v4173 = vld [vmem:[%s4167 + $0x28] sm:$0xff]
        %v4174 = vld [vmem:[%s4167 + $0x30] sm:$0xff]
        %v4175 = vld [vmem:[%s4167 + $0x38] sm:$0xff]
        %v4176 = vld [vmem:[%s4167 + $0x40] sm:$0xff]
        %v4177 = vld [vmem:[%s4167 + $0x48] sm:$0xff]
        %v4179 = vsel %vm4005, %v4166, 0
        %4181 = vmatprep.subr.mxu0 0.0
        %4182 = vmatpush1.msra.mxu0 %v4168
        %4183 = vmatprep.subr.mxu0 0.0
        %4184 = vmatpush1.msra.mxu0 %v4169
        %4185 = vmatprep.subr.mxu0 0.0
        %4186 = vmatpush1.msra.mxu0 %v4170
        %4187 = vmatprep.subr.mxu0 0.0
        %4188 = vmatpush1.msra.mxu0 %v4171
        %4189 = vmatprep.subr.mxu0 0.0
        %4190 = vmatpush1.msra.mxu0 %v4172
        %4191 = vmatprep.subr.mxu0 0.0
        %4192 = vmatpush1.msra.mxu0 %v4173
        %4193 = vmatprep.subr.mxu0 0.0
        %4194 = vmatpush1.msra.mxu0 %v4174
        %4195 = vmatprep.subr.mxu0 0.0
        %4196 = vmatpush1.msra.mxu0 %v4175
        %4197 = vmatprep.subr.mxu0 0.0
        %4198 = vmatpush1.msra.mxu0 %v4176
        %4199 = vmatprep.subr.mxu0 0.0
        %4200 = vmatpush1.msra.mxu0 %v4177
        %4201 = vmatprep.subr.mxu0 0.0
        %4202 = vmatpush1.msra.mxu0 0.0
        %4203 = vmatprep.subr.mxu0 0.0
        %4204 = vmatpush1.msra.mxu0 0.0
        %4205 = vmatprep.subr.mxu0 0.0
        %4206 = vmatpush1.msra.mxu0 0.0
        %4207 = vmatprep.subr.mxu0 0.0
        %4208 = vmatpush1.msra.mxu0 0.0
        %4209 = vmatprep.subr.mxu0 0.0
        %4210 = vmatpush1.msra.mxu0 0.0
        %4211 = vmatprep.subr.mxu0 0.0
        %4212 = vmatpush1.msra.mxu0 0.0
        %4213 = vmatprep.subr.mxu0 0.0
        %4214 = vmatpush1.msra.mxu0 0.0
        %4215 = vmatprep.subr.mxu0 0.0
        %4216 = vmatpush1.msra.mxu0 0.0
        %4217 = vmatprep.subr.mxu0 0.0
        %4218 = vmatpush1.msra.mxu0 0.0
        %4219 = vmatprep.subr.mxu0 0.0
        %4220 = vmatpush1.msra.mxu0 0.0
        %4221 = vmatprep.subr.mxu0 0.0
        %4222 = vmatpush1.msra.mxu0 0.0
        %4223 = vmatprep.subr.mxu0 0.0
        %4224 = vmatpush1.msra.mxu0 0.0
        %4225 = vmatprep.subr.mxu0 0.0
        %4226 = vmatpush1.msra.mxu0 0.0
        %4227 = vmatprep.subr.mxu0 0.0
        %4228 = vmatpush1.msra.mxu0 0.0
        %4229 = vmatprep.subr.mxu0 0.0
        %4230 = vmatpush1.msra.mxu0 0.0
        %4231 = vmatprep.subr.mxu0 0.0
        %4232 = vmatpush1.msra.mxu0 0.0
        %4233 = vmatprep.subr.mxu0 0.0
        %4234 = vmatpush1.msra.mxu0 0.0
        %4235 = vmatprep.subr.mxu0 0.0
        %4236 = vmatpush1.msra.mxu0 0.0
        %4237 = vmatprep.subr.mxu0 0.0
        %4238 = vmatpush1.msra.mxu0 0.0
        %4239 = vmatprep.subr.mxu0 0.0
        %4240 = vmatpush1.msra.mxu0 0.0
        %4241 = vmatprep.subr.mxu0 0.0
        %4242 = vmatpush1.msra.mxu0 0.0
        %4243 = vmatprep.subr.mxu0 0.0
        %4244 = vmatpush1.msra.mxu0 0.0
        %4245 = vmatprep.mubr.f32.mxu0 0.0
        %4246 = vmatmul.mubr.f32.gmra.mrb[0].mxu0 %v4179
        %v4247 = vpop.f32.mrb[0].mxu0
        %v4248 = vadd.f32 0.0, %v4247
        %v4249 = vpop.f32.mrb[0].mxu0
        %4250 = vdwg.mxu0
        %v4251 = vadd.f32 %v4165, %v4248
        %v4252 = vld [vmem:[#allocation3 + $0x3] sm:$0x1]
        %s4253 = scalar_lea.vmem %s9, 240
        %v4254 = vld [vmem:[%s4253] sm:$0xff]
        %v4255 = vld [vmem:[%s4253 + $0x8] sm:$0xff]
        %v4256 = vld [vmem:[%s4253 + $0x10] sm:$0xff]
        %v4257 = vld [vmem:[%s4253 + $0x18] sm:$0xff]
        %v4258 = vld [vmem:[%s4253 + $0x20] sm:$0xff]
        %v4259 = vld [vmem:[%s4253 + $0x28] sm:$0xff]
        %v4260 = vld [vmem:[%s4253 + $0x30] sm:$0xff]
        %v4261 = vld [vmem:[%s4253 + $0x38] sm:$0xff]
        %v4262 = vld [vmem:[%s4253 + $0x40] sm:$0xff]
        %v4263 = vld [vmem:[%s4253 + $0x48] sm:$0xff]
        %v4265 = vsel %vm4005, %v4252, 0
        %4267 = vmatprep.subr.mxu0 0.0
        %4268 = vmatpush1.msra.mxu0 %v4254
        %4269 = vmatprep.subr.mxu0 0.0
        %4270 = vmatpush1.msra.mxu0 %v4255
        %4271 = vmatprep.subr.mxu0 0.0
        %4272 = vmatpush1.msra.mxu0 %v4256
        %4273 = vmatprep.subr.mxu0 0.0
        %4274 = vmatpush1.msra.mxu0 %v4257
        %4275 = vmatprep.subr.mxu0 0.0
        %4276 = vmatpush1.msra.mxu0 %v4258
        %4277 = vmatprep.subr.mxu0 0.0
        %4278 = vmatpush1.msra.mxu0 %v4259
        %4279 = vmatprep.subr.mxu0 0.0
        %4280 = vmatpush1.msra.mxu0 %v4260
        %4281 = vmatprep.subr.mxu0 0.0
        %4282 = vmatpush1.msra.mxu0 %v4261
        %4283 = vmatprep.subr.mxu0 0.0
        %4284 = vmatpush1.msra.mxu0 %v4262
        %4285 = vmatprep.subr.mxu0 0.0
        %4286 = vmatpush1.msra.mxu0 %v4263
        %4287 = vmatprep.subr.mxu0 0.0
        %4288 = vmatpush1.msra.mxu0 0.0
        %4289 = vmatprep.subr.mxu0 0.0
        %4290 = vmatpush1.msra.mxu0 0.0
        %4291 = vmatprep.subr.mxu0 0.0
        %4292 = vmatpush1.msra.mxu0 0.0
        %4293 = vmatprep.subr.mxu0 0.0
        %4294 = vmatpush1.msra.mxu0 0.0
        %4295 = vmatprep.subr.mxu0 0.0
        %4296 = vmatpush1.msra.mxu0 0.0
        %4297 = vmatprep.subr.mxu0 0.0
        %4298 = vmatpush1.msra.mxu0 0.0
        %4299 = vmatprep.subr.mxu0 0.0
        %4300 = vmatpush1.msra.mxu0 0.0
        %4301 = vmatprep.subr.mxu0 0.0
        %4302 = vmatpush1.msra.mxu0 0.0
        %4303 = vmatprep.subr.mxu0 0.0
        %4304 = vmatpush1.msra.mxu0 0.0
        %4305 = vmatprep.subr.mxu0 0.0
        %4306 = vmatpush1.msra.mxu0 0.0
        %4307 = vmatprep.subr.mxu0 0.0
        %4308 = vmatpush1.msra.mxu0 0.0
        %4309 = vmatprep.subr.mxu0 0.0
        %4310 = vmatpush1.msra.mxu0 0.0
        %4311 = vmatprep.subr.mxu0 0.0
        %4312 = vmatpush1.msra.mxu0 0.0
        %4313 = vmatprep.subr.mxu0 0.0
        %4314 = vmatpush1.msra.mxu0 0.0
        %4315 = vmatprep.subr.mxu0 0.0
        %4316 = vmatpush1.msra.mxu0 0.0
        %4317 = vmatprep.subr.mxu0 0.0
        %4318 = vmatpush1.msra.mxu0 0.0
        %4319 = vmatprep.subr.mxu0 0.0
        %4320 = vmatpush1.msra.mxu0 0.0
        %4321 = vmatprep.subr.mxu0 0.0
        %4322 = vmatpush1.msra.mxu0 0.0
        %4323 = vmatprep.subr.mxu0 0.0
        %4324 = vmatpush1.msra.mxu0 0.0
        %4325 = vmatprep.subr.mxu0 0.0
        %4326 = vmatpush1.msra.mxu0 0.0
        %4327 = vmatprep.subr.mxu0 0.0
        %4328 = vmatpush1.msra.mxu0 0.0
        %4329 = vmatprep.subr.mxu0 0.0
        %4330 = vmatpush1.msra.mxu0 0.0
        %4331 = vmatprep.mubr.f32.mxu0 0.0
        %4332 = vmatmul.mubr.f32.gmra.mrb[0].mxu0 %v4265
        %v4333 = vpop.f32.mrb[0].mxu0
        %v4334 = vadd.f32 0.0, %v4333
        %v4335 = vpop.f32.mrb[0].mxu0
        %4336 = vdwg.mxu0
        %v4337 = vadd.f32 %v4251, %v4334
        %v4338 = vld [vmem:[#allocation3 + $0x4] sm:$0x1]
        %s4339 = scalar_lea.vmem %s9, 320
        %v4340 = vld [vmem:[%s4339] sm:$0xff]
        %v4341 = vld [vmem:[%s4339 + $0x8] sm:$0xff]
        %v4342 = vld [vmem:[%s4339 + $0x10] sm:$0xff]
        %v4343 = vld [vmem:[%s4339 + $0x18] sm:$0xff]
        %v4344 = vld [vmem:[%s4339 + $0x20] sm:$0xff]
        %v4345 = vld [vmem:[%s4339 + $0x28] sm:$0xff]
        %v4346 = vld [vmem:[%s4339 + $0x30] sm:$0xff]
        %v4347 = vld [vmem:[%s4339 + $0x38] sm:$0xff]
        %v4348 = vld [vmem:[%s4339 + $0x40] sm:$0xff]
        %v4349 = vld [vmem:[%s4339 + $0x48] sm:$0xff]
        %v4351 = vsel %vm4005, %v4338, 0
        %4353 = vmatprep.subr.mxu0 0.0
        %4354 = vmatpush1.msra.mxu0 %v4340
        %4355 = vmatprep.subr.mxu0 0.0
        %4356 = vmatpush1.msra.mxu0 %v4341
        %4357 = vmatprep.subr.mxu0 0.0
        %4358 = vmatpush1.msra.mxu0 %v4342
        %4359 = vmatprep.subr.mxu0 0.0
        %4360 = vmatpush1.msra.mxu0 %v4343
        %4361 = vmatprep.subr.mxu0 0.0
        %4362 = vmatpush1.msra.mxu0 %v4344
        %4363 = vmatprep.subr.mxu0 0.0
        %4364 = vmatpush1.msra.mxu0 %v4345
        %4365 = vmatprep.subr.mxu0 0.0
        %4366 = vmatpush1.msra.mxu0 %v4346
        %4367 = vmatprep.subr.mxu0 0.0
        %4368 = vmatpush1.msra.mxu0 %v4347
        %4369 = vmatprep.subr.mxu0 0.0
        %4370 = vmatpush1.msra.mxu0 %v4348
        %4371 = vmatprep.subr.mxu0 0.0
        %4372 = vmatpush1.msra.mxu0 %v4349
        %4373 = vmatprep.subr.mxu0 0.0
        %4374 = vmatpush1.msra.mxu0 0.0
        %4375 = vmatprep.subr.mxu0 0.0
        %4376 = vmatpush1.msra.mxu0 0.0
        %4377 = vmatprep.subr.mxu0 0.0
        %4378 = vmatpush1.msra.mxu0 0.0
        %4379 = vmatprep.subr.mxu0 0.0
        %4380 = vmatpush1.msra.mxu0 0.0
        %4381 = vmatprep.subr.mxu0 0.0
        %4382 = vmatpush1.msra.mxu0 0.0
        %4383 = vmatprep.subr.mxu0 0.0
        %4384 = vmatpush1.msra.mxu0 0.0
        %4385 = vmatprep.subr.mxu0 0.0
        %4386 = vmatpush1.msra.mxu0 0.0
        %4387 = vmatprep.subr.mxu0 0.0
        %4388 = vmatpush1.msra.mxu0 0.0
        %4389 = vmatprep.subr.mxu0 0.0
        %4390 = vmatpush1.msra.mxu0 0.0
        %4391 = vmatprep.subr.mxu0 0.0
        %4392 = vmatpush1.msra.mxu0 0.0
        %4393 = vmatprep.subr.mxu0 0.0
        %4394 = vmatpush1.msra.mxu0 0.0
        %4395 = vmatprep.subr.mxu0 0.0
        %4396 = vmatpush1.msra.mxu0 0.0
        %4397 = vmatprep.subr.mxu0 0.0
        %4398 = vmatpush1.msra.mxu0 0.0
        %4399 = vmatprep.subr.mxu0 0.0
        %4400 = vmatpush1.msra.mxu0 0.0
        %4401 = vmatprep.subr.mxu0 0.0
        %4402 = vmatpush1.msra.mxu0 0.0
        %4403 = vmatprep.subr.mxu0 0.0
        %4404 = vmatpush1.msra.mxu0 0.0
        %4405 = vmatprep.subr.mxu0 0.0
        %4406 = vmatpush1.msra.mxu0 0.0
        %4407 = vmatprep.subr.mxu0 0.0
        %4408 = vmatpush1.msra.mxu0 0.0
        %4409 = vmatprep.subr.mxu0 0.0
        %4410 = vmatpush1.msra.mxu0 0.0
        %4411 = vmatprep.subr.mxu0 0.0
        %4412 = vmatpush1.msra.mxu0 0.0
        %4413 = vmatprep.subr.mxu0 0.0
        %4414 = vmatpush1.msra.mxu0 0.0
        %4415 = vmatprep.subr.mxu0 0.0
        %4416 = vmatpush1.msra.mxu0 0.0
        %4417 = vmatprep.mubr.f32.mxu0 0.0
        %4418 = vmatmul.mubr.f32.gmra.mrb[0].mxu0 %v4351
        %v4419 = vpop.f32.mrb[0].mxu0
        %v4420 = vadd.f32 0.0, %v4419
        %v4421 = vpop.f32.mrb[0].mxu0
        %4422 = vdwg.mxu0
        %v4423 = vadd.f32 %v4337, %v4420
        %v4424 = vmax.f32 %v4423, 0.0
        %v4425 = vld [vmem:[%s11] sm:$0xff]
        %v4426 = vld [vmem:[%s11 + $0x8] sm:$0xff]
        %v4427 = vld [vmem:[%s11 + $0x10] sm:$0xff]
        %v4428 = vld [vmem:[%s11 + $0x18] sm:$0xff]
        %v4429 = vld [vmem:[%s11 + $0x20] sm:$0xff]
        %v4430 = vld [vmem:[%s11 + $0x28] sm:$0xff]
        %v4431 = vld [vmem:[%s11 + $0x30] sm:$0xff]
        %v4432 = vld [vmem:[%s11 + $0x38] sm:$0xff]
        %v4433 = vld [vmem:[%s11 + $0x40] sm:$0xff]
        %v4434 = vld [vmem:[%s11 + $0x48] sm:$0xff]
        %v4435 = vld [vmem:[%s11 + $0x50] sm:$0xff]
        %v4436 = vld [vmem:[%s11 + $0x58] sm:$0xff]
        %v4437 = vld [vmem:[%s11 + $0x60] sm:$0xff]
        %v4438 = vld [vmem:[%s11 + $0x68] sm:$0xff]
        %v4439 = vld [vmem:[%s11 + $0x70] sm:$0xff]
        %v4440 = vld [vmem:[%s12] sm:$0x1]
        %vm4441 = vcmask 982016
        %v4443 = vsel %vm4441, %v4424, 0
        %4445 = vmatprep.subr.mxu0 0.0
        %4446 = vmatpush1.msra.mxu0 %v4425
        %4447 = vmatprep.subr.mxu0 0.0
        %4448 = vmatpush1.msra.mxu0 %v4426
        %4449 = vmatprep.subr.mxu0 0.0
        %4450 = vmatpush1.msra.mxu0 %v4427
        %4451 = vmatprep.subr.mxu0 0.0
        %4452 = vmatpush1.msra.mxu0 %v4428
        %4453 = vmatprep.subr.mxu0 0.0
        %4454 = vmatpush1.msra.mxu0 %v4429
        %4455 = vmatprep.subr.mxu0 0.0
        %4456 = vmatpush1.msra.mxu0 %v4430
        %4457 = vmatprep.subr.mxu0 0.0
        %4458 = vmatpush1.msra.mxu0 %v4431
        %4459 = vmatprep.subr.mxu0 0.0
        %4460 = vmatpush1.msra.mxu0 %v4432
        %4461 = vmatprep.subr.mxu0 0.0
        %4462 = vmatpush1.msra.mxu0 %v4433
        %4463 = vmatprep.subr.mxu0 0.0
        %4464 = vmatpush1.msra.mxu0 %v4434
        %4465 = vmatprep.subr.mxu0 0.0
        %4466 = vmatpush1.msra.mxu0 %v4435
        %4467 = vmatprep.subr.mxu0 0.0
        %4468 = vmatpush1.msra.mxu0 %v4436
        %4469 = vmatprep.subr.mxu0 0.0
        %4470 = vmatpush1.msra.mxu0 %v4437
        %4471 = vmatprep.subr.mxu0 0.0
        %4472 = vmatpush1.msra.mxu0 %v4438
        %4473 = vmatprep.subr.mxu0 0.0
        %4474 = vmatpush1.msra.mxu0 %v4439
        %4475 = vmatprep.subr.mxu0 0.0
        %4476 = vmatpush1.msra.mxu0 0.0
        %4477 = vmatprep.subr.mxu0 0.0
        %4478 = vmatpush1.msra.mxu0 0.0
        %4479 = vmatprep.subr.mxu0 0.0
        %4480 = vmatpush1.msra.mxu0 0.0
        %4481 = vmatprep.subr.mxu0 0.0
        %4482 = vmatpush1.msra.mxu0 0.0
        %4483 = vmatprep.subr.mxu0 0.0
        %4484 = vmatpush1.msra.mxu0 0.0
        %4485 = vmatprep.subr.mxu0 0.0
        %4486 = vmatpush1.msra.mxu0 0.0
        %4487 = vmatprep.subr.mxu0 0.0
        %4488 = vmatpush1.msra.mxu0 0.0
        %4489 = vmatprep.subr.mxu0 0.0
        %4490 = vmatpush1.msra.mxu0 0.0
        %4491 = vmatprep.subr.mxu0 0.0
        %4492 = vmatpush1.msra.mxu0 0.0
        %4493 = vmatprep.subr.mxu0 0.0
        %4494 = vmatpush1.msra.mxu0 0.0
        %4495 = vmatprep.subr.mxu0 0.0
        %4496 = vmatpush1.msra.mxu0 0.0
        %4497 = vmatprep.subr.mxu0 0.0
        %4498 = vmatpush1.msra.mxu0 0.0
        %4499 = vmatprep.subr.mxu0 0.0
        %4500 = vmatpush1.msra.mxu0 0.0
        %4501 = vmatprep.subr.mxu0 0.0
        %4502 = vmatpush1.msra.mxu0 0.0
        %4503 = vmatprep.subr.mxu0 0.0
        %4504 = vmatpush1.msra.mxu0 0.0
        %4505 = vmatprep.subr.mxu0 0.0
        %4506 = vmatpush1.msra.mxu0 0.0
        %4507 = vmatprep.subr.mxu0 0.0
        %4508 = vmatpush1.msra.mxu0 0.0
        %4509 = vmatprep.mubr.f32.mxu0 0.0
        %4510 = vmatmul.mubr.f32.gmra.mrb[0].mxu0 %v4443
        %v4511 = vpop.f32.mrb[0].mxu0
        %v4512 = vadd.f32 %v4440, %v4511
        %v4513 = vpop.f32.mrb[0].mxu0
        %4514 = vdwg.mxu0
        %v4515 = vmax.f32 %v4512, 0.0
        %v4516 = vld [vmem:[%s13] sm:$0xff]
        %v4517 = vld [vmem:[%s13 + $0x8] sm:$0xff]
        %v4518 = vld [vmem:[%s13 + $0x10] sm:$0xff]
        %v4519 = vld [vmem:[%s13 + $0x18] sm:$0xff]
        %v4520 = vld [vmem:[%s13 + $0x20] sm:$0xff]
        %v4521 = vld [vmem:[%s13 + $0x28] sm:$0xff]
        %v4522 = vld [vmem:[%s13 + $0x30] sm:$0xff]
        %v4523 = vld [vmem:[%s13 + $0x38] sm:$0xff]
        %v4524 = vld [vmem:[%s13 + $0x40] sm:$0xff]
        %v4525 = vld [vmem:[%s13 + $0x48] sm:$0xff]
        %v4526 = vld [vmem:[%s13 + $0x50] sm:$0xf]
        %v4527 = vld [vmem:[%s14] sm:$0x1]
        %v4529 = vsel %vm2897, %v4515, 0
        %v4532 = vsel %vm2365, %v4526, 0
        %4534 = vmatprep.subr.mxu0 0.0
        %4535 = vmatpush1.msra.mxu0 %v4516
        %4536 = vmatprep.subr.mxu0 0.0
        %4537 = vmatpush1.msra.mxu0 %v4517
        %4538 = vmatprep.subr.mxu0 0.0
        %4539 = vmatpush1.msra.mxu0 %v4518
        %4540 = vmatprep.subr.mxu0 0.0
        %4541 = vmatpush1.msra.mxu0 %v4519
        %4542 = vmatprep.subr.mxu0 0.0
        %4543 = vmatpush1.msra.mxu0 %v4520
        %4544 = vmatprep.subr.mxu0 0.0
        %4545 = vmatpush1.msra.mxu0 %v4521
        %4546 = vmatprep.subr.mxu0 0.0
        %4547 = vmatpush1.msra.mxu0 %v4522
        %4548 = vmatprep.subr.mxu0 0.0
        %4549 = vmatpush1.msra.mxu0 %v4523
        %4550 = vmatprep.subr.mxu0 0.0
        %4551 = vmatpush1.msra.mxu0 %v4524
        %4552 = vmatprep.subr.mxu0 0.0
        %4553 = vmatpush1.msra.mxu0 %v4525
        %4554 = vmatprep.subr.mxu0 0.0
        %4555 = vmatpush1.msra.mxu0 %v4532
        %4556 = vmatprep.subr.mxu0 0.0
        %4557 = vmatpush1.msra.mxu0 0.0
        %4558 = vmatprep.subr.mxu0 0.0
        %4559 = vmatpush1.msra.mxu0 0.0
        %4560 = vmatprep.subr.mxu0 0.0
        %4561 = vmatpush1.msra.mxu0 0.0
        %4562 = vmatprep.subr.mxu0 0.0
        %4563 = vmatpush1.msra.mxu0 0.0
        %4564 = vmatprep.subr.mxu0 0.0
        %4565 = vmatpush1.msra.mxu0 0.0
        %4566 = vmatprep.subr.mxu0 0.0
        %4567 = vmatpush1.msra.mxu0 0.0
        %4568 = vmatprep.subr.mxu0 0.0
        %4569 = vmatpush1.msra.mxu0 0.0
        %4570 = vmatprep.subr.mxu0 0.0
        %4571 = vmatpush1.msra.mxu0 0.0
        %4572 = vmatprep.subr.mxu0 0.0
        %4573 = vmatpush1.msra.mxu0 0.0
        %4574 = vmatprep.subr.mxu0 0.0
        %4575 = vmatpush1.msra.mxu0 0.0
        %4576 = vmatprep.subr.mxu0 0.0
        %4577 = vmatpush1.msra.mxu0 0.0
        %4578 = vmatprep.subr.mxu0 0.0
        %4579 = vmatpush1.msra.mxu0 0.0
        %4580 = vmatprep.subr.mxu0 0.0
        %4581 = vmatpush1.msra.mxu0 0.0
        %4582 = vmatprep.subr.mxu0 0.0
        %4583 = vmatpush1.msra.mxu0 0.0
        %4584 = vmatprep.subr.mxu0 0.0
        %4585 = vmatpush1.msra.mxu0 0.0
        %4586 = vmatprep.subr.mxu0 0.0
        %4587 = vmatpush1.msra.mxu0 0.0
        %4588 = vmatprep.subr.mxu0 0.0
        %4589 = vmatpush1.msra.mxu0 0.0
        %4590 = vmatprep.subr.mxu0 0.0
        %4591 = vmatpush1.msra.mxu0 0.0
        %4592 = vmatprep.subr.mxu0 0.0
        %4593 = vmatpush1.msra.mxu0 0.0
        %4594 = vmatprep.subr.mxu0 0.0
        %4595 = vmatpush1.msra.mxu0 0.0
        %4596 = vmatprep.subr.mxu0 0.0
        %4597 = vmatpush1.msra.mxu0 0.0
        %4598 = vmatprep.mubr.f32.mxu0 0.0
        %4599 = vmatmul.mubr.f32.gmra.mrb[0].mxu0 %v4529
        %v4600 = vpop.f32.mrb[0].mxu0
        %v4601 = vadd.f32 %v4527, %v4600
        %v4602 = vpop.f32.mrb[0].mxu0
        %4603 = vdwg.mxu0
        %v4604 = vmax.f32 %v4601, 0.0
        %vm4605 = vcmask 73728
        %4606 = vst.msk [vmem:[%s511] sm:$0x1] %vm4605, %v4604
        %s4607 = sand.u32 %s360, 1
        %s4608 = scalar_lea.sflag [#allocation6], %s4607
        %s4609 = sand.u32 %s360, 1
        %s4610 = scalar_lea.vmem [#allocation7], %s4609
        // Predicated region
        $region85: #{convnet_forward.1} parent=79 // pred_check
          %p4611 = pneg %p370
        $region86: #{convnet_forward.1} parent=79 // pred_check_branch
          %4613 = sbr.rel (%p4611) target = $region88
        $region87: #{convnet_forward.1} parent=79 // pred_region
          %s4615 = ssub.s32 16, 16
          %4616 = vsyncadd %s4608, %s4615
          %s4617 = smul.addr %s32, 16
          %s4618 = scalar_lea.hbm %s15, %s4617
          %s4620 = sshll.u32 %s4610, 4
          %s4621 = int_to_ptr.vmem [resolvable:$true] %s4620
          %4623 = dma.vmem_to_hbm [thread:$0]  %s4621, 16, %s4618, %s4608
        $region88: #{convnet_forward.1} parent=79 // pred_fallthru
          _
      $region80: #{convnet_forward.1} parent=5 // pred_fallthru
        _
      %p4624 = scmp.le.s32.totalorder 2, %s27
      // Predicated region
      $region89: #{convnet_forward.1} parent=5 // pred_check
        %p4625 = pneg %p4624
      $region90: #{convnet_forward.1} parent=5 // pred_check_branch
        %4627 = sbr.rel (%p4625) target = $region92
      $region91: #{convnet_forward.1} parent=5 // pred_region
        %s4628 = ssub.s32 %s27, 2
        // Predicated region
        $region93: #{convnet_forward.1} parent=91 // pred_check
          %p4629 = pneg %p376
        $region94: #{convnet_forward.1} parent=91 // pred_check_branch
          %4631 = sbr.rel (%p4629) target = $region96
        $region95: #{convnet_forward.1} parent=91 // pred_region
          %s4632 = sand.u32 %s361, 1
          %s4633 = scalar_lea.sflag [#allocation6], %s4632
          %s4634 = sand.u32 %s361, 1
          %s4635 = scalar_lea.vmem [#allocation7], %s4634
          %4636 = dma.done %s4633, 16
        $region96: #{convnet_forward.1} parent=91 // pred_fallthru
          _
      $region92: #{convnet_forward.1} parent=5 // pred_fallthru
        _
    $region6: #{convnet_forward.1} parent=1 // loop_footer
      %s31 = sadd.s32 1, %s27
    $region7: #{convnet_forward.1} parent=1 // loop_footer_branch
      %26 = sbr.rel target = $region3
    $region8: #{convnet_forward.1} parent=1 // loop_exit
      _
    %4637 = vsyncpa [#allocation5], 1
    %s4638 = scalar_lea.sflag [#allocation5], 1
    %4639 = vsyncpa %s4638, 1
    %4640 = vsyncpa [#allocation6], 1
    %s4641 = scalar_lea.sflag [#allocation6], 1
    %4642 = vsyncpa %s4641, 1

</llo_original>
